<compile_context>
chip_gen: v7x
topology: tpu7x:2x2x1
jax: 0.10.0
libtpu: 0.0.40
codegen_flags: <defaults>
</compile_context>

<pallas_src>
import functools

import numpy as np
import jax
import jax.numpy as jnp
from jax.experimental import pallas as pl
from jax.experimental.pallas import tpu as pltpu

POSE_DIM = 4
H_DIM = 64
Z_DIM = 64
N_LAYERS = 2      # kernel hardcodes the 2 GRU layers of the reference module
PRED_PAD = 128    # lane-dense padded width of the prediction output

# --------------------------------------------------------------------------
# Canonical (per-gate, torch-like) parameter list — used for init + reference.
# --------------------------------------------------------------------------
PARAM_NAMES = [
    "phi_x_w", "phi_x_b",
    "phi_z_w", "phi_z_b",
    "enc_w", "enc_b",
    "enc_mean_w", "enc_mean_b",
    "enc_std_w", "enc_std_b",
    "prior_w", "prior_b",
    "prior_mean_w", "prior_mean_b",
    "prior_std_w", "prior_std_b",
    "dec_w", "dec_b",
    "dec_mean_w", "dec_mean_b",
    # GRU layer 0 (input = concat(phi_x, phi_z), 2*H)
    "g0_wir", "g0_wiz", "g0_win", "g0_whr", "g0_whz", "g0_whn",
    "g0_bir", "g0_biz", "g0_bin", "g0_bhr", "g0_bhz", "g0_bhn",
    # GRU layer 1 (input = h of layer 0, H)
    "g1_wir", "g1_wiz", "g1_win", "g1_whr", "g1_whz", "g1_whn",
    "g1_bir", "g1_biz", "g1_bin", "g1_bhr", "g1_bhz", "g1_bhn",
]
N_PARAMS = len(PARAM_NAMES)

# Fused parameter order expected by the kernel.
FUSED_NAMES = [
    "phi_x_w", "phi_x_b", "w_px",
    "phi_z_w", "phi_z_b", "w_pz",
    "w_hh", "enc_b", "prior_b", "dec_b",
    "w_ms", "b_ms",
    "dec_mean_w", "dec_mean_b",
    "b_g0", "b_g0_hn",
    "w_i1", "b_g1", "b_g1_hn",
]

# Weights that feed the MXU are stored bf16; everything else stays f32.
_BF16_WEIGHTS = frozenset(
    {"phi_x_w", "w_px", "phi_z_w", "w_pz", "w_hh", "w_ms", "dec_mean_w", "w_i1"})


# --------------------------------------------------------------------------
# Kernel
# --------------------------------------------------------------------------
def _vrnn_kernel(x_head_ref, x_next_ref, eps_ref, mask_ref,
                 phi_x_w, phi_x_b, w_px,
                 phi_z_w, phi_z_b, w_pz,
                 w_hh, enc_b, prior_b, dec_b,
                 w_ms, b_ms,
                 dec_mean_w, dec_mean_b,
                 b_g0, b_g0_hn,
                 w_i1, b_g1, b_g1_hn,
                 kld_ref, mse_ref, pred_ref,
                 *, b_pad, t_steps):
    H = H_DIM
    Z = Z_DIM
    B = b_pad
    f32 = jnp.float32
    bf16 = jnp.bfloat16

    def bdot(act, w_ref):
        # bf16 x bf16 MXU pass with f32 accumulation.
        return jnp.dot(act.astype(bf16), w_ref[...], preferred_element_type=f32)

    # ---- hoisted off the recurrence: phi_x and all of its consumer
    # projections for every timestep, done as two wide bf16 matmuls ----------
    phi_x_bias = jnp.broadcast_to(phi_x_b[...], (t_steps * B, H))
    phi_x_all = jax.nn.relu(bdot(x_head_ref[...], phi_x_w) + phi_x_bias)
    # w_px columns: [ g0_wir_x | g0_wiz_x | g0_win_x | enc_w_x ]   (4H lanes)
    px_all = bdot(phi_x_all, w_px)                 # (T-1*B, 4H)
    eps_all = eps_ref[...]                          # (T-1*B, Z)

    # ---- hoist all bias loads / broadcasts out of the unrolled loop --------
    enc_bb = jnp.broadcast_to(enc_b[...], (B, H))
    prior_bb = jnp.broadcast_to(prior_b[...], (B, H))
    dec_bb = jnp.broadcast_to(dec_b[...], (B, H))
    phi_z_bb = jnp.broadcast_to(phi_z_b[...], (B, H))
    b_ms_b = jnp.broadcast_to(b_ms[...], (B, 4 * Z))
    b_g0_b = jnp.broadcast_to(b_g0[...], (B, 3 * H))
    b_g0_hn_b = jnp.broadcast_to(b_g0_hn[...], (B, H))
    b_g1_b = jnp.broadcast_to(b_g1[...], (B, 3 * H))
    b_g1_hn_b = jnp.broadcast_to(b_g1_hn[...], (B, H))

    h0 = jnp.zeros((B, H), f32)
    h1 = jnp.zeros((B, H), f32)
    kld_acc = jnp.zeros((B, Z), f32)
    dec_steps = []

    # ---- fully unrolled recurrence (t_steps is small & static) --------------
    for t in range(t_steps):
        lo, hi = t * B, (t + 1) * B

        # ONE block-diagonal (B,2H)x(2H,9H) dot covering everything that
        # consumes the previous h1 and h0.  Column layout:
        #   [ enc_h | prior | g1_hr | g1_hz | dec_h | g1_hn | g0_hr | g0_hz | g0_hn ]
        hh = jnp.concatenate([h1, h0], axis=-1)            # (B, 2H)
        hhp = bdot(hh, w_hh)                                 # (B, 9H)
        enc_h = hhp[:, 0:H]
        prior_p = hhp[:, H:2 * H]
        g1_hrz = hhp[:, 2 * H:4 * H]                         # 128-lane aligned
        dec_h = hhp[:, 4 * H:5 * H]
        g1_hn = hhp[:, 5 * H:6 * H]
        gh0 = hhp[:, 6 * H:9 * H]

        pxf = px_all[lo:hi, :]                               # (B, 4H)
        g0_ix = pxf[:, 0:3 * H]                              # phi_x part of GRU-0 gates
        enc_x = pxf[:, 3 * H:4 * H]                          # phi_x part of encoder input

        enc_t = jax.nn.relu(enc_x + enc_h + enc_bb)
        prior_t = jax.nn.relu(prior_p + prior_bb)

        # ONE block-diagonal (B,2H)x(2H,4Z) dot; columns ordered so a single
        # 128-lane softplus covers both stds:
        #   [ enc_mean | prior_mean | enc_std_raw | prior_std_raw ]
        ep = jnp.concatenate([enc_t, prior_t], axis=-1)      # (B, 2H)
        ms = bdot(ep, w_ms) + b_ms_b                          # (B, 4Z)
        enc_mean = ms[:, 0:Z]
        prior_mean = ms[:, Z:2 * Z]
        stds = jax.nn.softplus(ms[:, 2 * Z:4 * Z])            # one full-vreg softplus
        enc_std = stds[:, 0:Z]
        prior_std = stds[:, Z:2 * Z]

        # Reparameterized sample (noise supplied from the host).
        z_t = enc_mean + eps_all[lo:hi, :] * enc_std
        phi_z = jax.nn.relu(bdot(z_t, phi_z_w) + phi_z_bb)

        # w_pz columns: [ g0_wir_z | g0_wiz_z | g0_win_z | dec_w_z ]
        pzf = bdot(phi_z, w_pz)
        g0_iz = pzf[:, 0:3 * H]
        dec_z = pzf[:, 3 * H:4 * H]

        # Decoder features collected as values; head applied after the loop.
        dec_steps.append(jax.nn.relu(dec_z + dec_h + dec_bb))

        # GRU layer 0 (input = [phi_x, phi_z]); r/z sigmoids fused (128 lanes).
        # b_g0 = [bir+bhr | biz+bhz | bin]; bhn kept separate (scaled by r).
        gi0 = g0_ix + g0_iz + b_g0_b
        s0 = jax.nn.sigmoid(gi0[:, 0:2 * H] + gh0[:, 0:2 * H])
        r0 = s0[:, 0:H]
        u0 = s0[:, H:2 * H]
        n0 = jnp.tanh(gi0[:, 2 * H:3 * H] + r0 * (gh0[:, 2 * H:3 * H] + b_g0_hn_b))
        h0 = (1.0 - u0) * n0 + u0 * h0

        # GRU layer 1 (input = new h0); hidden projections already inside hhp.
        gi1 = bdot(h0, w_i1) + b_g1_b
        s1 = jax.nn.sigmoid(gi1[:, 0:2 * H] + g1_hrz)
        r1 = s1[:, 0:H]
        u1 = s1[:, H:2 * H]
        n1 = jnp.tanh(gi1[:, 2 * H:3 * H] + r1 * (g1_hn + b_g1_hn_b))
        h1 = (1.0 - u1) * n1 + u1 * h1

        # KLD accumulated elementwise (off the h-chain); reduced once after loop.
        inv_pvar = pl.reciprocal(prior_std * prior_std, approx=True)
        kld_acc = kld_acc + 0.5 * (
            2.0 * (jnp.log(prior_std) - jnp.log(enc_std))
            + (enc_std * enc_std + (enc_mean - prior_mean) ** 2) * inv_pvar
            - 1.0)

    # ---- epilogue ------------------------------------------------------------
    mask_b = mask_ref[0:B, :]                      # (B, 1) batch-row validity
    kld_ref[...] = jnp.sum(kld_acc * mask_b).reshape(1, 1)

    # Decoder head for all steps: one lane-dense bf16 matmul + one dense store.
    dec_all = jnp.concatenate(dec_steps, axis=0)                     # (T-1*B, H)
    dec_bias = jnp.broadcast_to(dec_mean_b[...], (t_steps * B, PRED_PAD))
    preds = bdot(dec_all, dec_mean_w) + dec_bias                      # (T-1*B, 128)
    pred_ref[...] = preds

    # Padded lanes of x_next and preds are both zero, so only batch-row masking
    # is needed; the mean normalization is done in the wrapper.
    err = (x_next_ref[...] - preds) ** 2
    mse_ref[...] = jnp.sum(err * mask_ref[...]).reshape(1, 1)


# --------------------------------------------------------------------------
# Wrapper
# --------------------------------------------------------------------------
def make_fused_params(plist):
    """Build the fused / block-diagonal / lane-dense parameter layout."""
    pd = dict(zip(PARAM_NAMES, plist))
    H, Z = H_DIM, Z_DIM
    f32 = jnp.float32
    cat = lambda *a: jnp.concatenate([x.astype(f32) for x in a], axis=-1)
    zeros = lambda r, c: jnp.zeros((r, c), f32)

    # Everything consuming h1 (rows 0:H) and h0 (rows H:2H), block-diagonal.
    # Columns: [ enc_h | prior | g1_hr | g1_hz | dec_h | g1_hn | g0_hr | g0_hz | g0_hn ]
    w_h1 = cat(pd["enc_w"][H:], pd["prior_w"], pd["g1_whr"], pd["g1_whz"],
               pd["dec_w"][H:], pd["g1_whn"])                       # (H, 6H)
    w_h0 = cat(pd["g0_whr"], pd["g0_whz"], pd["g0_whn"])            # (H, 3H)
    w_hh = jnp.concatenate(
        [cat(w_h1, zeros(H, 3 * H)), cat(zeros(H, 6 * H), w_h0)], axis=0)

    # enc_t (rows 0:H) / prior_t (rows H:2H) block-diagonal head.
    # Columns: [ enc_mean | prior_mean | enc_std | prior_std ]
    w_ms = jnp.concatenate(
        [cat(pd["enc_mean_w"], zeros(H, Z), pd["enc_std_w"], zeros(H, Z)),
         cat(zeros(H, Z), pd["prior_mean_w"], zeros(H, Z), pd["prior_std_w"])],
        axis=0)
    b_ms = cat(pd["enc_mean_b"], pd["prior_mean_b"], pd["enc_std_b"], pd["prior_std_b"])

    fused = {
        "phi_x_w": pd["phi_x_w"], "phi_x_b": pd["phi_x_b"],
        # consumers of phi_x: GRU-0 input gates (first half) + encoder (first half)
        "w_px": cat(pd["g0_wir"][:H], pd["g0_wiz"][:H], pd["g0_win"][:H],
                    pd["enc_w"][:H]),
        "phi_z_w": pd["phi_z_w"], "phi_z_b": pd["phi_z_b"],
        # consumers of phi_z: GRU-0 input gates (second half) + decoder (first half)
        "w_pz": cat(pd["g0_wir"][H:], pd["g0_wiz"][H:], pd["g0_win"][H:],
                    pd["dec_w"][:H]),
        "w_hh": w_hh,
        "enc_b": pd["enc_b"], "prior_b": pd["prior_b"], "dec_b": pd["dec_b"],
        "w_ms": w_ms, "b_ms": b_ms,
        # decoder head padded to 128 lanes so the prediction store is unmasked
        "dec_mean_w": jnp.pad(pd["dec_mean_w"], ((0, 0), (0, PRED_PAD - POSE_DIM))),
        "dec_mean_b": jnp.pad(pd["dec_mean_b"], ((0, 0), (0, PRED_PAD - POSE_DIM))),
        # GRU-0 folded biases (bhn kept separate — it is scaled by r)
        "b_g0": cat(pd["g0_bir"] + pd["g0_bhr"],
                    pd["g0_biz"] + pd["g0_bhz"],
                    pd["g0_bin"]),
        "b_g0_hn": pd["g0_bhn"],
        # GRU-1 fused input weights / folded biases
        "w_i1": cat(pd["g1_wir"], pd["g1_wiz"], pd["g1_win"]),
        "b_g1": cat(pd["g1_bir"] + pd["g1_bhr"],
                    pd["g1_biz"] + pd["g1_bhz"],
                    pd["g1_bin"]),
        "b_g1_hn": pd["g1_bhn"],
    }
    out = []
    for n in FUSED_NAMES:
        v = fused[n].astype(jnp.float32)
        out.append(v.astype(jnp.bfloat16) if n in _BF16_WEIGHTS else v)
    return out


def pose_vrnn_forward(x, eps, plist):
    """x: (B, T, pose_dim) batch-major (PyTorch layout); eps: (T-1, B, z_dim)."""
    B, T, P = x.shape
    Tm1 = T - 1
    B_pad = max(8, ((B + 7) // 8) * 8)          # sublane multiple

    x32 = jnp.transpose(x.astype(jnp.float32), (1, 0, 2))       # (T, B, P)
    x32 = jnp.pad(x32, ((0, 0), (0, B_pad - B), (0, 0)))        # (T, B_pad, P)
    x_head = x32[:Tm1].reshape(Tm1 * B_pad, P)                  # inputs for t
    x_next = jnp.pad(x32[1:], ((0, 0), (0, 0), (0, PRED_PAD - P)))
    x_next = x_next.reshape(Tm1 * B_pad, PRED_PAD)              # targets, 128 lanes

    eps_p = jnp.pad(eps.astype(jnp.float32), ((0, 0), (0, B_pad - B), (0, 0)))
    eps_p = eps_p.reshape(Tm1 * B_pad, Z_DIM)

    mask_b = (jnp.arange(B_pad) < B).astype(jnp.float32)[:, None]   # (B_pad, 1)
    mask_rows = jnp.tile(mask_b, (Tm1, 1))                          # (T-1·B_pad, 1)

    fused = make_fused_params(plist)
    n_in = 4 + len(fused)

    out_shapes = (
        jax.ShapeDtypeStruct((1, 1), jnp.float32),                      # kld
        jax.ShapeDtypeStruct((1, 1), jnp.float32),                      # mse (unnormalized sum)
        jax.ShapeDtypeStruct((Tm1 * B_pad, PRED_PAD), jnp.float32),     # padded predictions
    )
    kernel = functools.partial(_vrnn_kernel, b_pad=B_pad, t_steps=Tm1)

    kld, mse_sum, preds_pad = pl.pallas_call(
        kernel,
        out_shape=out_shapes,
        in_specs=[pl.BlockSpec(memory_space=pltpu.MemorySpace.VMEM)] * n_in,
        out_specs=(pl.BlockSpec(memory_space=pltpu.MemorySpace.VMEM),) * 3,
    )(x_head, x_next, eps_p, mask_rows, *fused)

    mse = mse_sum[0, 0] / (B * P)
    preds = preds_pad.reshape(Tm1, B_pad, PRED_PAD)[:, :B, :P]
    return kld[0, 0], mse, jnp.transpose(preds, (1, 0, 2))


# --------------------------------------------------------------------------
# Init + pure-JAX reference (same math as the PyTorch module, given eps)
# --------------------------------------------------------------------------
def init_params(key):
    pd = {}
    kiter = iter(jax.random.split(key, N_PARAMS))

    def u(shape, bound):
        return jax.random.uniform(next(kiter), shape, jnp.float32, -bound, bound)

    def add_linear(name, in_f, out_f):
        bound = 1.0 / np.sqrt(in_f)
        pd[name + "_w"] = u((in_f, out_f), bound)
        pd[name + "_b"] = u((1, out_f), bound)

    add_linear("phi_x", POSE_DIM, H_DIM)
    add_linear("phi_z", Z_DIM, H_DIM)
    add_linear("enc", 2 * H_DIM, H_DIM)
    add_linear("enc_mean", H_DIM, Z_DIM)
    add_linear("enc_std", H_DIM, Z_DIM)
    add_linear("prior", H_DIM, H_DIM)
    add_linear("prior_mean", H_DIM, Z_DIM)
    add_linear("prior_std", H_DIM, Z_DIM)
    add_linear("dec", 2 * H_DIM, H_DIM)
    add_linear("dec_mean", H_DIM, POSE_DIM)

    def add_gru(prefix, in_f):
        bound = 1.0 / np.sqrt(H_DIM)
        for g in ("r", "z", "n"):
            pd[f"{prefix}_wi{g}"] = u((in_f, H_DIM), bound)
            pd[f"{prefix}_wh{g}"] = u((H_DIM, H_DIM), bound)
            pd[f"{prefix}_bi{g}"] = u((1, H_DIM), bound)
            pd[f"{prefix}_bh{g}"] = u((1, H_DIM), bound)

    add_gru("g0", 2 * H_DIM)
    add_gru("g1", H_DIM)
    return [pd[n] for n in PARAM_NAMES]


def reference_forward(x, eps, plist, bf16_matmul=False):
    """Pure-JAX reference identical in structure to the PyTorch module.

    With bf16_matmul=True the matmul operands are cast to bf16 (f32 accumulate),
    matching the kernel's MXU numerics so the comparison isolates real bugs.
    """
    pd = dict(zip(PARAM_NAMES, plist))
    B, T, P = x.shape
    relu, sp, sig = jax.nn.relu, jax.nn.softplus, jax.nn.sigmoid

    def mm(a, w):
        if bf16_matmul:
            return jnp.dot(a.astype(jnp.bfloat16), w.astype(jnp.bfloat16),
                           preferred_element_type=jnp.float32)
        return a @ w

    def lin(v, w, b):
        return mm(v, pd[w]) + pd[b]

    def gru(inp, h, pre):
        r = sig(mm(inp, pd[pre + "_wir"]) + pd[pre + "_bir"]
                + mm(h, pd[pre + "_whr"]) + pd[pre + "_bhr"])
        zg = sig(mm(inp, pd[pre + "_wiz"]) + pd[pre + "_biz"]
                 + mm(h, pd[pre + "_whz"]) + pd[pre + "_bhz"])
        n = jnp.tanh(mm(inp, pd[pre + "_win"]) + pd[pre + "_bin"]
                     + r * (mm(h, pd[pre + "_whn"]) + pd[pre + "_bhn"]))
        return (1.0 - zg) * n + zg * h

    h0 = jnp.zeros((B, H_DIM), jnp.float32)
    h1 = jnp.zeros((B, H_DIM), jnp.float32)
    kld = jnp.float32(0.0)
    mse = jnp.float32(0.0)
    preds = []
    for t in range(T - 1):
        x_t, x_next, eps_t = x[:, t, :], x[:, t + 1, :], eps[t]
        phi_x = relu(lin(x_t, "phi_x_w", "phi_x_b"))
        enc = relu(mm(jnp.concatenate([phi_x, h1], -1), pd["enc_w"]) + pd["enc_b"])
        enc_mean = lin(enc, "enc_mean_w", "enc_mean_b")
        enc_std = sp(lin(enc, "enc_std_w", "enc_std_b"))
        prior = relu(lin(h1, "prior_w", "prior_b"))
        prior_mean = lin(prior, "prior_mean_w", "prior_mean_b")
        prior_std = sp(lin(prior, "prior_std_w", "prior_std_b"))
        z_t = enc_mean + eps_t * enc_std
        phi_z = relu(lin(z_t, "phi_z_w", "phi_z_b"))
        dec = relu(mm(jnp.concatenate([phi_z, h1], -1), pd["dec_w"]) + pd["dec_b"])
        x_pred = lin(dec, "dec_mean_w", "dec_mean_b")
        rnn_in = jnp.concatenate([phi_x, phi_z], -1)
        h0 = gru(rnn_in, h0, "g0")
        h1 = gru(h0, h1, "g1")
        kld = kld + jnp.sum(0.5 * (2.0 * jnp.log(prior_std / enc_std)
                                   + (enc_std ** 2 + (enc_mean - prior_mean) ** 2) / prior_std ** 2
                                   - 1.0))
        mse = mse + jnp.mean((x_next - x_pred) ** 2)
        preds.append(x_pred[:, None, :])
    return kld, mse, jnp.concatenate(preds, axis=1)


if __name__ == "__main__":
    B, T = 2, 8
    key = jax.random.PRNGKey(0)
    kp, kx, ke = jax.random.split(key, 3)
    plist = init_params(kp)
    x = jax.random.normal(kx, (B, T, POSE_DIM), jnp.float32)
    # TODO(synk): reparameterization noise (torch.randn_like) is sampled here and
    # passed into the kernel instead of using pltpu.prng_random_bits in-kernel.
    eps = jax.random.normal(ke, (T - 1, B, Z_DIM), jnp.float32)

    kld, mse, preds = jax.block_until_ready(pose_vrnn_forward(x, eps, plist))

    # Reference run with the same bf16 MXU-operand numerics as the kernel
    # (tolerance covers f32 accumulation-order differences + the approx recip
    # used in the KLD term).
    kld_r, mse_r, preds_r = reference_forward(x, eps, plist, bf16_matmul=True)
    np.testing.assert_allclose(np.asarray(kld), np.asarray(kld_r), rtol=2e-2, atol=2e-2)
    np.testing.assert_allclose(np.asarray(mse), np.asarray(mse_r), rtol=2e-2, atol=2e-2)
    np.testing.assert_allclose(np.asarray(preds), np.asarray(preds_r), rtol=2e-2, atol=2e-2)
    assert preds.shape == (B, T - 1, POSE_DIM)
    print("KERNEL_OK")
</pallas_src>

<mosaic_0001>
module attributes {stable_mosaic.version = 11 : i64} {
  func.func @_vrnn_kernel(%arg0: memref<56x4xf32, #tpu.memory_space<vmem>>, %arg1: memref<56x128xf32, #tpu.memory_space<vmem>>, %arg2: memref<56x64xf32, #tpu.memory_space<vmem>>, %arg3: memref<56x1xf32, #tpu.memory_space<vmem>>, %arg4: memref<4x64xbf16, #tpu.memory_space<vmem>>, %arg5: memref<1x64xf32, #tpu.memory_space<vmem>>, %arg6: memref<64x256xbf16, #tpu.memory_space<vmem>>, %arg7: memref<64x64xbf16, #tpu.memory_space<vmem>>, %arg8: memref<1x64xf32, #tpu.memory_space<vmem>>, %arg9: memref<64x256xbf16, #tpu.memory_space<vmem>>, %arg10: memref<128x576xbf16, #tpu.memory_space<vmem>>, %arg11: memref<1x64xf32, #tpu.memory_space<vmem>>, %arg12: memref<1x64xf32, #tpu.memory_space<vmem>>, %arg13: memref<1x64xf32, #tpu.memory_space<vmem>>, %arg14: memref<128x256xbf16, #tpu.memory_space<vmem>>, %arg15: memref<1x256xf32, #tpu.memory_space<vmem>>, %arg16: memref<64x128xbf16, #tpu.memory_space<vmem>>, %arg17: memref<1x128xf32, #tpu.memory_space<vmem>>, %arg18: memref<1x192xf32, #tpu.memory_space<vmem>>, %arg19: memref<1x64xf32, #tpu.memory_space<vmem>>, %arg20: memref<64x192xbf16, #tpu.memory_space<vmem>>, %arg21: memref<1x192xf32, #tpu.memory_space<vmem>>, %arg22: memref<1x64xf32, #tpu.memory_space<vmem>>, %arg23: memref<1x1xf32, #tpu.memory_space<vmem>>, %arg24: memref<1x1xf32, #tpu.memory_space<vmem>>, %arg25: memref<56x128xf32, #tpu.memory_space<vmem>>) attributes {dimension_semantics = [], scalar_prefetch = 0 : i64, scratch_operands = 0 : i64, tpu.core_type = #tpu.core_type<tc>} {
    %c0 = arith.constant 0 : index
    %c0_0 = arith.constant 0 : index
    %0 = vector.load %arg5[%c0, %c0_0] : memref<1x64xf32, #tpu.memory_space<vmem>>, vector<1x64xf32>
    %1 = vector.shape_cast %0 : vector<1x64xf32> to vector<1x64xf32>
    %2 = vector.broadcast %1 : vector<1x64xf32> to vector<56x64xf32>
    %c0_1 = arith.constant 0 : index
    %c0_2 = arith.constant 0 : index
    %3 = vector.load %arg0[%c0_1, %c0_2] : memref<56x4xf32, #tpu.memory_space<vmem>>, vector<56x4xf32>
    %4 = arith.truncf %3 : vector<56x4xf32> to vector<56x4xbf16>
    %c0_3 = arith.constant 0 : index
    %c0_4 = arith.constant 0 : index
    %5 = vector.load %arg4[%c0_3, %c0_4] : memref<4x64xbf16, #tpu.memory_space<vmem>>, vector<4x64xbf16>
    %cst = arith.constant dense<0.000000e+00> : vector<56x64xf32>
    %6 = tpu.matmul %4, %5, %cst {dimension_numbers = #tpu.dot_dimension_numbers<[1], [0], [0], [1], [0, 0, 1, 1], [], []>} : vector<56x4xbf16>, vector<4x64xbf16>, vector<56x64xf32> -> vector<56x64xf32>
    %7 = arith.addf %6, %2 : vector<56x64xf32>
    %cst_5 = arith.constant 0.000000e+00 : f32
    %8 = vector.broadcast %cst_5 : f32 to vector<56x64xf32>
    %9 = arith.maximumf %7, %8 : vector<56x64xf32>
    %10 = arith.truncf %9 : vector<56x64xf32> to vector<56x64xbf16>
    %c0_6 = arith.constant 0 : index
    %c0_7 = arith.constant 0 : index
    %11 = vector.load %arg6[%c0_6, %c0_7] : memref<64x256xbf16, #tpu.memory_space<vmem>>, vector<64x256xbf16>
    %cst_8 = arith.constant dense<0.000000e+00> : vector<56x256xf32>
    %12 = tpu.matmul %10, %11, %cst_8 {dimension_numbers = #tpu.dot_dimension_numbers<[1], [0], [0], [1], [0, 0, 1, 1], [], []>} : vector<56x64xbf16>, vector<64x256xbf16>, vector<56x256xf32> -> vector<56x256xf32>
    %c0_9 = arith.constant 0 : index
    %c0_10 = arith.constant 0 : index
    %13 = vector.load %arg2[%c0_9, %c0_10] : memref<56x64xf32, #tpu.memory_space<vmem>>, vector<56x64xf32>
    %c0_11 = arith.constant 0 : index
    %c0_12 = arith.constant 0 : index
    %14 = vector.load %arg11[%c0_11, %c0_12] : memref<1x64xf32, #tpu.memory_space<vmem>>, vector<1x64xf32>
    %15 = vector.shape_cast %14 : vector<1x64xf32> to vector<1x64xf32>
    %16 = vector.broadcast %15 : vector<1x64xf32> to vector<8x64xf32>
    %c0_13 = arith.constant 0 : index
    %c0_14 = arith.constant 0 : index
    %17 = vector.load %arg12[%c0_13, %c0_14] : memref<1x64xf32, #tpu.memory_space<vmem>>, vector<1x64xf32>
    %18 = vector.shape_cast %17 : vector<1x64xf32> to vector<1x64xf32>
    %19 = vector.broadcast %18 : vector<1x64xf32> to vector<8x64xf32>
    %c0_15 = arith.constant 0 : index
    %c0_16 = arith.constant 0 : index
    %20 = vector.load %arg13[%c0_15, %c0_16] : memref<1x64xf32, #tpu.memory_space<vmem>>, vector<1x64xf32>
    %21 = vector.shape_cast %20 : vector<1x64xf32> to vector<1x64xf32>
    %22 = vector.broadcast %21 : vector<1x64xf32> to vector<8x64xf32>
    %c0_17 = arith.constant 0 : index
    %c0_18 = arith.constant 0 : index
    %23 = vector.load %arg8[%c0_17, %c0_18] : memref<1x64xf32, #tpu.memory_space<vmem>>, vector<1x64xf32>
    %24 = vector.shape_cast %23 : vector<1x64xf32> to vector<1x64xf32>
    %25 = vector.broadcast %24 : vector<1x64xf32> to vector<8x64xf32>
    %c0_19 = arith.constant 0 : index
    %c0_20 = arith.constant 0 : index
    %26 = vector.load %arg15[%c0_19, %c0_20] : memref<1x256xf32, #tpu.memory_space<vmem>>, vector<1x256xf32>
    %27 = vector.shape_cast %26 : vector<1x256xf32> to vector<1x256xf32>
    %28 = vector.broadcast %27 : vector<1x256xf32> to vector<8x256xf32>
    %c0_21 = arith.constant 0 : index
    %c0_22 = arith.constant 0 : index
    %29 = vector.load %arg18[%c0_21, %c0_22] : memref<1x192xf32, #tpu.memory_space<vmem>>, vector<1x192xf32>
    %30 = vector.shape_cast %29 : vector<1x192xf32> to vector<1x192xf32>
    %31 = vector.broadcast %30 : vector<1x192xf32> to vector<8x192xf32>
    %c0_23 = arith.constant 0 : index
    %c0_24 = arith.constant 0 : index
    %32 = vector.load %arg19[%c0_23, %c0_24] : memref<1x64xf32, #tpu.memory_space<vmem>>, vector<1x64xf32>
    %33 = vector.shape_cast %32 : vector<1x64xf32> to vector<1x64xf32>
    %34 = vector.broadcast %33 : vector<1x64xf32> to vector<8x64xf32>
    %c0_25 = arith.constant 0 : index
    %c0_26 = arith.constant 0 : index
    %35 = vector.load %arg21[%c0_25, %c0_26] : memref<1x192xf32, #tpu.memory_space<vmem>>, vector<1x192xf32>
    %36 = vector.shape_cast %35 : vector<1x192xf32> to vector<1x192xf32>
    %37 = vector.broadcast %36 : vector<1x192xf32> to vector<8x192xf32>
    %c0_27 = arith.constant 0 : index
    %c0_28 = arith.constant 0 : index
    %38 = vector.load %arg22[%c0_27, %c0_28] : memref<1x64xf32, #tpu.memory_space<vmem>>, vector<1x64xf32>
    %39 = vector.shape_cast %38 : vector<1x64xf32> to vector<1x64xf32>
    %40 = vector.broadcast %39 : vector<1x64xf32> to vector<8x64xf32>
    %cst_29 = arith.constant 0.000000e+00 : f32
    %41 = vector.broadcast %cst_29 : f32 to vector<8x64xf32>
    %cst_30 = arith.constant 0.000000e+00 : f32
    %42 = vector.broadcast %cst_30 : f32 to vector<8x64xf32>
    %cst_31 = arith.constant 0.000000e+00 : f32
    %43 = vector.broadcast %cst_31 : f32 to vector<8x64xf32>
    %44 = tpu.concatenate %42, %41 in 1 : vector<8x64xf32>, vector<8x64xf32> -> vector<8x128xf32>
    %45 = arith.truncf %44 : vector<8x128xf32> to vector<8x128xbf16>
    %c0_32 = arith.constant 0 : index
    %c0_33 = arith.constant 0 : index
    %46 = vector.load %arg10[%c0_32, %c0_33] : memref<128x576xbf16, #tpu.memory_space<vmem>>, vector<128x576xbf16>
    %cst_34 = arith.constant dense<0.000000e+00> : vector<8x576xf32>
    %47 = tpu.matmul %45, %46, %cst_34 {dimension_numbers = #tpu.dot_dimension_numbers<[1], [0], [0], [1], [0, 0, 1, 1], [], []>} : vector<8x128xbf16>, vector<128x576xbf16>, vector<8x576xf32> -> vector<8x576xf32>
    %48 = vector.extract_strided_slice %47 {offsets = [0, 0], sizes = [8, 64], strides = [1, 1]} : vector<8x576xf32> to vector<8x64xf32>
    %49 = vector.extract_strided_slice %47 {offsets = [0, 64], sizes = [8, 64], strides = [1, 1]} : vector<8x576xf32> to vector<8x64xf32>
    %50 = vector.extract_strided_slice %47 {offsets = [0, 128], sizes = [8, 128], strides = [1, 1]} : vector<8x576xf32> to vector<8x128xf32>
    %51 = vector.extract_strided_slice %47 {offsets = [0, 256], sizes = [8, 64], strides = [1, 1]} : vector<8x576xf32> to vector<8x64xf32>
    %52 = vector.extract_strided_slice %47 {offsets = [0, 320], sizes = [8, 64], strides = [1, 1]} : vector<8x576xf32> to vector<8x64xf32>
    %53 = vector.extract_strided_slice %47 {offsets = [0, 384], sizes = [8, 192], strides = [1, 1]} : vector<8x576xf32> to vector<8x192xf32>
    %54 = vector.extract_strided_slice %12 {offsets = [0, 0], sizes = [8, 256], strides = [1, 1]} : vector<56x256xf32> to vector<8x256xf32>
    %55 = vector.extract_strided_slice %54 {offsets = [0, 0], sizes = [8, 192], strides = [1, 1]} : vector<8x256xf32> to vector<8x192xf32>
    %56 = vector.extract_strided_slice %54 {offsets = [0, 192], sizes = [8, 64], strides = [1, 1]} : vector<8x256xf32> to vector<8x64xf32>
    %57 = arith.addf %56, %48 : vector<8x64xf32>
    %58 = arith.addf %57, %16 : vector<8x64xf32>
    %cst_35 = arith.constant 0.000000e+00 : f32
    %59 = vector.broadcast %cst_35 : f32 to vector<8x64xf32>
    %60 = arith.maximumf %58, %59 : vector<8x64xf32>
    %61 = arith.addf %49, %19 : vector<8x64xf32>
    %cst_36 = arith.constant 0.000000e+00 : f32
    %62 = vector.broadcast %cst_36 : f32 to vector<8x64xf32>
    %63 = arith.maximumf %61, %62 : vector<8x64xf32>
    %64 = tpu.concatenate %60, %63 in 1 : vector<8x64xf32>, vector<8x64xf32> -> vector<8x128xf32>
    %65 = arith.truncf %64 : vector<8x128xf32> to vector<8x128xbf16>
    %c0_37 = arith.constant 0 : index
    %c0_38 = arith.constant 0 : index
    %66 = vector.load %arg14[%c0_37, %c0_38] : memref<128x256xbf16, #tpu.memory_space<vmem>>, vector<128x256xbf16>
    %cst_39 = arith.constant dense<0.000000e+00> : vector<8x256xf32>
    %67 = tpu.matmul %65, %66, %cst_39 {dimension_numbers = #tpu.dot_dimension_numbers<[1], [0], [0], [1], [0, 0, 1, 1], [], []>} : vector<8x128xbf16>, vector<128x256xbf16>, vector<8x256xf32> -> vector<8x256xf32>
    %68 = arith.addf %67, %28 : vector<8x256xf32>
    %69 = vector.extract_strided_slice %68 {offsets = [0, 0], sizes = [8, 64], strides = [1, 1]} : vector<8x256xf32> to vector<8x64xf32>
    %70 = vector.extract_strided_slice %68 {offsets = [0, 64], sizes = [8, 64], strides = [1, 1]} : vector<8x256xf32> to vector<8x64xf32>
    %71 = vector.extract_strided_slice %68 {offsets = [0, 128], sizes = [8, 128], strides = [1, 1]} : vector<8x256xf32> to vector<8x128xf32>
    %cst_40 = arith.constant 0.000000e+00 : f32
    %72 = vector.broadcast %cst_40 : f32 to vector<8x128xf32>
    %73 = arith.maximumf %71, %72 : vector<8x128xf32>
    %74 = vector.broadcast %cst_40 : f32 to vector<8x128xf32>
    %75 = arith.subf %71, %74 : vector<8x128xf32>
    %76 = arith.cmpf one, %75, %75 : vector<8x128xf32>
    %77 = vector.broadcast %cst_40 : f32 to vector<8x128xf32>
    %78 = arith.addf %71, %77 : vector<8x128xf32>
    %79 = math.absf %75 : vector<8x128xf32>
    %cst_41 = arith.constant 0.000000e+00 : f32
    %80 = vector.broadcast %cst_41 : f32 to vector<8x128xf32>
    %81 = arith.subf %80, %79 : vector<8x128xf32>
    %82 = math.exp %81 : vector<8x128xf32>
    %83 = math.log1p %82 : vector<8x128xf32>
    %84 = arith.addf %73, %83 : vector<8x128xf32>
    %85 = arith.select %76, %78, %84 : vector<8x128xi1>, vector<8x128xf32>
    %86 = vector.extract_strided_slice %85 {offsets = [0, 0], sizes = [8, 64], strides = [1, 1]} : vector<8x128xf32> to vector<8x64xf32>
    %87 = vector.extract_strided_slice %85 {offsets = [0, 64], sizes = [8, 64], strides = [1, 1]} : vector<8x128xf32> to vector<8x64xf32>
    %88 = vector.extract_strided_slice %13 {offsets = [0, 0], sizes = [8, 64], strides = [1, 1]} : vector<56x64xf32> to vector<8x64xf32>
    %89 = arith.mulf %88, %86 : vector<8x64xf32>
    %90 = arith.addf %69, %89 : vector<8x64xf32>
    %91 = arith.truncf %90 : vector<8x64xf32> to vector<8x64xbf16>
    %c0_42 = arith.constant 0 : index
    %c0_43 = arith.constant 0 : index
    %92 = vector.load %arg7[%c0_42, %c0_43] : memref<64x64xbf16, #tpu.memory_space<vmem>>, vector<64x64xbf16>
    %cst_44 = arith.constant dense<0.000000e+00> : vector<8x64xf32>
    %93 = tpu.matmul %91, %92, %cst_44 {dimension_numbers = #tpu.dot_dimension_numbers<[1], [0], [0], [1], [0, 0, 1, 1], [], []>} : vector<8x64xbf16>, vector<64x64xbf16>, vector<8x64xf32> -> vector<8x64xf32>
    %94 = arith.addf %93, %25 : vector<8x64xf32>
    %cst_45 = arith.constant 0.000000e+00 : f32
    %95 = vector.broadcast %cst_45 : f32 to vector<8x64xf32>
    %96 = arith.maximumf %94, %95 : vector<8x64xf32>
    %97 = arith.truncf %96 : vector<8x64xf32> to vector<8x64xbf16>
    %c0_46 = arith.constant 0 : index
    %c0_47 = arith.constant 0 : index
    %98 = vector.load %arg9[%c0_46, %c0_47] : memref<64x256xbf16, #tpu.memory_space<vmem>>, vector<64x256xbf16>
    %cst_48 = arith.constant dense<0.000000e+00> : vector<8x256xf32>
    %99 = tpu.matmul %97, %98, %cst_48 {dimension_numbers = #tpu.dot_dimension_numbers<[1], [0], [0], [1], [0, 0, 1, 1], [], []>} : vector<8x64xbf16>, vector<64x256xbf16>, vector<8x256xf32> -> vector<8x256xf32>
    %100 = vector.extract_strided_slice %99 {offsets = [0, 0], sizes = [8, 192], strides = [1, 1]} : vector<8x256xf32> to vector<8x192xf32>
    %101 = vector.extract_strided_slice %99 {offsets = [0, 192], sizes = [8, 64], strides = [1, 1]} : vector<8x256xf32> to vector<8x64xf32>
    %102 = arith.addf %101, %51 : vector<8x64xf32>
    %103 = arith.addf %102, %22 : vector<8x64xf32>
    %cst_49 = arith.constant 0.000000e+00 : f32
    %104 = vector.broadcast %cst_49 : f32 to vector<8x64xf32>
    %105 = arith.maximumf %103, %104 : vector<8x64xf32>
    %106 = arith.addf %55, %100 : vector<8x192xf32>
    %107 = arith.addf %106, %31 : vector<8x192xf32>
    %108 = vector.extract_strided_slice %107 {offsets = [0, 0], sizes = [8, 128], strides = [1, 1]} : vector<8x192xf32> to vector<8x128xf32>
    %109 = vector.extract_strided_slice %53 {offsets = [0, 0], sizes = [8, 128], strides = [1, 1]} : vector<8x192xf32> to vector<8x128xf32>
    %110 = arith.addf %108, %109 : vector<8x128xf32>
    %111 = arith.negf %110 : vector<8x128xf32>
    %112 = math.exp %111 : vector<8x128xf32>
    %cst_50 = arith.constant 1.000000e+00 : f32
    %113 = vector.broadcast %cst_50 : f32 to vector<8x128xf32>
    %114 = arith.addf %113, %112 : vector<8x128xf32>
    %115 = arith.divf %113, %114 : vector<8x128xf32>
    %116 = vector.extract_strided_slice %115 {offsets = [0, 0], sizes = [8, 64], strides = [1, 1]} : vector<8x128xf32> to vector<8x64xf32>
    %117 = vector.extract_strided_slice %115 {offsets = [0, 64], sizes = [8, 64], strides = [1, 1]} : vector<8x128xf32> to vector<8x64xf32>
    %118 = vector.extract_strided_slice %107 {offsets = [0, 128], sizes = [8, 64], strides = [1, 1]} : vector<8x192xf32> to vector<8x64xf32>
    %119 = vector.extract_strided_slice %53 {offsets = [0, 128], sizes = [8, 64], strides = [1, 1]} : vector<8x192xf32> to vector<8x64xf32>
    %120 = arith.addf %119, %34 : vector<8x64xf32>
    %121 = arith.mulf %116, %120 : vector<8x64xf32>
    %122 = arith.addf %118, %121 : vector<8x64xf32>
    %123 = math.tanh %122 : vector<8x64xf32>
    %cst_51 = arith.constant 1.000000e+00 : f32
    %124 = vector.broadcast %cst_51 : f32 to vector<8x64xf32>
    %125 = arith.subf %124, %117 : vector<8x64xf32>
    %126 = arith.mulf %125, %123 : vector<8x64xf32>
    %127 = arith.mulf %117, %41 : vector<8x64xf32>
    %128 = arith.addf %126, %127 : vector<8x64xf32>
    %129 = arith.truncf %128 : vector<8x64xf32> to vector<8x64xbf16>
    %c0_52 = arith.constant 0 : index
    %c0_53 = arith.constant 0 : index
    %130 = vector.load %arg20[%c0_52, %c0_53] : memref<64x192xbf16, #tpu.memory_space<vmem>>, vector<64x192xbf16>
    %cst_54 = arith.constant dense<0.000000e+00> : vector<8x192xf32>
    %131 = tpu.matmul %129, %130, %cst_54 {dimension_numbers = #tpu.dot_dimension_numbers<[1], [0], [0], [1], [0, 0, 1, 1], [], []>} : vector<8x64xbf16>, vector<64x192xbf16>, vector<8x192xf32> -> vector<8x192xf32>
    %132 = arith.addf %131, %37 : vector<8x192xf32>
    %133 = vector.extract_strided_slice %132 {offsets = [0, 0], sizes = [8, 128], strides = [1, 1]} : vector<8x192xf32> to vector<8x128xf32>
    %134 = arith.addf %133, %50 : vector<8x128xf32>
    %135 = arith.negf %134 : vector<8x128xf32>
    %136 = math.exp %135 : vector<8x128xf32>
    %cst_55 = arith.constant 1.000000e+00 : f32
    %137 = vector.broadcast %cst_55 : f32 to vector<8x128xf32>
    %138 = arith.addf %137, %136 : vector<8x128xf32>
    %139 = arith.divf %137, %138 : vector<8x128xf32>
    %140 = vector.extract_strided_slice %139 {offsets = [0, 0], sizes = [8, 64], strides = [1, 1]} : vector<8x128xf32> to vector<8x64xf32>
    %141 = vector.extract_strided_slice %139 {offsets = [0, 64], sizes = [8, 64], strides = [1, 1]} : vector<8x128xf32> to vector<8x64xf32>
    %142 = vector.extract_strided_slice %132 {offsets = [0, 128], sizes = [8, 64], strides = [1, 1]} : vector<8x192xf32> to vector<8x64xf32>
    %143 = arith.addf %52, %40 : vector<8x64xf32>
    %144 = arith.mulf %140, %143 : vector<8x64xf32>
    %145 = arith.addf %142, %144 : vector<8x64xf32>
    %146 = math.tanh %145 : vector<8x64xf32>
    %cst_56 = arith.constant 1.000000e+00 : f32
    %147 = vector.broadcast %cst_56 : f32 to vector<8x64xf32>
    %148 = arith.subf %147, %141 : vector<8x64xf32>
    %149 = arith.mulf %148, %146 : vector<8x64xf32>
    %150 = arith.mulf %141, %42 : vector<8x64xf32>
    %151 = arith.addf %149, %150 : vector<8x64xf32>
    %152 = arith.mulf %87, %87 : vector<8x64xf32>
    %153 = tpu.reciprocal %152 {approx = true} : vector<8x64xf32> -> vector<8x64xf32>
    %154 = math.log %87 : vector<8x64xf32>
    %155 = math.log %86 : vector<8x64xf32>
    %156 = arith.subf %154, %155 : vector<8x64xf32>
    %cst_57 = arith.constant 2.000000e+00 : f32
    %157 = vector.broadcast %cst_57 : f32 to vector<8x64xf32>
    %158 = arith.mulf %157, %156 : vector<8x64xf32>
    %159 = arith.mulf %86, %86 : vector<8x64xf32>
    %160 = arith.subf %69, %70 : vector<8x64xf32>
    %161 = arith.mulf %160, %160 : vector<8x64xf32>
    %162 = arith.addf %159, %161 : vector<8x64xf32>
    %163 = arith.mulf %162, %153 : vector<8x64xf32>
    %164 = arith.addf %158, %163 : vector<8x64xf32>
    %cst_58 = arith.constant 1.000000e+00 : f32
    %165 = vector.broadcast %cst_58 : f32 to vector<8x64xf32>
    %166 = arith.subf %164, %165 : vector<8x64xf32>
    %cst_59 = arith.constant 5.000000e-01 : f32
    %167 = vector.broadcast %cst_59 : f32 to vector<8x64xf32>
    %168 = arith.mulf %167, %166 : vector<8x64xf32>
    %169 = arith.addf %43, %168 : vector<8x64xf32>
    %170 = tpu.concatenate %151, %128 in 1 : vector<8x64xf32>, vector<8x64xf32> -> vector<8x128xf32>
    %171 = arith.truncf %170 : vector<8x128xf32> to vector<8x128xbf16>
    %c0_60 = arith.constant 0 : index
    %c0_61 = arith.constant 0 : index
    %172 = vector.load %arg10[%c0_60, %c0_61] : memref<128x576xbf16, #tpu.memory_space<vmem>>, vector<128x576xbf16>
    %cst_62 = arith.constant dense<0.000000e+00> : vector<8x576xf32>
    %173 = tpu.matmul %171, %172, %cst_62 {dimension_numbers = #tpu.dot_dimension_numbers<[1], [0], [0], [1], [0, 0, 1, 1], [], []>} : vector<8x128xbf16>, vector<128x576xbf16>, vector<8x576xf32> -> vector<8x576xf32>
    %174 = vector.extract_strided_slice %173 {offsets = [0, 0], sizes = [8, 64], strides = [1, 1]} : vector<8x576xf32> to vector<8x64xf32>
    %175 = vector.extract_strided_slice %173 {offsets = [0, 64], sizes = [8, 64], strides = [1, 1]} : vector<8x576xf32> to vector<8x64xf32>
    %176 = vector.extract_strided_slice %173 {offsets = [0, 128], sizes = [8, 128], strides = [1, 1]} : vector<8x576xf32> to vector<8x128xf32>
    %177 = vector.extract_strided_slice %173 {offsets = [0, 256], sizes = [8, 64], strides = [1, 1]} : vector<8x576xf32> to vector<8x64xf32>
    %178 = vector.extract_strided_slice %173 {offsets = [0, 320], sizes = [8, 64], strides = [1, 1]} : vector<8x576xf32> to vector<8x64xf32>
    %179 = vector.extract_strided_slice %173 {offsets = [0, 384], sizes = [8, 192], strides = [1, 1]} : vector<8x576xf32> to vector<8x192xf32>
    %180 = vector.extract_strided_slice %12 {offsets = [8, 0], sizes = [8, 256], strides = [1, 1]} : vector<56x256xf32> to vector<8x256xf32>
    %181 = vector.extract_strided_slice %180 {offsets = [0, 0], sizes = [8, 192], strides = [1, 1]} : vector<8x256xf32> to vector<8x192xf32>
    %182 = vector.extract_strided_slice %180 {offsets = [0, 192], sizes = [8, 64], strides = [1, 1]} : vector<8x256xf32> to vector<8x64xf32>
    %183 = arith.addf %182, %174 : vector<8x64xf32>
    %184 = arith.addf %183, %16 : vector<8x64xf32>
    %cst_63 = arith.constant 0.000000e+00 : f32
    %185 = vector.broadcast %cst_63 : f32 to vector<8x64xf32>
    %186 = arith.maximumf %184, %185 : vector<8x64xf32>
    %187 = arith.addf %175, %19 : vector<8x64xf32>
    %cst_64 = arith.constant 0.000000e+00 : f32
    %188 = vector.broadcast %cst_64 : f32 to vector<8x64xf32>
    %189 = arith.maximumf %187, %188 : vector<8x64xf32>
    %190 = tpu.concatenate %186, %189 in 1 : vector<8x64xf32>, vector<8x64xf32> -> vector<8x128xf32>
    %191 = arith.truncf %190 : vector<8x128xf32> to vector<8x128xbf16>
    %c0_65 = arith.constant 0 : index
    %c0_66 = arith.constant 0 : index
    %192 = vector.load %arg14[%c0_65, %c0_66] : memref<128x256xbf16, #tpu.memory_space<vmem>>, vector<128x256xbf16>
    %cst_67 = arith.constant dense<0.000000e+00> : vector<8x256xf32>
    %193 = tpu.matmul %191, %192, %cst_67 {dimension_numbers = #tpu.dot_dimension_numbers<[1], [0], [0], [1], [0, 0, 1, 1], [], []>} : vector<8x128xbf16>, vector<128x256xbf16>, vector<8x256xf32> -> vector<8x256xf32>
    %194 = arith.addf %193, %28 : vector<8x256xf32>
    %195 = vector.extract_strided_slice %194 {offsets = [0, 0], sizes = [8, 64], strides = [1, 1]} : vector<8x256xf32> to vector<8x64xf32>
    %196 = vector.extract_strided_slice %194 {offsets = [0, 64], sizes = [8, 64], strides = [1, 1]} : vector<8x256xf32> to vector<8x64xf32>
    %197 = vector.extract_strided_slice %194 {offsets = [0, 128], sizes = [8, 128], strides = [1, 1]} : vector<8x256xf32> to vector<8x128xf32>
    %cst_68 = arith.constant 0.000000e+00 : f32
    %198 = vector.broadcast %cst_68 : f32 to vector<8x128xf32>
    %199 = arith.maximumf %197, %198 : vector<8x128xf32>
    %200 = vector.broadcast %cst_68 : f32 to vector<8x128xf32>
    %201 = arith.subf %197, %200 : vector<8x128xf32>
    %202 = arith.cmpf one, %201, %201 : vector<8x128xf32>
    %203 = vector.broadcast %cst_68 : f32 to vector<8x128xf32>
    %204 = arith.addf %197, %203 : vector<8x128xf32>
    %205 = math.absf %201 : vector<8x128xf32>
    %cst_69 = arith.constant 0.000000e+00 : f32
    %206 = vector.broadcast %cst_69 : f32 to vector<8x128xf32>
    %207 = arith.subf %206, %205 : vector<8x128xf32>
    %208 = math.exp %207 : vector<8x128xf32>
    %209 = math.log1p %208 : vector<8x128xf32>
    %210 = arith.addf %199, %209 : vector<8x128xf32>
    %211 = arith.select %202, %204, %210 : vector<8x128xi1>, vector<8x128xf32>
    %212 = vector.extract_strided_slice %211 {offsets = [0, 0], sizes = [8, 64], strides = [1, 1]} : vector<8x128xf32> to vector<8x64xf32>
    %213 = vector.extract_strided_slice %211 {offsets = [0, 64], sizes = [8, 64], strides = [1, 1]} : vector<8x128xf32> to vector<8x64xf32>
    %214 = vector.extract_strided_slice %13 {offsets = [8, 0], sizes = [8, 64], strides = [1, 1]} : vector<56x64xf32> to vector<8x64xf32>
    %215 = arith.mulf %214, %212 : vector<8x64xf32>
    %216 = arith.addf %195, %215 : vector<8x64xf32>
    %217 = arith.truncf %216 : vector<8x64xf32> to vector<8x64xbf16>
    %c0_70 = arith.constant 0 : index
    %c0_71 = arith.constant 0 : index
    %218 = vector.load %arg7[%c0_70, %c0_71] : memref<64x64xbf16, #tpu.memory_space<vmem>>, vector<64x64xbf16>
    %cst_72 = arith.constant dense<0.000000e+00> : vector<8x64xf32>
    %219 = tpu.matmul %217, %218, %cst_72 {dimension_numbers = #tpu.dot_dimension_numbers<[1], [0], [0], [1], [0, 0, 1, 1], [], []>} : vector<8x64xbf16>, vector<64x64xbf16>, vector<8x64xf32> -> vector<8x64xf32>
    %220 = arith.addf %219, %25 : vector<8x64xf32>
    %cst_73 = arith.constant 0.000000e+00 : f32
    %221 = vector.broadcast %cst_73 : f32 to vector<8x64xf32>
    %222 = arith.maximumf %220, %221 : vector<8x64xf32>
    %223 = arith.truncf %222 : vector<8x64xf32> to vector<8x64xbf16>
    %c0_74 = arith.constant 0 : index
    %c0_75 = arith.constant 0 : index
    %224 = vector.load %arg9[%c0_74, %c0_75] : memref<64x256xbf16, #tpu.memory_space<vmem>>, vector<64x256xbf16>
    %cst_76 = arith.constant dense<0.000000e+00> : vector<8x256xf32>
    %225 = tpu.matmul %223, %224, %cst_76 {dimension_numbers = #tpu.dot_dimension_numbers<[1], [0], [0], [1], [0, 0, 1, 1], [], []>} : vector<8x64xbf16>, vector<64x256xbf16>, vector<8x256xf32> -> vector<8x256xf32>
    %226 = vector.extract_strided_slice %225 {offsets = [0, 0], sizes = [8, 192], strides = [1, 1]} : vector<8x256xf32> to vector<8x192xf32>
    %227 = vector.extract_strided_slice %225 {offsets = [0, 192], sizes = [8, 64], strides = [1, 1]} : vector<8x256xf32> to vector<8x64xf32>
    %228 = arith.addf %227, %177 : vector<8x64xf32>
    %229 = arith.addf %228, %22 : vector<8x64xf32>
    %cst_77 = arith.constant 0.000000e+00 : f32
    %230 = vector.broadcast %cst_77 : f32 to vector<8x64xf32>
    %231 = arith.maximumf %229, %230 : vector<8x64xf32>
    %232 = arith.addf %181, %226 : vector<8x192xf32>
    %233 = arith.addf %232, %31 : vector<8x192xf32>
    %234 = vector.extract_strided_slice %233 {offsets = [0, 0], sizes = [8, 128], strides = [1, 1]} : vector<8x192xf32> to vector<8x128xf32>
    %235 = vector.extract_strided_slice %179 {offsets = [0, 0], sizes = [8, 128], strides = [1, 1]} : vector<8x192xf32> to vector<8x128xf32>
    %236 = arith.addf %234, %235 : vector<8x128xf32>
    %237 = arith.negf %236 : vector<8x128xf32>
    %238 = math.exp %237 : vector<8x128xf32>
    %cst_78 = arith.constant 1.000000e+00 : f32
    %239 = vector.broadcast %cst_78 : f32 to vector<8x128xf32>
    %240 = arith.addf %239, %238 : vector<8x128xf32>
    %241 = arith.divf %239, %240 : vector<8x128xf32>
    %242 = vector.extract_strided_slice %241 {offsets = [0, 0], sizes = [8, 64], strides = [1, 1]} : vector<8x128xf32> to vector<8x64xf32>
    %243 = vector.extract_strided_slice %241 {offsets = [0, 64], sizes = [8, 64], strides = [1, 1]} : vector<8x128xf32> to vector<8x64xf32>
    %244 = vector.extract_strided_slice %233 {offsets = [0, 128], sizes = [8, 64], strides = [1, 1]} : vector<8x192xf32> to vector<8x64xf32>
    %245 = vector.extract_strided_slice %179 {offsets = [0, 128], sizes = [8, 64], strides = [1, 1]} : vector<8x192xf32> to vector<8x64xf32>
    %246 = arith.addf %245, %34 : vector<8x64xf32>
    %247 = arith.mulf %242, %246 : vector<8x64xf32>
    %248 = arith.addf %244, %247 : vector<8x64xf32>
    %249 = math.tanh %248 : vector<8x64xf32>
    %cst_79 = arith.constant 1.000000e+00 : f32
    %250 = vector.broadcast %cst_79 : f32 to vector<8x64xf32>
    %251 = arith.subf %250, %243 : vector<8x64xf32>
    %252 = arith.mulf %251, %249 : vector<8x64xf32>
    %253 = arith.mulf %243, %128 : vector<8x64xf32>
    %254 = arith.addf %252, %253 : vector<8x64xf32>
    %255 = arith.truncf %254 : vector<8x64xf32> to vector<8x64xbf16>
    %c0_80 = arith.constant 0 : index
    %c0_81 = arith.constant 0 : index
    %256 = vector.load %arg20[%c0_80, %c0_81] : memref<64x192xbf16, #tpu.memory_space<vmem>>, vector<64x192xbf16>
    %cst_82 = arith.constant dense<0.000000e+00> : vector<8x192xf32>
    %257 = tpu.matmul %255, %256, %cst_82 {dimension_numbers = #tpu.dot_dimension_numbers<[1], [0], [0], [1], [0, 0, 1, 1], [], []>} : vector<8x64xbf16>, vector<64x192xbf16>, vector<8x192xf32> -> vector<8x192xf32>
    %258 = arith.addf %257, %37 : vector<8x192xf32>
    %259 = vector.extract_strided_slice %258 {offsets = [0, 0], sizes = [8, 128], strides = [1, 1]} : vector<8x192xf32> to vector<8x128xf32>
    %260 = arith.addf %259, %176 : vector<8x128xf32>
    %261 = arith.negf %260 : vector<8x128xf32>
    %262 = math.exp %261 : vector<8x128xf32>
    %cst_83 = arith.constant 1.000000e+00 : f32
    %263 = vector.broadcast %cst_83 : f32 to vector<8x128xf32>
    %264 = arith.addf %263, %262 : vector<8x128xf32>
    %265 = arith.divf %263, %264 : vector<8x128xf32>
    %266 = vector.extract_strided_slice %265 {offsets = [0, 0], sizes = [8, 64], strides = [1, 1]} : vector<8x128xf32> to vector<8x64xf32>
    %267 = vector.extract_strided_slice %265 {offsets = [0, 64], sizes = [8, 64], strides = [1, 1]} : vector<8x128xf32> to vector<8x64xf32>
    %268 = vector.extract_strided_slice %258 {offsets = [0, 128], sizes = [8, 64], strides = [1, 1]} : vector<8x192xf32> to vector<8x64xf32>
    %269 = arith.addf %178, %40 : vector<8x64xf32>
    %270 = arith.mulf %266, %269 : vector<8x64xf32>
    %271 = arith.addf %268, %270 : vector<8x64xf32>
    %272 = math.tanh %271 : vector<8x64xf32>
    %cst_84 = arith.constant 1.000000e+00 : f32
    %273 = vector.broadcast %cst_84 : f32 to vector<8x64xf32>
    %274 = arith.subf %273, %267 : vector<8x64xf32>
    %275 = arith.mulf %274, %272 : vector<8x64xf32>
    %276 = arith.mulf %267, %151 : vector<8x64xf32>
    %277 = arith.addf %275, %276 : vector<8x64xf32>
    %278 = arith.mulf %213, %213 : vector<8x64xf32>
    %279 = tpu.reciprocal %278 {approx = true} : vector<8x64xf32> -> vector<8x64xf32>
    %280 = math.log %213 : vector<8x64xf32>
    %281 = math.log %212 : vector<8x64xf32>
    %282 = arith.subf %280, %281 : vector<8x64xf32>
    %cst_85 = arith.constant 2.000000e+00 : f32
    %283 = vector.broadcast %cst_85 : f32 to vector<8x64xf32>
    %284 = arith.mulf %283, %282 : vector<8x64xf32>
    %285 = arith.mulf %212, %212 : vector<8x64xf32>
    %286 = arith.subf %195, %196 : vector<8x64xf32>
    %287 = arith.mulf %286, %286 : vector<8x64xf32>
    %288 = arith.addf %285, %287 : vector<8x64xf32>
    %289 = arith.mulf %288, %279 : vector<8x64xf32>
    %290 = arith.addf %284, %289 : vector<8x64xf32>
    %cst_86 = arith.constant 1.000000e+00 : f32
    %291 = vector.broadcast %cst_86 : f32 to vector<8x64xf32>
    %292 = arith.subf %290, %291 : vector<8x64xf32>
    %cst_87 = arith.constant 5.000000e-01 : f32
    %293 = vector.broadcast %cst_87 : f32 to vector<8x64xf32>
    %294 = arith.mulf %293, %292 : vector<8x64xf32>
    %295 = arith.addf %169, %294 : vector<8x64xf32>
    %296 = tpu.concatenate %277, %254 in 1 : vector<8x64xf32>, vector<8x64xf32> -> vector<8x128xf32>
    %297 = arith.truncf %296 : vector<8x128xf32> to vector<8x128xbf16>
    %c0_88 = arith.constant 0 : index
    %c0_89 = arith.constant 0 : index
    %298 = vector.load %arg10[%c0_88, %c0_89] : memref<128x576xbf16, #tpu.memory_space<vmem>>, vector<128x576xbf16>
    %cst_90 = arith.constant dense<0.000000e+00> : vector<8x576xf32>
    %299 = tpu.matmul %297, %298, %cst_90 {dimension_numbers = #tpu.dot_dimension_numbers<[1], [0], [0], [1], [0, 0, 1, 1], [], []>} : vector<8x128xbf16>, vector<128x576xbf16>, vector<8x576xf32> -> vector<8x576xf32>
    %300 = vector.extract_strided_slice %299 {offsets = [0, 0], sizes = [8, 64], strides = [1, 1]} : vector<8x576xf32> to vector<8x64xf32>
    %301 = vector.extract_strided_slice %299 {offsets = [0, 64], sizes = [8, 64], strides = [1, 1]} : vector<8x576xf32> to vector<8x64xf32>
    %302 = vector.extract_strided_slice %299 {offsets = [0, 128], sizes = [8, 128], strides = [1, 1]} : vector<8x576xf32> to vector<8x128xf32>
    %303 = vector.extract_strided_slice %299 {offsets = [0, 256], sizes = [8, 64], strides = [1, 1]} : vector<8x576xf32> to vector<8x64xf32>
    %304 = vector.extract_strided_slice %299 {offsets = [0, 320], sizes = [8, 64], strides = [1, 1]} : vector<8x576xf32> to vector<8x64xf32>
    %305 = vector.extract_strided_slice %299 {offsets = [0, 384], sizes = [8, 192], strides = [1, 1]} : vector<8x576xf32> to vector<8x192xf32>
    %306 = vector.extract_strided_slice %12 {offsets = [16, 0], sizes = [8, 256], strides = [1, 1]} : vector<56x256xf32> to vector<8x256xf32>
    %307 = vector.extract_strided_slice %306 {offsets = [0, 0], sizes = [8, 192], strides = [1, 1]} : vector<8x256xf32> to vector<8x192xf32>
    %308 = vector.extract_strided_slice %306 {offsets = [0, 192], sizes = [8, 64], strides = [1, 1]} : vector<8x256xf32> to vector<8x64xf32>
    %309 = arith.addf %308, %300 : vector<8x64xf32>
    %310 = arith.addf %309, %16 : vector<8x64xf32>
    %cst_91 = arith.constant 0.000000e+00 : f32
    %311 = vector.broadcast %cst_91 : f32 to vector<8x64xf32>
    %312 = arith.maximumf %310, %311 : vector<8x64xf32>
    %313 = arith.addf %301, %19 : vector<8x64xf32>
    %cst_92 = arith.constant 0.000000e+00 : f32
    %314 = vector.broadcast %cst_92 : f32 to vector<8x64xf32>
    %315 = arith.maximumf %313, %314 : vector<8x64xf32>
    %316 = tpu.concatenate %312, %315 in 1 : vector<8x64xf32>, vector<8x64xf32> -> vector<8x128xf32>
    %317 = arith.truncf %316 : vector<8x128xf32> to vector<8x128xbf16>
    %c0_93 = arith.constant 0 : index
    %c0_94 = arith.constant 0 : index
    %318 = vector.load %arg14[%c0_93, %c0_94] : memref<128x256xbf16, #tpu.memory_space<vmem>>, vector<128x256xbf16>
    %cst_95 = arith.constant dense<0.000000e+00> : vector<8x256xf32>
    %319 = tpu.matmul %317, %318, %cst_95 {dimension_numbers = #tpu.dot_dimension_numbers<[1], [0], [0], [1], [0, 0, 1, 1], [], []>} : vector<8x128xbf16>, vector<128x256xbf16>, vector<8x256xf32> -> vector<8x256xf32>
    %320 = arith.addf %319, %28 : vector<8x256xf32>
    %321 = vector.extract_strided_slice %320 {offsets = [0, 0], sizes = [8, 64], strides = [1, 1]} : vector<8x256xf32> to vector<8x64xf32>
    %322 = vector.extract_strided_slice %320 {offsets = [0, 64], sizes = [8, 64], strides = [1, 1]} : vector<8x256xf32> to vector<8x64xf32>
    %323 = vector.extract_strided_slice %320 {offsets = [0, 128], sizes = [8, 128], strides = [1, 1]} : vector<8x256xf32> to vector<8x128xf32>
    %cst_96 = arith.constant 0.000000e+00 : f32
    %324 = vector.broadcast %cst_96 : f32 to vector<8x128xf32>
    %325 = arith.maximumf %323, %324 : vector<8x128xf32>
    %326 = vector.broadcast %cst_96 : f32 to vector<8x128xf32>
    %327 = arith.subf %323, %326 : vector<8x128xf32>
    %328 = arith.cmpf one, %327, %327 : vector<8x128xf32>
    %329 = vector.broadcast %cst_96 : f32 to vector<8x128xf32>
    %330 = arith.addf %323, %329 : vector<8x128xf32>
    %331 = math.absf %327 : vector<8x128xf32>
    %cst_97 = arith.constant 0.000000e+00 : f32
    %332 = vector.broadcast %cst_97 : f32 to vector<8x128xf32>
    %333 = arith.subf %332, %331 : vector<8x128xf32>
    %334 = math.exp %333 : vector<8x128xf32>
    %335 = math.log1p %334 : vector<8x128xf32>
    %336 = arith.addf %325, %335 : vector<8x128xf32>
    %337 = arith.select %328, %330, %336 : vector<8x128xi1>, vector<8x128xf32>
    %338 = vector.extract_strided_slice %337 {offsets = [0, 0], sizes = [8, 64], strides = [1, 1]} : vector<8x128xf32> to vector<8x64xf32>
    %339 = vector.extract_strided_slice %337 {offsets = [0, 64], sizes = [8, 64], strides = [1, 1]} : vector<8x128xf32> to vector<8x64xf32>
    %340 = vector.extract_strided_slice %13 {offsets = [16, 0], sizes = [8, 64], strides = [1, 1]} : vector<56x64xf32> to vector<8x64xf32>
    %341 = arith.mulf %340, %338 : vector<8x64xf32>
    %342 = arith.addf %321, %341 : vector<8x64xf32>
    %343 = arith.truncf %342 : vector<8x64xf32> to vector<8x64xbf16>
    %c0_98 = arith.constant 0 : index
    %c0_99 = arith.constant 0 : index
    %344 = vector.load %arg7[%c0_98, %c0_99] : memref<64x64xbf16, #tpu.memory_space<vmem>>, vector<64x64xbf16>
    %cst_100 = arith.constant dense<0.000000e+00> : vector<8x64xf32>
    %345 = tpu.matmul %343, %344, %cst_100 {dimension_numbers = #tpu.dot_dimension_numbers<[1], [0], [0], [1], [0, 0, 1, 1], [], []>} : vector<8x64xbf16>, vector<64x64xbf16>, vector<8x64xf32> -> vector<8x64xf32>
    %346 = arith.addf %345, %25 : vector<8x64xf32>
    %cst_101 = arith.constant 0.000000e+00 : f32
    %347 = vector.broadcast %cst_101 : f32 to vector<8x64xf32>
    %348 = arith.maximumf %346, %347 : vector<8x64xf32>
    %349 = arith.truncf %348 : vector<8x64xf32> to vector<8x64xbf16>
    %c0_102 = arith.constant 0 : index
    %c0_103 = arith.constant 0 : index
    %350 = vector.load %arg9[%c0_102, %c0_103] : memref<64x256xbf16, #tpu.memory_space<vmem>>, vector<64x256xbf16>
    %cst_104 = arith.constant dense<0.000000e+00> : vector<8x256xf32>
    %351 = tpu.matmul %349, %350, %cst_104 {dimension_numbers = #tpu.dot_dimension_numbers<[1], [0], [0], [1], [0, 0, 1, 1], [], []>} : vector<8x64xbf16>, vector<64x256xbf16>, vector<8x256xf32> -> vector<8x256xf32>
    %352 = vector.extract_strided_slice %351 {offsets = [0, 0], sizes = [8, 192], strides = [1, 1]} : vector<8x256xf32> to vector<8x192xf32>
    %353 = vector.extract_strided_slice %351 {offsets = [0, 192], sizes = [8, 64], strides = [1, 1]} : vector<8x256xf32> to vector<8x64xf32>
    %354 = arith.addf %353, %303 : vector<8x64xf32>
    %355 = arith.addf %354, %22 : vector<8x64xf32>
    %cst_105 = arith.constant 0.000000e+00 : f32
    %356 = vector.broadcast %cst_105 : f32 to vector<8x64xf32>
    %357 = arith.maximumf %355, %356 : vector<8x64xf32>
    %358 = arith.addf %307, %352 : vector<8x192xf32>
    %359 = arith.addf %358, %31 : vector<8x192xf32>
    %360 = vector.extract_strided_slice %359 {offsets = [0, 0], sizes = [8, 128], strides = [1, 1]} : vector<8x192xf32> to vector<8x128xf32>
    %361 = vector.extract_strided_slice %305 {offsets = [0, 0], sizes = [8, 128], strides = [1, 1]} : vector<8x192xf32> to vector<8x128xf32>
    %362 = arith.addf %360, %361 : vector<8x128xf32>
    %363 = arith.negf %362 : vector<8x128xf32>
    %364 = math.exp %363 : vector<8x128xf32>
    %cst_106 = arith.constant 1.000000e+00 : f32
    %365 = vector.broadcast %cst_106 : f32 to vector<8x128xf32>
    %366 = arith.addf %365, %364 : vector<8x128xf32>
    %367 = arith.divf %365, %366 : vector<8x128xf32>
    %368 = vector.extract_strided_slice %367 {offsets = [0, 0], sizes = [8, 64], strides = [1, 1]} : vector<8x128xf32> to vector<8x64xf32>
    %369 = vector.extract_strided_slice %367 {offsets = [0, 64], sizes = [8, 64], strides = [1, 1]} : vector<8x128xf32> to vector<8x64xf32>
    %370 = vector.extract_strided_slice %359 {offsets = [0, 128], sizes = [8, 64], strides = [1, 1]} : vector<8x192xf32> to vector<8x64xf32>
    %371 = vector.extract_strided_slice %305 {offsets = [0, 128], sizes = [8, 64], strides = [1, 1]} : vector<8x192xf32> to vector<8x64xf32>
    %372 = arith.addf %371, %34 : vector<8x64xf32>
    %373 = arith.mulf %368, %372 : vector<8x64xf32>
    %374 = arith.addf %370, %373 : vector<8x64xf32>
    %375 = math.tanh %374 : vector<8x64xf32>
    %cst_107 = arith.constant 1.000000e+00 : f32
    %376 = vector.broadcast %cst_107 : f32 to vector<8x64xf32>
    %377 = arith.subf %376, %369 : vector<8x64xf32>
    %378 = arith.mulf %377, %375 : vector<8x64xf32>
    %379 = arith.mulf %369, %254 : vector<8x64xf32>
    %380 = arith.addf %378, %379 : vector<8x64xf32>
    %381 = arith.truncf %380 : vector<8x64xf32> to vector<8x64xbf16>
    %c0_108 = arith.constant 0 : index
    %c0_109 = arith.constant 0 : index
    %382 = vector.load %arg20[%c0_108, %c0_109] : memref<64x192xbf16, #tpu.memory_space<vmem>>, vector<64x192xbf16>
    %cst_110 = arith.constant dense<0.000000e+00> : vector<8x192xf32>
    %383 = tpu.matmul %381, %382, %cst_110 {dimension_numbers = #tpu.dot_dimension_numbers<[1], [0], [0], [1], [0, 0, 1, 1], [], []>} : vector<8x64xbf16>, vector<64x192xbf16>, vector<8x192xf32> -> vector<8x192xf32>
    %384 = arith.addf %383, %37 : vector<8x192xf32>
    %385 = vector.extract_strided_slice %384 {offsets = [0, 0], sizes = [8, 128], strides = [1, 1]} : vector<8x192xf32> to vector<8x128xf32>
    %386 = arith.addf %385, %302 : vector<8x128xf32>
    %387 = arith.negf %386 : vector<8x128xf32>
    %388 = math.exp %387 : vector<8x128xf32>
    %cst_111 = arith.constant 1.000000e+00 : f32
    %389 = vector.broadcast %cst_111 : f32 to vector<8x128xf32>
    %390 = arith.addf %389, %388 : vector<8x128xf32>
    %391 = arith.divf %389, %390 : vector<8x128xf32>
    %392 = vector.extract_strided_slice %391 {offsets = [0, 0], sizes = [8, 64], strides = [1, 1]} : vector<8x128xf32> to vector<8x64xf32>
    %393 = vector.extract_strided_slice %391 {offsets = [0, 64], sizes = [8, 64], strides = [1, 1]} : vector<8x128xf32> to vector<8x64xf32>
    %394 = vector.extract_strided_slice %384 {offsets = [0, 128], sizes = [8, 64], strides = [1, 1]} : vector<8x192xf32> to vector<8x64xf32>
    %395 = arith.addf %304, %40 : vector<8x64xf32>
    %396 = arith.mulf %392, %395 : vector<8x64xf32>
    %397 = arith.addf %394, %396 : vector<8x64xf32>
    %398 = math.tanh %397 : vector<8x64xf32>
    %cst_112 = arith.constant 1.000000e+00 : f32
    %399 = vector.broadcast %cst_112 : f32 to vector<8x64xf32>
    %400 = arith.subf %399, %393 : vector<8x64xf32>
    %401 = arith.mulf %400, %398 : vector<8x64xf32>
    %402 = arith.mulf %393, %277 : vector<8x64xf32>
    %403 = arith.addf %401, %402 : vector<8x64xf32>
    %404 = arith.mulf %339, %339 : vector<8x64xf32>
    %405 = tpu.reciprocal %404 {approx = true} : vector<8x64xf32> -> vector<8x64xf32>
    %406 = math.log %339 : vector<8x64xf32>
    %407 = math.log %338 : vector<8x64xf32>
    %408 = arith.subf %406, %407 : vector<8x64xf32>
    %cst_113 = arith.constant 2.000000e+00 : f32
    %409 = vector.broadcast %cst_113 : f32 to vector<8x64xf32>
    %410 = arith.mulf %409, %408 : vector<8x64xf32>
    %411 = arith.mulf %338, %338 : vector<8x64xf32>
    %412 = arith.subf %321, %322 : vector<8x64xf32>
    %413 = arith.mulf %412, %412 : vector<8x64xf32>
    %414 = arith.addf %411, %413 : vector<8x64xf32>
    %415 = arith.mulf %414, %405 : vector<8x64xf32>
    %416 = arith.addf %410, %415 : vector<8x64xf32>
    %cst_114 = arith.constant 1.000000e+00 : f32
    %417 = vector.broadcast %cst_114 : f32 to vector<8x64xf32>
    %418 = arith.subf %416, %417 : vector<8x64xf32>
    %cst_115 = arith.constant 5.000000e-01 : f32
    %419 = vector.broadcast %cst_115 : f32 to vector<8x64xf32>
    %420 = arith.mulf %419, %418 : vector<8x64xf32>
    %421 = arith.addf %295, %420 : vector<8x64xf32>
    %422 = tpu.concatenate %403, %380 in 1 : vector<8x64xf32>, vector<8x64xf32> -> vector<8x128xf32>
    %423 = arith.truncf %422 : vector<8x128xf32> to vector<8x128xbf16>
    %c0_116 = arith.constant 0 : index
    %c0_117 = arith.constant 0 : index
    %424 = vector.load %arg10[%c0_116, %c0_117] : memref<128x576xbf16, #tpu.memory_space<vmem>>, vector<128x576xbf16>
    %cst_118 = arith.constant dense<0.000000e+00> : vector<8x576xf32>
    %425 = tpu.matmul %423, %424, %cst_118 {dimension_numbers = #tpu.dot_dimension_numbers<[1], [0], [0], [1], [0, 0, 1, 1], [], []>} : vector<8x128xbf16>, vector<128x576xbf16>, vector<8x576xf32> -> vector<8x576xf32>
    %426 = vector.extract_strided_slice %425 {offsets = [0, 0], sizes = [8, 64], strides = [1, 1]} : vector<8x576xf32> to vector<8x64xf32>
    %427 = vector.extract_strided_slice %425 {offsets = [0, 64], sizes = [8, 64], strides = [1, 1]} : vector<8x576xf32> to vector<8x64xf32>
    %428 = vector.extract_strided_slice %425 {offsets = [0, 128], sizes = [8, 128], strides = [1, 1]} : vector<8x576xf32> to vector<8x128xf32>
    %429 = vector.extract_strided_slice %425 {offsets = [0, 256], sizes = [8, 64], strides = [1, 1]} : vector<8x576xf32> to vector<8x64xf32>
    %430 = vector.extract_strided_slice %425 {offsets = [0, 320], sizes = [8, 64], strides = [1, 1]} : vector<8x576xf32> to vector<8x64xf32>
    %431 = vector.extract_strided_slice %425 {offsets = [0, 384], sizes = [8, 192], strides = [1, 1]} : vector<8x576xf32> to vector<8x192xf32>
    %432 = vector.extract_strided_slice %12 {offsets = [24, 0], sizes = [8, 256], strides = [1, 1]} : vector<56x256xf32> to vector<8x256xf32>
    %433 = vector.extract_strided_slice %432 {offsets = [0, 0], sizes = [8, 192], strides = [1, 1]} : vector<8x256xf32> to vector<8x192xf32>
    %434 = vector.extract_strided_slice %432 {offsets = [0, 192], sizes = [8, 64], strides = [1, 1]} : vector<8x256xf32> to vector<8x64xf32>
    %435 = arith.addf %434, %426 : vector<8x64xf32>
    %436 = arith.addf %435, %16 : vector<8x64xf32>
    %cst_119 = arith.constant 0.000000e+00 : f32
    %437 = vector.broadcast %cst_119 : f32 to vector<8x64xf32>
    %438 = arith.maximumf %436, %437 : vector<8x64xf32>
    %439 = arith.addf %427, %19 : vector<8x64xf32>
    %cst_120 = arith.constant 0.000000e+00 : f32
    %440 = vector.broadcast %cst_120 : f32 to vector<8x64xf32>
    %441 = arith.maximumf %439, %440 : vector<8x64xf32>
    %442 = tpu.concatenate %438, %441 in 1 : vector<8x64xf32>, vector<8x64xf32> -> vector<8x128xf32>
    %443 = arith.truncf %442 : vector<8x128xf32> to vector<8x128xbf16>
    %c0_121 = arith.constant 0 : index
    %c0_122 = arith.constant 0 : index
    %444 = vector.load %arg14[%c0_121, %c0_122] : memref<128x256xbf16, #tpu.memory_space<vmem>>, vector<128x256xbf16>
    %cst_123 = arith.constant dense<0.000000e+00> : vector<8x256xf32>
    %445 = tpu.matmul %443, %444, %cst_123 {dimension_numbers = #tpu.dot_dimension_numbers<[1], [0], [0], [1], [0, 0, 1, 1], [], []>} : vector<8x128xbf16>, vector<128x256xbf16>, vector<8x256xf32> -> vector<8x256xf32>
    %446 = arith.addf %445, %28 : vector<8x256xf32>
    %447 = vector.extract_strided_slice %446 {offsets = [0, 0], sizes = [8, 64], strides = [1, 1]} : vector<8x256xf32> to vector<8x64xf32>
    %448 = vector.extract_strided_slice %446 {offsets = [0, 64], sizes = [8, 64], strides = [1, 1]} : vector<8x256xf32> to vector<8x64xf32>
    %449 = vector.extract_strided_slice %446 {offsets = [0, 128], sizes = [8, 128], strides = [1, 1]} : vector<8x256xf32> to vector<8x128xf32>
    %cst_124 = arith.constant 0.000000e+00 : f32
    %450 = vector.broadcast %cst_124 : f32 to vector<8x128xf32>
    %451 = arith.maximumf %449, %450 : vector<8x128xf32>
    %452 = vector.broadcast %cst_124 : f32 to vector<8x128xf32>
    %453 = arith.subf %449, %452 : vector<8x128xf32>
    %454 = arith.cmpf one, %453, %453 : vector<8x128xf32>
    %455 = vector.broadcast %cst_124 : f32 to vector<8x128xf32>
    %456 = arith.addf %449, %455 : vector<8x128xf32>
    %457 = math.absf %453 : vector<8x128xf32>
    %cst_125 = arith.constant 0.000000e+00 : f32
    %458 = vector.broadcast %cst_125 : f32 to vector<8x128xf32>
    %459 = arith.subf %458, %457 : vector<8x128xf32>
    %460 = math.exp %459 : vector<8x128xf32>
    %461 = math.log1p %460 : vector<8x128xf32>
    %462 = arith.addf %451, %461 : vector<8x128xf32>
    %463 = arith.select %454, %456, %462 : vector<8x128xi1>, vector<8x128xf32>
    %464 = vector.extract_strided_slice %463 {offsets = [0, 0], sizes = [8, 64], strides = [1, 1]} : vector<8x128xf32> to vector<8x64xf32>
    %465 = vector.extract_strided_slice %463 {offsets = [0, 64], sizes = [8, 64], strides = [1, 1]} : vector<8x128xf32> to vector<8x64xf32>
    %466 = vector.extract_strided_slice %13 {offsets = [24, 0], sizes = [8, 64], strides = [1, 1]} : vector<56x64xf32> to vector<8x64xf32>
    %467 = arith.mulf %466, %464 : vector<8x64xf32>
    %468 = arith.addf %447, %467 : vector<8x64xf32>
    %469 = arith.truncf %468 : vector<8x64xf32> to vector<8x64xbf16>
    %c0_126 = arith.constant 0 : index
    %c0_127 = arith.constant 0 : index
    %470 = vector.load %arg7[%c0_126, %c0_127] : memref<64x64xbf16, #tpu.memory_space<vmem>>, vector<64x64xbf16>
    %cst_128 = arith.constant dense<0.000000e+00> : vector<8x64xf32>
    %471 = tpu.matmul %469, %470, %cst_128 {dimension_numbers = #tpu.dot_dimension_numbers<[1], [0], [0], [1], [0, 0, 1, 1], [], []>} : vector<8x64xbf16>, vector<64x64xbf16>, vector<8x64xf32> -> vector<8x64xf32>
    %472 = arith.addf %471, %25 : vector<8x64xf32>
    %cst_129 = arith.constant 0.000000e+00 : f32
    %473 = vector.broadcast %cst_129 : f32 to vector<8x64xf32>
    %474 = arith.maximumf %472, %473 : vector<8x64xf32>
    %475 = arith.truncf %474 : vector<8x64xf32> to vector<8x64xbf16>
    %c0_130 = arith.constant 0 : index
    %c0_131 = arith.constant 0 : index
    %476 = vector.load %arg9[%c0_130, %c0_131] : memref<64x256xbf16, #tpu.memory_space<vmem>>, vector<64x256xbf16>
    %cst_132 = arith.constant dense<0.000000e+00> : vector<8x256xf32>
    %477 = tpu.matmul %475, %476, %cst_132 {dimension_numbers = #tpu.dot_dimension_numbers<[1], [0], [0], [1], [0, 0, 1, 1], [], []>} : vector<8x64xbf16>, vector<64x256xbf16>, vector<8x256xf32> -> vector<8x256xf32>
    %478 = vector.extract_strided_slice %477 {offsets = [0, 0], sizes = [8, 192], strides = [1, 1]} : vector<8x256xf32> to vector<8x192xf32>
    %479 = vector.extract_strided_slice %477 {offsets = [0, 192], sizes = [8, 64], strides = [1, 1]} : vector<8x256xf32> to vector<8x64xf32>
    %480 = arith.addf %479, %429 : vector<8x64xf32>
    %481 = arith.addf %480, %22 : vector<8x64xf32>
    %cst_133 = arith.constant 0.000000e+00 : f32
    %482 = vector.broadcast %cst_133 : f32 to vector<8x64xf32>
    %483 = arith.maximumf %481, %482 : vector<8x64xf32>
    %484 = arith.addf %433, %478 : vector<8x192xf32>
    %485 = arith.addf %484, %31 : vector<8x192xf32>
    %486 = vector.extract_strided_slice %485 {offsets = [0, 0], sizes = [8, 128], strides = [1, 1]} : vector<8x192xf32> to vector<8x128xf32>
    %487 = vector.extract_strided_slice %431 {offsets = [0, 0], sizes = [8, 128], strides = [1, 1]} : vector<8x192xf32> to vector<8x128xf32>
    %488 = arith.addf %486, %487 : vector<8x128xf32>
    %489 = arith.negf %488 : vector<8x128xf32>
    %490 = math.exp %489 : vector<8x128xf32>
    %cst_134 = arith.constant 1.000000e+00 : f32
    %491 = vector.broadcast %cst_134 : f32 to vector<8x128xf32>
    %492 = arith.addf %491, %490 : vector<8x128xf32>
    %493 = arith.divf %491, %492 : vector<8x128xf32>
    %494 = vector.extract_strided_slice %493 {offsets = [0, 0], sizes = [8, 64], strides = [1, 1]} : vector<8x128xf32> to vector<8x64xf32>
    %495 = vector.extract_strided_slice %493 {offsets = [0, 64], sizes = [8, 64], strides = [1, 1]} : vector<8x128xf32> to vector<8x64xf32>
    %496 = vector.extract_strided_slice %485 {offsets = [0, 128], sizes = [8, 64], strides = [1, 1]} : vector<8x192xf32> to vector<8x64xf32>
    %497 = vector.extract_strided_slice %431 {offsets = [0, 128], sizes = [8, 64], strides = [1, 1]} : vector<8x192xf32> to vector<8x64xf32>
    %498 = arith.addf %497, %34 : vector<8x64xf32>
    %499 = arith.mulf %494, %498 : vector<8x64xf32>
    %500 = arith.addf %496, %499 : vector<8x64xf32>
    %501 = math.tanh %500 : vector<8x64xf32>
    %cst_135 = arith.constant 1.000000e+00 : f32
    %502 = vector.broadcast %cst_135 : f32 to vector<8x64xf32>
    %503 = arith.subf %502, %495 : vector<8x64xf32>
    %504 = arith.mulf %503, %501 : vector<8x64xf32>
    %505 = arith.mulf %495, %380 : vector<8x64xf32>
    %506 = arith.addf %504, %505 : vector<8x64xf32>
    %507 = arith.truncf %506 : vector<8x64xf32> to vector<8x64xbf16>
    %c0_136 = arith.constant 0 : index
    %c0_137 = arith.constant 0 : index
    %508 = vector.load %arg20[%c0_136, %c0_137] : memref<64x192xbf16, #tpu.memory_space<vmem>>, vector<64x192xbf16>
    %cst_138 = arith.constant dense<0.000000e+00> : vector<8x192xf32>
    %509 = tpu.matmul %507, %508, %cst_138 {dimension_numbers = #tpu.dot_dimension_numbers<[1], [0], [0], [1], [0, 0, 1, 1], [], []>} : vector<8x64xbf16>, vector<64x192xbf16>, vector<8x192xf32> -> vector<8x192xf32>
    %510 = arith.addf %509, %37 : vector<8x192xf32>
    %511 = vector.extract_strided_slice %510 {offsets = [0, 0], sizes = [8, 128], strides = [1, 1]} : vector<8x192xf32> to vector<8x128xf32>
    %512 = arith.addf %511, %428 : vector<8x128xf32>
    %513 = arith.negf %512 : vector<8x128xf32>
    %514 = math.exp %513 : vector<8x128xf32>
    %cst_139 = arith.constant 1.000000e+00 : f32
    %515 = vector.broadcast %cst_139 : f32 to vector<8x128xf32>
    %516 = arith.addf %515, %514 : vector<8x128xf32>
    %517 = arith.divf %515, %516 : vector<8x128xf32>
    %518 = vector.extract_strided_slice %517 {offsets = [0, 0], sizes = [8, 64], strides = [1, 1]} : vector<8x128xf32> to vector<8x64xf32>
    %519 = vector.extract_strided_slice %517 {offsets = [0, 64], sizes = [8, 64], strides = [1, 1]} : vector<8x128xf32> to vector<8x64xf32>
    %520 = vector.extract_strided_slice %510 {offsets = [0, 128], sizes = [8, 64], strides = [1, 1]} : vector<8x192xf32> to vector<8x64xf32>
    %521 = arith.addf %430, %40 : vector<8x64xf32>
    %522 = arith.mulf %518, %521 : vector<8x64xf32>
    %523 = arith.addf %520, %522 : vector<8x64xf32>
    %524 = math.tanh %523 : vector<8x64xf32>
    %cst_140 = arith.constant 1.000000e+00 : f32
    %525 = vector.broadcast %cst_140 : f32 to vector<8x64xf32>
    %526 = arith.subf %525, %519 : vector<8x64xf32>
    %527 = arith.mulf %526, %524 : vector<8x64xf32>
    %528 = arith.mulf %519, %403 : vector<8x64xf32>
    %529 = arith.addf %527, %528 : vector<8x64xf32>
    %530 = arith.mulf %465, %465 : vector<8x64xf32>
    %531 = tpu.reciprocal %530 {approx = true} : vector<8x64xf32> -> vector<8x64xf32>
    %532 = math.log %465 : vector<8x64xf32>
    %533 = math.log %464 : vector<8x64xf32>
    %534 = arith.subf %532, %533 : vector<8x64xf32>
    %cst_141 = arith.constant 2.000000e+00 : f32
    %535 = vector.broadcast %cst_141 : f32 to vector<8x64xf32>
    %536 = arith.mulf %535, %534 : vector<8x64xf32>
    %537 = arith.mulf %464, %464 : vector<8x64xf32>
    %538 = arith.subf %447, %448 : vector<8x64xf32>
    %539 = arith.mulf %538, %538 : vector<8x64xf32>
    %540 = arith.addf %537, %539 : vector<8x64xf32>
    %541 = arith.mulf %540, %531 : vector<8x64xf32>
    %542 = arith.addf %536, %541 : vector<8x64xf32>
    %cst_142 = arith.constant 1.000000e+00 : f32
    %543 = vector.broadcast %cst_142 : f32 to vector<8x64xf32>
    %544 = arith.subf %542, %543 : vector<8x64xf32>
    %cst_143 = arith.constant 5.000000e-01 : f32
    %545 = vector.broadcast %cst_143 : f32 to vector<8x64xf32>
    %546 = arith.mulf %545, %544 : vector<8x64xf32>
    %547 = arith.addf %421, %546 : vector<8x64xf32>
    %548 = tpu.concatenate %529, %506 in 1 : vector<8x64xf32>, vector<8x64xf32> -> vector<8x128xf32>
    %549 = arith.truncf %548 : vector<8x128xf32> to vector<8x128xbf16>
    %c0_144 = arith.constant 0 : index
    %c0_145 = arith.constant 0 : index
    %550 = vector.load %arg10[%c0_144, %c0_145] : memref<128x576xbf16, #tpu.memory_space<vmem>>, vector<128x576xbf16>
    %cst_146 = arith.constant dense<0.000000e+00> : vector<8x576xf32>
    %551 = tpu.matmul %549, %550, %cst_146 {dimension_numbers = #tpu.dot_dimension_numbers<[1], [0], [0], [1], [0, 0, 1, 1], [], []>} : vector<8x128xbf16>, vector<128x576xbf16>, vector<8x576xf32> -> vector<8x576xf32>
    %552 = vector.extract_strided_slice %551 {offsets = [0, 0], sizes = [8, 64], strides = [1, 1]} : vector<8x576xf32> to vector<8x64xf32>
    %553 = vector.extract_strided_slice %551 {offsets = [0, 64], sizes = [8, 64], strides = [1, 1]} : vector<8x576xf32> to vector<8x64xf32>
    %554 = vector.extract_strided_slice %551 {offsets = [0, 128], sizes = [8, 128], strides = [1, 1]} : vector<8x576xf32> to vector<8x128xf32>
    %555 = vector.extract_strided_slice %551 {offsets = [0, 256], sizes = [8, 64], strides = [1, 1]} : vector<8x576xf32> to vector<8x64xf32>
    %556 = vector.extract_strided_slice %551 {offsets = [0, 320], sizes = [8, 64], strides = [1, 1]} : vector<8x576xf32> to vector<8x64xf32>
    %557 = vector.extract_strided_slice %551 {offsets = [0, 384], sizes = [8, 192], strides = [1, 1]} : vector<8x576xf32> to vector<8x192xf32>
    %558 = vector.extract_strided_slice %12 {offsets = [32, 0], sizes = [8, 256], strides = [1, 1]} : vector<56x256xf32> to vector<8x256xf32>
    %559 = vector.extract_strided_slice %558 {offsets = [0, 0], sizes = [8, 192], strides = [1, 1]} : vector<8x256xf32> to vector<8x192xf32>
    %560 = vector.extract_strided_slice %558 {offsets = [0, 192], sizes = [8, 64], strides = [1, 1]} : vector<8x256xf32> to vector<8x64xf32>
    %561 = arith.addf %560, %552 : vector<8x64xf32>
    %562 = arith.addf %561, %16 : vector<8x64xf32>
    %cst_147 = arith.constant 0.000000e+00 : f32
    %563 = vector.broadcast %cst_147 : f32 to vector<8x64xf32>
    %564 = arith.maximumf %562, %563 : vector<8x64xf32>
    %565 = arith.addf %553, %19 : vector<8x64xf32>
    %cst_148 = arith.constant 0.000000e+00 : f32
    %566 = vector.broadcast %cst_148 : f32 to vector<8x64xf32>
    %567 = arith.maximumf %565, %566 : vector<8x64xf32>
    %568 = tpu.concatenate %564, %567 in 1 : vector<8x64xf32>, vector<8x64xf32> -> vector<8x128xf32>
    %569 = arith.truncf %568 : vector<8x128xf32> to vector<8x128xbf16>
    %c0_149 = arith.constant 0 : index
    %c0_150 = arith.constant 0 : index
    %570 = vector.load %arg14[%c0_149, %c0_150] : memref<128x256xbf16, #tpu.memory_space<vmem>>, vector<128x256xbf16>
    %cst_151 = arith.constant dense<0.000000e+00> : vector<8x256xf32>
    %571 = tpu.matmul %569, %570, %cst_151 {dimension_numbers = #tpu.dot_dimension_numbers<[1], [0], [0], [1], [0, 0, 1, 1], [], []>} : vector<8x128xbf16>, vector<128x256xbf16>, vector<8x256xf32> -> vector<8x256xf32>
    %572 = arith.addf %571, %28 : vector<8x256xf32>
    %573 = vector.extract_strided_slice %572 {offsets = [0, 0], sizes = [8, 64], strides = [1, 1]} : vector<8x256xf32> to vector<8x64xf32>
    %574 = vector.extract_strided_slice %572 {offsets = [0, 64], sizes = [8, 64], strides = [1, 1]} : vector<8x256xf32> to vector<8x64xf32>
    %575 = vector.extract_strided_slice %572 {offsets = [0, 128], sizes = [8, 128], strides = [1, 1]} : vector<8x256xf32> to vector<8x128xf32>
    %cst_152 = arith.constant 0.000000e+00 : f32
    %576 = vector.broadcast %cst_152 : f32 to vector<8x128xf32>
    %577 = arith.maximumf %575, %576 : vector<8x128xf32>
    %578 = vector.broadcast %cst_152 : f32 to vector<8x128xf32>
    %579 = arith.subf %575, %578 : vector<8x128xf32>
    %580 = arith.cmpf one, %579, %579 : vector<8x128xf32>
    %581 = vector.broadcast %cst_152 : f32 to vector<8x128xf32>
    %582 = arith.addf %575, %581 : vector<8x128xf32>
    %583 = math.absf %579 : vector<8x128xf32>
    %cst_153 = arith.constant 0.000000e+00 : f32
    %584 = vector.broadcast %cst_153 : f32 to vector<8x128xf32>
    %585 = arith.subf %584, %583 : vector<8x128xf32>
    %586 = math.exp %585 : vector<8x128xf32>
    %587 = math.log1p %586 : vector<8x128xf32>
    %588 = arith.addf %577, %587 : vector<8x128xf32>
    %589 = arith.select %580, %582, %588 : vector<8x128xi1>, vector<8x128xf32>
    %590 = vector.extract_strided_slice %589 {offsets = [0, 0], sizes = [8, 64], strides = [1, 1]} : vector<8x128xf32> to vector<8x64xf32>
    %591 = vector.extract_strided_slice %589 {offsets = [0, 64], sizes = [8, 64], strides = [1, 1]} : vector<8x128xf32> to vector<8x64xf32>
    %592 = vector.extract_strided_slice %13 {offsets = [32, 0], sizes = [8, 64], strides = [1, 1]} : vector<56x64xf32> to vector<8x64xf32>
    %593 = arith.mulf %592, %590 : vector<8x64xf32>
    %594 = arith.addf %573, %593 : vector<8x64xf32>
    %595 = arith.truncf %594 : vector<8x64xf32> to vector<8x64xbf16>
    %c0_154 = arith.constant 0 : index
    %c0_155 = arith.constant 0 : index
    %596 = vector.load %arg7[%c0_154, %c0_155] : memref<64x64xbf16, #tpu.memory_space<vmem>>, vector<64x64xbf16>
    %cst_156 = arith.constant dense<0.000000e+00> : vector<8x64xf32>
    %597 = tpu.matmul %595, %596, %cst_156 {dimension_numbers = #tpu.dot_dimension_numbers<[1], [0], [0], [1], [0, 0, 1, 1], [], []>} : vector<8x64xbf16>, vector<64x64xbf16>, vector<8x64xf32> -> vector<8x64xf32>
    %598 = arith.addf %597, %25 : vector<8x64xf32>
    %cst_157 = arith.constant 0.000000e+00 : f32
    %599 = vector.broadcast %cst_157 : f32 to vector<8x64xf32>
    %600 = arith.maximumf %598, %599 : vector<8x64xf32>
    %601 = arith.truncf %600 : vector<8x64xf32> to vector<8x64xbf16>
    %c0_158 = arith.constant 0 : index
    %c0_159 = arith.constant 0 : index
    %602 = vector.load %arg9[%c0_158, %c0_159] : memref<64x256xbf16, #tpu.memory_space<vmem>>, vector<64x256xbf16>
    %cst_160 = arith.constant dense<0.000000e+00> : vector<8x256xf32>
    %603 = tpu.matmul %601, %602, %cst_160 {dimension_numbers = #tpu.dot_dimension_numbers<[1], [0], [0], [1], [0, 0, 1, 1], [], []>} : vector<8x64xbf16>, vector<64x256xbf16>, vector<8x256xf32> -> vector<8x256xf32>
    %604 = vector.extract_strided_slice %603 {offsets = [0, 0], sizes = [8, 192], strides = [1, 1]} : vector<8x256xf32> to vector<8x192xf32>
    %605 = vector.extract_strided_slice %603 {offsets = [0, 192], sizes = [8, 64], strides = [1, 1]} : vector<8x256xf32> to vector<8x64xf32>
    %606 = arith.addf %605, %555 : vector<8x64xf32>
    %607 = arith.addf %606, %22 : vector<8x64xf32>
    %cst_161 = arith.constant 0.000000e+00 : f32
    %608 = vector.broadcast %cst_161 : f32 to vector<8x64xf32>
    %609 = arith.maximumf %607, %608 : vector<8x64xf32>
    %610 = arith.addf %559, %604 : vector<8x192xf32>
    %611 = arith.addf %610, %31 : vector<8x192xf32>
    %612 = vector.extract_strided_slice %611 {offsets = [0, 0], sizes = [8, 128], strides = [1, 1]} : vector<8x192xf32> to vector<8x128xf32>
    %613 = vector.extract_strided_slice %557 {offsets = [0, 0], sizes = [8, 128], strides = [1, 1]} : vector<8x192xf32> to vector<8x128xf32>
    %614 = arith.addf %612, %613 : vector<8x128xf32>
    %615 = arith.negf %614 : vector<8x128xf32>
    %616 = math.exp %615 : vector<8x128xf32>
    %cst_162 = arith.constant 1.000000e+00 : f32
    %617 = vector.broadcast %cst_162 : f32 to vector<8x128xf32>
    %618 = arith.addf %617, %616 : vector<8x128xf32>
    %619 = arith.divf %617, %618 : vector<8x128xf32>
    %620 = vector.extract_strided_slice %619 {offsets = [0, 0], sizes = [8, 64], strides = [1, 1]} : vector<8x128xf32> to vector<8x64xf32>
    %621 = vector.extract_strided_slice %619 {offsets = [0, 64], sizes = [8, 64], strides = [1, 1]} : vector<8x128xf32> to vector<8x64xf32>
    %622 = vector.extract_strided_slice %611 {offsets = [0, 128], sizes = [8, 64], strides = [1, 1]} : vector<8x192xf32> to vector<8x64xf32>
    %623 = vector.extract_strided_slice %557 {offsets = [0, 128], sizes = [8, 64], strides = [1, 1]} : vector<8x192xf32> to vector<8x64xf32>
    %624 = arith.addf %623, %34 : vector<8x64xf32>
    %625 = arith.mulf %620, %624 : vector<8x64xf32>
    %626 = arith.addf %622, %625 : vector<8x64xf32>
    %627 = math.tanh %626 : vector<8x64xf32>
    %cst_163 = arith.constant 1.000000e+00 : f32
    %628 = vector.broadcast %cst_163 : f32 to vector<8x64xf32>
    %629 = arith.subf %628, %621 : vector<8x64xf32>
    %630 = arith.mulf %629, %627 : vector<8x64xf32>
    %631 = arith.mulf %621, %506 : vector<8x64xf32>
    %632 = arith.addf %630, %631 : vector<8x64xf32>
    %633 = arith.truncf %632 : vector<8x64xf32> to vector<8x64xbf16>
    %c0_164 = arith.constant 0 : index
    %c0_165 = arith.constant 0 : index
    %634 = vector.load %arg20[%c0_164, %c0_165] : memref<64x192xbf16, #tpu.memory_space<vmem>>, vector<64x192xbf16>
    %cst_166 = arith.constant dense<0.000000e+00> : vector<8x192xf32>
    %635 = tpu.matmul %633, %634, %cst_166 {dimension_numbers = #tpu.dot_dimension_numbers<[1], [0], [0], [1], [0, 0, 1, 1], [], []>} : vector<8x64xbf16>, vector<64x192xbf16>, vector<8x192xf32> -> vector<8x192xf32>
    %636 = arith.addf %635, %37 : vector<8x192xf32>
    %637 = vector.extract_strided_slice %636 {offsets = [0, 0], sizes = [8, 128], strides = [1, 1]} : vector<8x192xf32> to vector<8x128xf32>
    %638 = arith.addf %637, %554 : vector<8x128xf32>
    %639 = arith.negf %638 : vector<8x128xf32>
    %640 = math.exp %639 : vector<8x128xf32>
    %cst_167 = arith.constant 1.000000e+00 : f32
    %641 = vector.broadcast %cst_167 : f32 to vector<8x128xf32>
    %642 = arith.addf %641, %640 : vector<8x128xf32>
    %643 = arith.divf %641, %642 : vector<8x128xf32>
    %644 = vector.extract_strided_slice %643 {offsets = [0, 0], sizes = [8, 64], strides = [1, 1]} : vector<8x128xf32> to vector<8x64xf32>
    %645 = vector.extract_strided_slice %643 {offsets = [0, 64], sizes = [8, 64], strides = [1, 1]} : vector<8x128xf32> to vector<8x64xf32>
    %646 = vector.extract_strided_slice %636 {offsets = [0, 128], sizes = [8, 64], strides = [1, 1]} : vector<8x192xf32> to vector<8x64xf32>
    %647 = arith.addf %556, %40 : vector<8x64xf32>
    %648 = arith.mulf %644, %647 : vector<8x64xf32>
    %649 = arith.addf %646, %648 : vector<8x64xf32>
    %650 = math.tanh %649 : vector<8x64xf32>
    %cst_168 = arith.constant 1.000000e+00 : f32
    %651 = vector.broadcast %cst_168 : f32 to vector<8x64xf32>
    %652 = arith.subf %651, %645 : vector<8x64xf32>
    %653 = arith.mulf %652, %650 : vector<8x64xf32>
    %654 = arith.mulf %645, %529 : vector<8x64xf32>
    %655 = arith.addf %653, %654 : vector<8x64xf32>
    %656 = arith.mulf %591, %591 : vector<8x64xf32>
    %657 = tpu.reciprocal %656 {approx = true} : vector<8x64xf32> -> vector<8x64xf32>
    %658 = math.log %591 : vector<8x64xf32>
    %659 = math.log %590 : vector<8x64xf32>
    %660 = arith.subf %658, %659 : vector<8x64xf32>
    %cst_169 = arith.constant 2.000000e+00 : f32
    %661 = vector.broadcast %cst_169 : f32 to vector<8x64xf32>
    %662 = arith.mulf %661, %660 : vector<8x64xf32>
    %663 = arith.mulf %590, %590 : vector<8x64xf32>
    %664 = arith.subf %573, %574 : vector<8x64xf32>
    %665 = arith.mulf %664, %664 : vector<8x64xf32>
    %666 = arith.addf %663, %665 : vector<8x64xf32>
    %667 = arith.mulf %666, %657 : vector<8x64xf32>
    %668 = arith.addf %662, %667 : vector<8x64xf32>
    %cst_170 = arith.constant 1.000000e+00 : f32
    %669 = vector.broadcast %cst_170 : f32 to vector<8x64xf32>
    %670 = arith.subf %668, %669 : vector<8x64xf32>
    %cst_171 = arith.constant 5.000000e-01 : f32
    %671 = vector.broadcast %cst_171 : f32 to vector<8x64xf32>
    %672 = arith.mulf %671, %670 : vector<8x64xf32>
    %673 = arith.addf %547, %672 : vector<8x64xf32>
    %674 = tpu.concatenate %655, %632 in 1 : vector<8x64xf32>, vector<8x64xf32> -> vector<8x128xf32>
    %675 = arith.truncf %674 : vector<8x128xf32> to vector<8x128xbf16>
    %c0_172 = arith.constant 0 : index
    %c0_173 = arith.constant 0 : index
    %676 = vector.load %arg10[%c0_172, %c0_173] : memref<128x576xbf16, #tpu.memory_space<vmem>>, vector<128x576xbf16>
    %cst_174 = arith.constant dense<0.000000e+00> : vector<8x576xf32>
    %677 = tpu.matmul %675, %676, %cst_174 {dimension_numbers = #tpu.dot_dimension_numbers<[1], [0], [0], [1], [0, 0, 1, 1], [], []>} : vector<8x128xbf16>, vector<128x576xbf16>, vector<8x576xf32> -> vector<8x576xf32>
    %678 = vector.extract_strided_slice %677 {offsets = [0, 0], sizes = [8, 64], strides = [1, 1]} : vector<8x576xf32> to vector<8x64xf32>
    %679 = vector.extract_strided_slice %677 {offsets = [0, 64], sizes = [8, 64], strides = [1, 1]} : vector<8x576xf32> to vector<8x64xf32>
    %680 = vector.extract_strided_slice %677 {offsets = [0, 128], sizes = [8, 128], strides = [1, 1]} : vector<8x576xf32> to vector<8x128xf32>
    %681 = vector.extract_strided_slice %677 {offsets = [0, 256], sizes = [8, 64], strides = [1, 1]} : vector<8x576xf32> to vector<8x64xf32>
    %682 = vector.extract_strided_slice %677 {offsets = [0, 320], sizes = [8, 64], strides = [1, 1]} : vector<8x576xf32> to vector<8x64xf32>
    %683 = vector.extract_strided_slice %677 {offsets = [0, 384], sizes = [8, 192], strides = [1, 1]} : vector<8x576xf32> to vector<8x192xf32>
    %684 = vector.extract_strided_slice %12 {offsets = [40, 0], sizes = [8, 256], strides = [1, 1]} : vector<56x256xf32> to vector<8x256xf32>
    %685 = vector.extract_strided_slice %684 {offsets = [0, 0], sizes = [8, 192], strides = [1, 1]} : vector<8x256xf32> to vector<8x192xf32>
    %686 = vector.extract_strided_slice %684 {offsets = [0, 192], sizes = [8, 64], strides = [1, 1]} : vector<8x256xf32> to vector<8x64xf32>
    %687 = arith.addf %686, %678 : vector<8x64xf32>
    %688 = arith.addf %687, %16 : vector<8x64xf32>
    %cst_175 = arith.constant 0.000000e+00 : f32
    %689 = vector.broadcast %cst_175 : f32 to vector<8x64xf32>
    %690 = arith.maximumf %688, %689 : vector<8x64xf32>
    %691 = arith.addf %679, %19 : vector<8x64xf32>
    %cst_176 = arith.constant 0.000000e+00 : f32
    %692 = vector.broadcast %cst_176 : f32 to vector<8x64xf32>
    %693 = arith.maximumf %691, %692 : vector<8x64xf32>
    %694 = tpu.concatenate %690, %693 in 1 : vector<8x64xf32>, vector<8x64xf32> -> vector<8x128xf32>
    %695 = arith.truncf %694 : vector<8x128xf32> to vector<8x128xbf16>
    %c0_177 = arith.constant 0 : index
    %c0_178 = arith.constant 0 : index
    %696 = vector.load %arg14[%c0_177, %c0_178] : memref<128x256xbf16, #tpu.memory_space<vmem>>, vector<128x256xbf16>
    %cst_179 = arith.constant dense<0.000000e+00> : vector<8x256xf32>
    %697 = tpu.matmul %695, %696, %cst_179 {dimension_numbers = #tpu.dot_dimension_numbers<[1], [0], [0], [1], [0, 0, 1, 1], [], []>} : vector<8x128xbf16>, vector<128x256xbf16>, vector<8x256xf32> -> vector<8x256xf32>
    %698 = arith.addf %697, %28 : vector<8x256xf32>
    %699 = vector.extract_strided_slice %698 {offsets = [0, 0], sizes = [8, 64], strides = [1, 1]} : vector<8x256xf32> to vector<8x64xf32>
    %700 = vector.extract_strided_slice %698 {offsets = [0, 64], sizes = [8, 64], strides = [1, 1]} : vector<8x256xf32> to vector<8x64xf32>
    %701 = vector.extract_strided_slice %698 {offsets = [0, 128], sizes = [8, 128], strides = [1, 1]} : vector<8x256xf32> to vector<8x128xf32>
    %cst_180 = arith.constant 0.000000e+00 : f32
    %702 = vector.broadcast %cst_180 : f32 to vector<8x128xf32>
    %703 = arith.maximumf %701, %702 : vector<8x128xf32>
    %704 = vector.broadcast %cst_180 : f32 to vector<8x128xf32>
    %705 = arith.subf %701, %704 : vector<8x128xf32>
    %706 = arith.cmpf one, %705, %705 : vector<8x128xf32>
    %707 = vector.broadcast %cst_180 : f32 to vector<8x128xf32>
    %708 = arith.addf %701, %707 : vector<8x128xf32>
    %709 = math.absf %705 : vector<8x128xf32>
    %cst_181 = arith.constant 0.000000e+00 : f32
    %710 = vector.broadcast %cst_181 : f32 to vector<8x128xf32>
    %711 = arith.subf %710, %709 : vector<8x128xf32>
    %712 = math.exp %711 : vector<8x128xf32>
    %713 = math.log1p %712 : vector<8x128xf32>
    %714 = arith.addf %703, %713 : vector<8x128xf32>
    %715 = arith.select %706, %708, %714 : vector<8x128xi1>, vector<8x128xf32>
    %716 = vector.extract_strided_slice %715 {offsets = [0, 0], sizes = [8, 64], strides = [1, 1]} : vector<8x128xf32> to vector<8x64xf32>
    %717 = vector.extract_strided_slice %715 {offsets = [0, 64], sizes = [8, 64], strides = [1, 1]} : vector<8x128xf32> to vector<8x64xf32>
    %718 = vector.extract_strided_slice %13 {offsets = [40, 0], sizes = [8, 64], strides = [1, 1]} : vector<56x64xf32> to vector<8x64xf32>
    %719 = arith.mulf %718, %716 : vector<8x64xf32>
    %720 = arith.addf %699, %719 : vector<8x64xf32>
    %721 = arith.truncf %720 : vector<8x64xf32> to vector<8x64xbf16>
    %c0_182 = arith.constant 0 : index
    %c0_183 = arith.constant 0 : index
    %722 = vector.load %arg7[%c0_182, %c0_183] : memref<64x64xbf16, #tpu.memory_space<vmem>>, vector<64x64xbf16>
    %cst_184 = arith.constant dense<0.000000e+00> : vector<8x64xf32>
    %723 = tpu.matmul %721, %722, %cst_184 {dimension_numbers = #tpu.dot_dimension_numbers<[1], [0], [0], [1], [0, 0, 1, 1], [], []>} : vector<8x64xbf16>, vector<64x64xbf16>, vector<8x64xf32> -> vector<8x64xf32>
    %724 = arith.addf %723, %25 : vector<8x64xf32>
    %cst_185 = arith.constant 0.000000e+00 : f32
    %725 = vector.broadcast %cst_185 : f32 to vector<8x64xf32>
    %726 = arith.maximumf %724, %725 : vector<8x64xf32>
    %727 = arith.truncf %726 : vector<8x64xf32> to vector<8x64xbf16>
    %c0_186 = arith.constant 0 : index
    %c0_187 = arith.constant 0 : index
    %728 = vector.load %arg9[%c0_186, %c0_187] : memref<64x256xbf16, #tpu.memory_space<vmem>>, vector<64x256xbf16>
    %cst_188 = arith.constant dense<0.000000e+00> : vector<8x256xf32>
    %729 = tpu.matmul %727, %728, %cst_188 {dimension_numbers = #tpu.dot_dimension_numbers<[1], [0], [0], [1], [0, 0, 1, 1], [], []>} : vector<8x64xbf16>, vector<64x256xbf16>, vector<8x256xf32> -> vector<8x256xf32>
    %730 = vector.extract_strided_slice %729 {offsets = [0, 0], sizes = [8, 192], strides = [1, 1]} : vector<8x256xf32> to vector<8x192xf32>
    %731 = vector.extract_strided_slice %729 {offsets = [0, 192], sizes = [8, 64], strides = [1, 1]} : vector<8x256xf32> to vector<8x64xf32>
    %732 = arith.addf %731, %681 : vector<8x64xf32>
    %733 = arith.addf %732, %22 : vector<8x64xf32>
    %cst_189 = arith.constant 0.000000e+00 : f32
    %734 = vector.broadcast %cst_189 : f32 to vector<8x64xf32>
    %735 = arith.maximumf %733, %734 : vector<8x64xf32>
    %736 = arith.addf %685, %730 : vector<8x192xf32>
    %737 = arith.addf %736, %31 : vector<8x192xf32>
    %738 = vector.extract_strided_slice %737 {offsets = [0, 0], sizes = [8, 128], strides = [1, 1]} : vector<8x192xf32> to vector<8x128xf32>
    %739 = vector.extract_strided_slice %683 {offsets = [0, 0], sizes = [8, 128], strides = [1, 1]} : vector<8x192xf32> to vector<8x128xf32>
    %740 = arith.addf %738, %739 : vector<8x128xf32>
    %741 = arith.negf %740 : vector<8x128xf32>
    %742 = math.exp %741 : vector<8x128xf32>
    %cst_190 = arith.constant 1.000000e+00 : f32
    %743 = vector.broadcast %cst_190 : f32 to vector<8x128xf32>
    %744 = arith.addf %743, %742 : vector<8x128xf32>
    %745 = arith.divf %743, %744 : vector<8x128xf32>
    %746 = vector.extract_strided_slice %745 {offsets = [0, 0], sizes = [8, 64], strides = [1, 1]} : vector<8x128xf32> to vector<8x64xf32>
    %747 = vector.extract_strided_slice %745 {offsets = [0, 64], sizes = [8, 64], strides = [1, 1]} : vector<8x128xf32> to vector<8x64xf32>
    %748 = vector.extract_strided_slice %737 {offsets = [0, 128], sizes = [8, 64], strides = [1, 1]} : vector<8x192xf32> to vector<8x64xf32>
    %749 = vector.extract_strided_slice %683 {offsets = [0, 128], sizes = [8, 64], strides = [1, 1]} : vector<8x192xf32> to vector<8x64xf32>
    %750 = arith.addf %749, %34 : vector<8x64xf32>
    %751 = arith.mulf %746, %750 : vector<8x64xf32>
    %752 = arith.addf %748, %751 : vector<8x64xf32>
    %753 = math.tanh %752 : vector<8x64xf32>
    %cst_191 = arith.constant 1.000000e+00 : f32
    %754 = vector.broadcast %cst_191 : f32 to vector<8x64xf32>
    %755 = arith.subf %754, %747 : vector<8x64xf32>
    %756 = arith.mulf %755, %753 : vector<8x64xf32>
    %757 = arith.mulf %747, %632 : vector<8x64xf32>
    %758 = arith.addf %756, %757 : vector<8x64xf32>
    %759 = arith.truncf %758 : vector<8x64xf32> to vector<8x64xbf16>
    %c0_192 = arith.constant 0 : index
    %c0_193 = arith.constant 0 : index
    %760 = vector.load %arg20[%c0_192, %c0_193] : memref<64x192xbf16, #tpu.memory_space<vmem>>, vector<64x192xbf16>
    %cst_194 = arith.constant dense<0.000000e+00> : vector<8x192xf32>
    %761 = tpu.matmul %759, %760, %cst_194 {dimension_numbers = #tpu.dot_dimension_numbers<[1], [0], [0], [1], [0, 0, 1, 1], [], []>} : vector<8x64xbf16>, vector<64x192xbf16>, vector<8x192xf32> -> vector<8x192xf32>
    %762 = arith.addf %761, %37 : vector<8x192xf32>
    %763 = vector.extract_strided_slice %762 {offsets = [0, 0], sizes = [8, 128], strides = [1, 1]} : vector<8x192xf32> to vector<8x128xf32>
    %764 = arith.addf %763, %680 : vector<8x128xf32>
    %765 = arith.negf %764 : vector<8x128xf32>
    %766 = math.exp %765 : vector<8x128xf32>
    %cst_195 = arith.constant 1.000000e+00 : f32
    %767 = vector.broadcast %cst_195 : f32 to vector<8x128xf32>
    %768 = arith.addf %767, %766 : vector<8x128xf32>
    %769 = arith.divf %767, %768 : vector<8x128xf32>
    %770 = vector.extract_strided_slice %769 {offsets = [0, 0], sizes = [8, 64], strides = [1, 1]} : vector<8x128xf32> to vector<8x64xf32>
    %771 = vector.extract_strided_slice %769 {offsets = [0, 64], sizes = [8, 64], strides = [1, 1]} : vector<8x128xf32> to vector<8x64xf32>
    %772 = vector.extract_strided_slice %762 {offsets = [0, 128], sizes = [8, 64], strides = [1, 1]} : vector<8x192xf32> to vector<8x64xf32>
    %773 = arith.addf %682, %40 : vector<8x64xf32>
    %774 = arith.mulf %770, %773 : vector<8x64xf32>
    %775 = arith.addf %772, %774 : vector<8x64xf32>
    %776 = math.tanh %775 : vector<8x64xf32>
    %cst_196 = arith.constant 1.000000e+00 : f32
    %777 = vector.broadcast %cst_196 : f32 to vector<8x64xf32>
    %778 = arith.subf %777, %771 : vector<8x64xf32>
    %779 = arith.mulf %778, %776 : vector<8x64xf32>
    %780 = arith.mulf %771, %655 : vector<8x64xf32>
    %781 = arith.addf %779, %780 : vector<8x64xf32>
    %782 = arith.mulf %717, %717 : vector<8x64xf32>
    %783 = tpu.reciprocal %782 {approx = true} : vector<8x64xf32> -> vector<8x64xf32>
    %784 = math.log %717 : vector<8x64xf32>
    %785 = math.log %716 : vector<8x64xf32>
    %786 = arith.subf %784, %785 : vector<8x64xf32>
    %cst_197 = arith.constant 2.000000e+00 : f32
    %787 = vector.broadcast %cst_197 : f32 to vector<8x64xf32>
    %788 = arith.mulf %787, %786 : vector<8x64xf32>
    %789 = arith.mulf %716, %716 : vector<8x64xf32>
    %790 = arith.subf %699, %700 : vector<8x64xf32>
    %791 = arith.mulf %790, %790 : vector<8x64xf32>
    %792 = arith.addf %789, %791 : vector<8x64xf32>
    %793 = arith.mulf %792, %783 : vector<8x64xf32>
    %794 = arith.addf %788, %793 : vector<8x64xf32>
    %cst_198 = arith.constant 1.000000e+00 : f32
    %795 = vector.broadcast %cst_198 : f32 to vector<8x64xf32>
    %796 = arith.subf %794, %795 : vector<8x64xf32>
    %cst_199 = arith.constant 5.000000e-01 : f32
    %797 = vector.broadcast %cst_199 : f32 to vector<8x64xf32>
    %798 = arith.mulf %797, %796 : vector<8x64xf32>
    %799 = arith.addf %673, %798 : vector<8x64xf32>
    %800 = tpu.concatenate %781, %758 in 1 : vector<8x64xf32>, vector<8x64xf32> -> vector<8x128xf32>
    %801 = arith.truncf %800 : vector<8x128xf32> to vector<8x128xbf16>
    %c0_200 = arith.constant 0 : index
    %c0_201 = arith.constant 0 : index
    %802 = vector.load %arg10[%c0_200, %c0_201] : memref<128x576xbf16, #tpu.memory_space<vmem>>, vector<128x576xbf16>
    %cst_202 = arith.constant dense<0.000000e+00> : vector<8x576xf32>
    %803 = tpu.matmul %801, %802, %cst_202 {dimension_numbers = #tpu.dot_dimension_numbers<[1], [0], [0], [1], [0, 0, 1, 1], [], []>} : vector<8x128xbf16>, vector<128x576xbf16>, vector<8x576xf32> -> vector<8x576xf32>
    %804 = vector.extract_strided_slice %803 {offsets = [0, 0], sizes = [8, 64], strides = [1, 1]} : vector<8x576xf32> to vector<8x64xf32>
    %805 = vector.extract_strided_slice %803 {offsets = [0, 64], sizes = [8, 64], strides = [1, 1]} : vector<8x576xf32> to vector<8x64xf32>
    %806 = vector.extract_strided_slice %803 {offsets = [0, 256], sizes = [8, 64], strides = [1, 1]} : vector<8x576xf32> to vector<8x64xf32>
    %807 = vector.extract_strided_slice %12 {offsets = [48, 0], sizes = [8, 256], strides = [1, 1]} : vector<56x256xf32> to vector<8x256xf32>
    %808 = vector.extract_strided_slice %807 {offsets = [0, 192], sizes = [8, 64], strides = [1, 1]} : vector<8x256xf32> to vector<8x64xf32>
    %809 = arith.addf %808, %804 : vector<8x64xf32>
    %810 = arith.addf %809, %16 : vector<8x64xf32>
    %cst_203 = arith.constant 0.000000e+00 : f32
    %811 = vector.broadcast %cst_203 : f32 to vector<8x64xf32>
    %812 = arith.maximumf %810, %811 : vector<8x64xf32>
    %813 = arith.addf %805, %19 : vector<8x64xf32>
    %cst_204 = arith.constant 0.000000e+00 : f32
    %814 = vector.broadcast %cst_204 : f32 to vector<8x64xf32>
    %815 = arith.maximumf %813, %814 : vector<8x64xf32>
    %816 = tpu.concatenate %812, %815 in 1 : vector<8x64xf32>, vector<8x64xf32> -> vector<8x128xf32>
    %817 = arith.truncf %816 : vector<8x128xf32> to vector<8x128xbf16>
    %c0_205 = arith.constant 0 : index
    %c0_206 = arith.constant 0 : index
    %818 = vector.load %arg14[%c0_205, %c0_206] : memref<128x256xbf16, #tpu.memory_space<vmem>>, vector<128x256xbf16>
    %cst_207 = arith.constant dense<0.000000e+00> : vector<8x256xf32>
    %819 = tpu.matmul %817, %818, %cst_207 {dimension_numbers = #tpu.dot_dimension_numbers<[1], [0], [0], [1], [0, 0, 1, 1], [], []>} : vector<8x128xbf16>, vector<128x256xbf16>, vector<8x256xf32> -> vector<8x256xf32>
    %820 = arith.addf %819, %28 : vector<8x256xf32>
    %821 = vector.extract_strided_slice %820 {offsets = [0, 0], sizes = [8, 64], strides = [1, 1]} : vector<8x256xf32> to vector<8x64xf32>
    %822 = vector.extract_strided_slice %820 {offsets = [0, 64], sizes = [8, 64], strides = [1, 1]} : vector<8x256xf32> to vector<8x64xf32>
    %823 = vector.extract_strided_slice %820 {offsets = [0, 128], sizes = [8, 128], strides = [1, 1]} : vector<8x256xf32> to vector<8x128xf32>
    %cst_208 = arith.constant 0.000000e+00 : f32
    %824 = vector.broadcast %cst_208 : f32 to vector<8x128xf32>
    %825 = arith.maximumf %823, %824 : vector<8x128xf32>
    %826 = vector.broadcast %cst_208 : f32 to vector<8x128xf32>
    %827 = arith.subf %823, %826 : vector<8x128xf32>
    %828 = arith.cmpf one, %827, %827 : vector<8x128xf32>
    %829 = vector.broadcast %cst_208 : f32 to vector<8x128xf32>
    %830 = arith.addf %823, %829 : vector<8x128xf32>
    %831 = math.absf %827 : vector<8x128xf32>
    %cst_209 = arith.constant 0.000000e+00 : f32
    %832 = vector.broadcast %cst_209 : f32 to vector<8x128xf32>
    %833 = arith.subf %832, %831 : vector<8x128xf32>
    %834 = math.exp %833 : vector<8x128xf32>
    %835 = math.log1p %834 : vector<8x128xf32>
    %836 = arith.addf %825, %835 : vector<8x128xf32>
    %837 = arith.select %828, %830, %836 : vector<8x128xi1>, vector<8x128xf32>
    %838 = vector.extract_strided_slice %837 {offsets = [0, 0], sizes = [8, 64], strides = [1, 1]} : vector<8x128xf32> to vector<8x64xf32>
    %839 = vector.extract_strided_slice %837 {offsets = [0, 64], sizes = [8, 64], strides = [1, 1]} : vector<8x128xf32> to vector<8x64xf32>
    %840 = vector.extract_strided_slice %13 {offsets = [48, 0], sizes = [8, 64], strides = [1, 1]} : vector<56x64xf32> to vector<8x64xf32>
    %841 = arith.mulf %840, %838 : vector<8x64xf32>
    %842 = arith.addf %821, %841 : vector<8x64xf32>
    %843 = arith.truncf %842 : vector<8x64xf32> to vector<8x64xbf16>
    %c0_210 = arith.constant 0 : index
    %c0_211 = arith.constant 0 : index
    %844 = vector.load %arg7[%c0_210, %c0_211] : memref<64x64xbf16, #tpu.memory_space<vmem>>, vector<64x64xbf16>
    %cst_212 = arith.constant dense<0.000000e+00> : vector<8x64xf32>
    %845 = tpu.matmul %843, %844, %cst_212 {dimension_numbers = #tpu.dot_dimension_numbers<[1], [0], [0], [1], [0, 0, 1, 1], [], []>} : vector<8x64xbf16>, vector<64x64xbf16>, vector<8x64xf32> -> vector<8x64xf32>
    %846 = arith.addf %845, %25 : vector<8x64xf32>
    %cst_213 = arith.constant 0.000000e+00 : f32
    %847 = vector.broadcast %cst_213 : f32 to vector<8x64xf32>
    %848 = arith.maximumf %846, %847 : vector<8x64xf32>
    %849 = arith.truncf %848 : vector<8x64xf32> to vector<8x64xbf16>
    %c0_214 = arith.constant 0 : index
    %c0_215 = arith.constant 0 : index
    %850 = vector.load %arg9[%c0_214, %c0_215] : memref<64x256xbf16, #tpu.memory_space<vmem>>, vector<64x256xbf16>
    %cst_216 = arith.constant dense<0.000000e+00> : vector<8x256xf32>
    %851 = tpu.matmul %849, %850, %cst_216 {dimension_numbers = #tpu.dot_dimension_numbers<[1], [0], [0], [1], [0, 0, 1, 1], [], []>} : vector<8x64xbf16>, vector<64x256xbf16>, vector<8x256xf32> -> vector<8x256xf32>
    %852 = vector.extract_strided_slice %851 {offsets = [0, 192], sizes = [8, 64], strides = [1, 1]} : vector<8x256xf32> to vector<8x64xf32>
    %853 = arith.addf %852, %806 : vector<8x64xf32>
    %854 = arith.addf %853, %22 : vector<8x64xf32>
    %cst_217 = arith.constant 0.000000e+00 : f32
    %855 = vector.broadcast %cst_217 : f32 to vector<8x64xf32>
    %856 = arith.maximumf %854, %855 : vector<8x64xf32>
    %857 = arith.mulf %839, %839 : vector<8x64xf32>
    %858 = tpu.reciprocal %857 {approx = true} : vector<8x64xf32> -> vector<8x64xf32>
    %859 = math.log %839 : vector<8x64xf32>
    %860 = math.log %838 : vector<8x64xf32>
    %861 = arith.subf %859, %860 : vector<8x64xf32>
    %cst_218 = arith.constant 2.000000e+00 : f32
    %862 = vector.broadcast %cst_218 : f32 to vector<8x64xf32>
    %863 = arith.mulf %862, %861 : vector<8x64xf32>
    %864 = arith.mulf %838, %838 : vector<8x64xf32>
    %865 = arith.subf %821, %822 : vector<8x64xf32>
    %866 = arith.mulf %865, %865 : vector<8x64xf32>
    %867 = arith.addf %864, %866 : vector<8x64xf32>
    %868 = arith.mulf %867, %858 : vector<8x64xf32>
    %869 = arith.addf %863, %868 : vector<8x64xf32>
    %cst_219 = arith.constant 1.000000e+00 : f32
    %870 = vector.broadcast %cst_219 : f32 to vector<8x64xf32>
    %871 = arith.subf %869, %870 : vector<8x64xf32>
    %cst_220 = arith.constant 5.000000e-01 : f32
    %872 = vector.broadcast %cst_220 : f32 to vector<8x64xf32>
    %873 = arith.mulf %872, %871 : vector<8x64xf32>
    %874 = arith.addf %799, %873 : vector<8x64xf32>
    %c0_221 = arith.constant 0 : index
    %c0_222 = arith.constant 0 : index
    %875 = vector.load %arg3[%c0_221, %c0_222] : memref<56x1xf32, #tpu.memory_space<vmem>>, vector<8x1xf32>
    %876 = vector.broadcast %875 : vector<8x1xf32> to vector<8x64xf32>
    %877 = arith.mulf %874, %876 : vector<8x64xf32>
    %878 = vector.shape_cast %877 : vector<8x64xf32> to vector<1x8x64xf32>
    %cst_223 = arith.constant dense<0.000000e+00> : vector<1xf32>
    %879 = vector.multi_reduction <add>, %878, %cst_223 [1, 2] : vector<1x8x64xf32> to vector<1xf32>
    %880 = vector.shape_cast %879 : vector<1xf32> to vector<1x1x1xf32>
    %881 = vector.extract %880[0, 0, 0] : f32 from vector<1x1x1xf32>
    %882 = vector.broadcast %881 : f32 to vector<1x1xf32>
    %c0_224 = arith.constant 0 : index
    %c0_225 = arith.constant 0 : index
    %883 = vector.load %arg23[%c0_224, %c0_225] : memref<1x1xf32, #tpu.memory_space<vmem>>, vector<1x1xf32>
    tpu.vector_store %arg23[%c0_224, %c0_225], %882 {strides = array<i32>} : memref<1x1xf32, #tpu.memory_space<vmem>>, vector<1x1xf32>,
    %884 = tpu.concatenate %105, %231, %357, %483, %609, %735, %856 in 0 : vector<8x64xf32>, vector<8x64xf32>, vector<8x64xf32>, vector<8x64xf32>, vector<8x64xf32>, vector<8x64xf32>, vector<8x64xf32> -> vector<56x64xf32>
    %c0_226 = arith.constant 0 : index
    %c0_227 = arith.constant 0 : index
    %885 = vector.load %arg17[%c0_226, %c0_227] : memref<1x128xf32, #tpu.memory_space<vmem>>, vector<1x128xf32>
    %886 = vector.shape_cast %885 : vector<1x128xf32> to vector<1x128xf32>
    %887 = vector.broadcast %886 : vector<1x128xf32> to vector<56x128xf32>
    %888 = arith.truncf %884 : vector<56x64xf32> to vector<56x64xbf16>
    %c0_228 = arith.constant 0 : index
    %c0_229 = arith.constant 0 : index
    %889 = vector.load %arg16[%c0_228, %c0_229] : memref<64x128xbf16, #tpu.memory_space<vmem>>, vector<64x128xbf16>
    %cst_230 = arith.constant dense<0.000000e+00> : vector<56x128xf32>
    %890 = tpu.matmul %888, %889, %cst_230 {dimension_numbers = #tpu.dot_dimension_numbers<[1], [0], [0], [1], [0, 0, 1, 1], [], []>} : vector<56x64xbf16>, vector<64x128xbf16>, vector<56x128xf32> -> vector<56x128xf32>
    %891 = arith.addf %890, %887 : vector<56x128xf32>
    %c0_231 = arith.constant 0 : index
    %c0_232 = arith.constant 0 : index
    %892 = vector.load %arg25[%c0_231, %c0_232] : memref<56x128xf32, #tpu.memory_space<vmem>>, vector<56x128xf32>
    tpu.vector_store %arg25[%c0_231, %c0_232], %891 {strides = array<i32>} : memref<56x128xf32, #tpu.memory_space<vmem>>, vector<56x128xf32>,
    %c0_233 = arith.constant 0 : index
    %c0_234 = arith.constant 0 : index
    %893 = vector.load %arg1[%c0_233, %c0_234] : memref<56x128xf32, #tpu.memory_space<vmem>>, vector<56x128xf32>
    %894 = arith.subf %893, %891 : vector<56x128xf32>
    %895 = arith.mulf %894, %894 : vector<56x128xf32>
    %c0_235 = arith.constant 0 : index
    %c0_236 = arith.constant 0 : index
    %896 = vector.load %arg3[%c0_235, %c0_236] : memref<56x1xf32, #tpu.memory_space<vmem>>, vector<56x1xf32>
    %897 = vector.broadcast %896 : vector<56x1xf32> to vector<56x128xf32>
    %898 = arith.mulf %895, %897 : vector<56x128xf32>
    %899 = vector.shape_cast %898 : vector<56x128xf32> to vector<1x56x128xf32>
    %cst_237 = arith.constant dense<0.000000e+00> : vector<1xf32>
    %900 = vector.multi_reduction <add>, %899, %cst_237 [1, 2] : vector<1x56x128xf32> to vector<1xf32>
    %901 = vector.shape_cast %900 : vector<1xf32> to vector<1x1x1xf32>
    %902 = vector.extract %901[0, 0, 0] : f32 from vector<1x1x1xf32>
    %903 = vector.broadcast %902 : f32 to vector<1x1xf32>
    %c0_238 = arith.constant 0 : index
    %c0_239 = arith.constant 0 : index
    %904 = vector.load %arg24[%c0_238, %c0_239] : memref<1x1xf32, #tpu.memory_space<vmem>>, vector<1x1xf32>
    tpu.vector_store %arg24[%c0_238, %c0_239], %903 {strides = array<i32>} : memref<1x1xf32, #tpu.memory_space<vmem>>, vector<1x1xf32>,
    return
  }
}

</mosaic_0001>

<llo_original>
// kernel: tpu_custom_call.1
$region0: #{tpu_custom_call.1}
  #allocation0 [shape = 'u32[]', space=smem, size = 0x4, offset = 0x4, fixed_abs, tag = 'smem constant byte address 0x4 - core index']
  #allocation1 [shape = 'u32[144,128]{1,0:T(1,128)}', space=vmem, size = 0x12000, scoped, tag = 'internal scratch']
  %s0 = inlined_call_operand.vmem [shape: f32[56,4], index: 0, kind: input, shape index: {}]
  %s1 = inlined_call_operand.vmem [shape: f32[56,128], index: 1, kind: input, shape index: {}]
  %s2 = inlined_call_operand.vmem [shape: f32[56,64], index: 2, kind: input, shape index: {}]
  %s3 = inlined_call_operand.vmem [shape: f32[56,1], index: 3, kind: input, shape index: {}]
  %s4 = inlined_call_operand.vmem [shape: bf16[4,64], index: 4, kind: input, shape index: {}]
  %s5 = inlined_call_operand.vmem [shape: f32[1,64], index: 5, kind: input, shape index: {}]
  %s6 = inlined_call_operand.vmem [shape: bf16[64,256], index: 6, kind: input, shape index: {}]
  %s7 = inlined_call_operand.vmem [shape: bf16[64,64], index: 7, kind: input, shape index: {}]
  %s8 = inlined_call_operand.vmem [shape: f32[1,64], index: 8, kind: input, shape index: {}]
  %s9 = inlined_call_operand.vmem [shape: bf16[64,256], index: 9, kind: input, shape index: {}]
  %s10 = inlined_call_operand.vmem [shape: bf16[128,576], index: 10, kind: input, shape index: {}]
  %s11 = inlined_call_operand.vmem [shape: f32[1,64], index: 11, kind: input, shape index: {}]
  %s12 = inlined_call_operand.vmem [shape: f32[1,64], index: 12, kind: input, shape index: {}]
  %s13 = inlined_call_operand.vmem [shape: f32[1,64], index: 13, kind: input, shape index: {}]
  %s14 = inlined_call_operand.vmem [shape: bf16[128,256], index: 14, kind: input, shape index: {}]
  %s15 = inlined_call_operand.vmem [shape: f32[1,256], index: 15, kind: input, shape index: {}]
  %s16 = inlined_call_operand.vmem [shape: bf16[64,128], index: 16, kind: input, shape index: {}]
  %s17 = inlined_call_operand.vmem [shape: f32[1,128], index: 17, kind: input, shape index: {}]
  %s18 = inlined_call_operand.vmem [shape: f32[1,192], index: 18, kind: input, shape index: {}]
  %s19 = inlined_call_operand.vmem [shape: f32[1,64], index: 19, kind: input, shape index: {}]
  %s20 = inlined_call_operand.vmem [shape: bf16[64,192], index: 20, kind: input, shape index: {}]
  %s21 = inlined_call_operand.vmem [shape: f32[1,192], index: 21, kind: input, shape index: {}]
  %s22 = inlined_call_operand.vmem [shape: f32[1,64], index: 22, kind: input, shape index: {}]
  %s23 = inlined_call_operand.hbm [shape: f32[1,1], index: 23, kind: output, shape index: {0}]
  %s24 = inlined_call_operand.hbm [shape: f32[1,1], index: 24, kind: output, shape index: {1}]
  %s25 = inlined_call_operand.hbm [shape: f32[56,128], index: 25, kind: output, shape index: {2}]
  %26 = xla_tuple %s23, %s24, %s25
  %s27 = sld [smem:[#allocation0]]
  $region118: #{tpu_custom_call.1} parent=0
    _
  %s29 = ssub.s32 1, %s27
  %s30 = scalar_select 0, %s29, %s27
  $region1: #{tpu_custom_call.1} parent=0
    #allocation2 [shape = 'u8[512]{0}', space=vmem, size = 0x400, scoped, tag = 'output window, operand 0, single buffered']
    #allocation3 [shape = 's32[1]{0}', space=sflag, size = 0x4, scoped, tag = 'scoped memory for tpu_custom_call.1']
    #allocation4 [shape = 'u8[512]{0}', space=vmem, size = 0x400, scoped, tag = 'output window, operand 1, single buffered']
    #allocation5 [shape = 's32[1]{0}', space=sflag, size = 0x4, scoped, tag = 'scoped memory for tpu_custom_call.1']
    #allocation6 [shape = 'u8[28672]{0}', space=vmem, size = 0x7000, scoped, tag = 'output window, operand 2, single buffered']
    %31 = vsyncpa [#allocation3], 0
    %32 = vsyncpa [#allocation5], 0
    // Predicated region
    $region2: #{tpu_custom_call.1} parent=1 // pred_check
      _
    $region3: #{tpu_custom_call.1} parent=1 // pred_check_branch
      %34 = sbr.rel (0) target = $region5
    $region4: #{tpu_custom_call.1} parent=1 // pred_region
      _
    $region5: #{tpu_custom_call.1} parent=1 // pred_fallthru
      _
    // Predicated region
    $region6: #{tpu_custom_call.1} parent=1 // pred_check
      _
    $region7: #{tpu_custom_call.1} parent=1 // pred_check_branch
      %36 = sbr.rel (0) target = $region9
    $region8: #{tpu_custom_call.1} parent=1 // pred_region
      _
    $region9: #{tpu_custom_call.1} parent=1 // pred_fallthru
      _
    // Predicated region
    $region10: #{tpu_custom_call.1} parent=1 // pred_check
      _
    $region11: #{tpu_custom_call.1} parent=1 // pred_check_branch
      %38 = sbr.rel (0) target = $region13
    $region12: #{tpu_custom_call.1} parent=1 // pred_region
      _
    $region13: #{tpu_custom_call.1} parent=1 // pred_fallthru
      _
    // Predicated region
    $region14: #{tpu_custom_call.1} parent=1 // pred_check
      _
    $region15: #{tpu_custom_call.1} parent=1 // pred_check_branch
      %40 = sbr.rel (0) target = $region17
    $region16: #{tpu_custom_call.1} parent=1 // pred_region
      _
    $region17: #{tpu_custom_call.1} parent=1 // pred_fallthru
      _
    // Predicated region
    $region18: #{tpu_custom_call.1} parent=1 // pred_check
      _
    $region19: #{tpu_custom_call.1} parent=1 // pred_check_branch
      %42 = sbr.rel (0) target = $region21
    $region20: #{tpu_custom_call.1} parent=1 // pred_region
      _
    $region21: #{tpu_custom_call.1} parent=1 // pred_fallthru
      _
    // Predicated region
    $region22: #{tpu_custom_call.1} parent=1 // pred_check
      _
    $region23: #{tpu_custom_call.1} parent=1 // pred_check_branch
      %44 = sbr.rel (0) target = $region25
    $region24: #{tpu_custom_call.1} parent=1 // pred_region
      _
    $region25: #{tpu_custom_call.1} parent=1 // pred_fallthru
      _
    // Predicated region
    $region26: #{tpu_custom_call.1} parent=1 // pred_check
      _
    $region27: #{tpu_custom_call.1} parent=1 // pred_check_branch
      %46 = sbr.rel (0) target = $region29
    $region28: #{tpu_custom_call.1} parent=1 // pred_region
      _
    $region29: #{tpu_custom_call.1} parent=1 // pred_fallthru
      _
    // Predicated region
    $region30: #{tpu_custom_call.1} parent=1 // pred_check
      _
    $region31: #{tpu_custom_call.1} parent=1 // pred_check_branch
      %48 = sbr.rel (0) target = $region33
    $region32: #{tpu_custom_call.1} parent=1 // pred_region
      _
    $region33: #{tpu_custom_call.1} parent=1 // pred_fallthru
      _
    // Predicated region
    $region34: #{tpu_custom_call.1} parent=1 // pred_check
      _
    $region35: #{tpu_custom_call.1} parent=1 // pred_check_branch
      %50 = sbr.rel (0) target = $region37
    $region36: #{tpu_custom_call.1} parent=1 // pred_region
      _
    $region37: #{tpu_custom_call.1} parent=1 // pred_fallthru
      _
    // Predicated region
    $region38: #{tpu_custom_call.1} parent=1 // pred_check
      _
    $region39: #{tpu_custom_call.1} parent=1 // pred_check_branch
      %52 = sbr.rel (0) target = $region41
    $region40: #{tpu_custom_call.1} parent=1 // pred_region
      _
    $region41: #{tpu_custom_call.1} parent=1 // pred_fallthru
      _
    // Predicated region
    $region42: #{tpu_custom_call.1} parent=1 // pred_check
      _
    $region43: #{tpu_custom_call.1} parent=1 // pred_check_branch
      %54 = sbr.rel (0) target = $region45
    $region44: #{tpu_custom_call.1} parent=1 // pred_region
      _
    $region45: #{tpu_custom_call.1} parent=1 // pred_fallthru
      _
    // Predicated region
    $region46: #{tpu_custom_call.1} parent=1 // pred_check
      _
    $region47: #{tpu_custom_call.1} parent=1 // pred_check_branch
      %56 = sbr.rel (0) target = $region49
    $region48: #{tpu_custom_call.1} parent=1 // pred_region
      _
    $region49: #{tpu_custom_call.1} parent=1 // pred_fallthru
      _
    // Predicated region
    $region50: #{tpu_custom_call.1} parent=1 // pred_check
      _
    $region51: #{tpu_custom_call.1} parent=1 // pred_check_branch
      %58 = sbr.rel (0) target = $region53
    $region52: #{tpu_custom_call.1} parent=1 // pred_region
      _
    $region53: #{tpu_custom_call.1} parent=1 // pred_fallthru
      _
    // Predicated region
    $region54: #{tpu_custom_call.1} parent=1 // pred_check
      _
    $region55: #{tpu_custom_call.1} parent=1 // pred_check_branch
      %60 = sbr.rel (0) target = $region57
    $region56: #{tpu_custom_call.1} parent=1 // pred_region
      _
    $region57: #{tpu_custom_call.1} parent=1 // pred_fallthru
      _
    // Predicated region
    $region58: #{tpu_custom_call.1} parent=1 // pred_check
      _
    $region59: #{tpu_custom_call.1} parent=1 // pred_check_branch
      %62 = sbr.rel (0) target = $region61
    $region60: #{tpu_custom_call.1} parent=1 // pred_region
      _
    $region61: #{tpu_custom_call.1} parent=1 // pred_fallthru
      _
    // Predicated region
    $region62: #{tpu_custom_call.1} parent=1 // pred_check
      _
    $region63: #{tpu_custom_call.1} parent=1 // pred_check_branch
      %64 = sbr.rel (0) target = $region65
    $region64: #{tpu_custom_call.1} parent=1 // pred_region
      _
    $region65: #{tpu_custom_call.1} parent=1 // pred_fallthru
      _
    // Predicated region
    $region66: #{tpu_custom_call.1} parent=1 // pred_check
      _
    $region67: #{tpu_custom_call.1} parent=1 // pred_check_branch
      %66 = sbr.rel (0) target = $region69
    $region68: #{tpu_custom_call.1} parent=1 // pred_region
      _
    $region69: #{tpu_custom_call.1} parent=1 // pred_fallthru
      _
    // Predicated region
    $region70: #{tpu_custom_call.1} parent=1 // pred_check
      _
    $region71: #{tpu_custom_call.1} parent=1 // pred_check_branch
      %68 = sbr.rel (0) target = $region73
    $region72: #{tpu_custom_call.1} parent=1 // pred_region
      _
    $region73: #{tpu_custom_call.1} parent=1 // pred_fallthru
      _
    // Predicated region
    $region74: #{tpu_custom_call.1} parent=1 // pred_check
      _
    $region75: #{tpu_custom_call.1} parent=1 // pred_check_branch
      %70 = sbr.rel (0) target = $region77
    $region76: #{tpu_custom_call.1} parent=1 // pred_region
      _
    $region77: #{tpu_custom_call.1} parent=1 // pred_fallthru
      _
    // Predicated region
    $region78: #{tpu_custom_call.1} parent=1 // pred_check
      _
    $region79: #{tpu_custom_call.1} parent=1 // pred_check_branch
      %72 = sbr.rel (0) target = $region81
    $region80: #{tpu_custom_call.1} parent=1 // pred_region
      _
    $region81: #{tpu_custom_call.1} parent=1 // pred_fallthru
      _
    // Predicated region
    $region82: #{tpu_custom_call.1} parent=1 // pred_check
      _
    $region83: #{tpu_custom_call.1} parent=1 // pred_check_branch
      %74 = sbr.rel (0) target = $region85
    $region84: #{tpu_custom_call.1} parent=1 // pred_region
      _
    $region85: #{tpu_custom_call.1} parent=1 // pred_fallthru
      _
    // Predicated region
    $region86: #{tpu_custom_call.1} parent=1 // pred_check
      _
    $region87: #{tpu_custom_call.1} parent=1 // pred_check_branch
      %76 = sbr.rel (0) target = $region89
    $region88: #{tpu_custom_call.1} parent=1 // pred_region
      _
    $region89: #{tpu_custom_call.1} parent=1 // pred_fallthru
      _
    // Predicated region
    $region90: #{tpu_custom_call.1} parent=1 // pred_check
      _
    $region91: #{tpu_custom_call.1} parent=1 // pred_check_branch
      %78 = sbr.rel (0) target = $region93
    $region92: #{tpu_custom_call.1} parent=1 // pred_region
      _
    $region93: #{tpu_custom_call.1} parent=1 // pred_fallthru
      _
    %v80 = vld [vmem:[%s5] sm:$0x1]
    %v82 = vlaneseq
    %v83 = vshrl.u32 %v82, 7
    %v84 = vsub.s32 0, %v83
    %v85 = vrot.slane %v80, %v84
    %v87 = vld [vmem:[%s0] sm:$0xff]
    %v88 = vld [vmem:[%s0 + $0x8] sm:$0xff]
    %v89 = vld [vmem:[%s0 + $0x10] sm:$0xff]
    %v90 = vld [vmem:[%s0 + $0x18] sm:$0xff]
    %v91 = vld [vmem:[%s0 + $0x20] sm:$0xff]
    %v92 = vld [vmem:[%s0 + $0x28] sm:$0xff]
    %v93 = vld [vmem:[%s0 + $0x30] sm:$0xff]
    %v94 = vpack.c.bf16 %v88, %v87
    %v95 = vpack.c.bf16 %v90, %v89
    %v96 = vpack.c.bf16 %v92, %v91
    %v97 = vpack.c.bf16 %v93, %v93
    %v98 = vld [vmem:[%s4] sm:$0x3]
    %vm99 = vcmask 31744
    %v101 = vsel %vm99, %v94, 0
    %v104 = vsel %vm99, %v95, 0
    %v107 = vsel %vm99, %v96, 0
    %v110 = vsel %vm99, %v97, 0
    %vm112 = vcmask 1041408
    %v114 = vsel %vm112, %v98, 0
    %116 = vmatprep.subr.bf16.mxu0 0
    %117 = vmatpush1.bf16.msra.mxu0 %v114
    %118 = vmatprep.subr.bf16.mxu0 0
    %119 = vmatpush1.bf16.msra.mxu0 0
    %120 = vmatprep.subr.bf16.mxu0 0
    %121 = vmatpush1.bf16.msra.mxu0 0
    %122 = vmatprep.subr.bf16.mxu0 0
    %123 = vmatpush1.bf16.msra.mxu0 0
    %124 = vmatprep.subr.bf16.mxu0 0
    %125 = vmatpush1.bf16.msra.mxu0 0
    %126 = vmatprep.subr.bf16.mxu0 0
    %127 = vmatpush1.bf16.msra.mxu0 0
    %128 = vmatprep.subr.bf16.mxu0 0
    %129 = vmatpush1.bf16.msra.mxu0 0
    %130 = vmatprep.subr.bf16.mxu0 0
    %131 = vmatpush1.bf16.msra.mxu0 0
    %132 = vmatprep.subr.bf16.mxu0 0
    %133 = vmatpush1.bf16.msra.mxu0 0
    %134 = vmatprep.subr.bf16.mxu0 0
    %135 = vmatpush1.bf16.msra.mxu0 0
    %136 = vmatprep.subr.bf16.mxu0 0
    %137 = vmatpush1.bf16.msra.mxu0 0
    %138 = vmatprep.subr.bf16.mxu0 0
    %139 = vmatpush1.bf16.msra.mxu0 0
    %140 = vmatprep.subr.bf16.mxu0 0
    %141 = vmatpush1.bf16.msra.mxu0 0
    %142 = vmatprep.subr.bf16.mxu0 0
    %143 = vmatpush1.bf16.msra.mxu0 0
    %144 = vmatprep.subr.bf16.mxu0 0
    %145 = vmatpush1.bf16.msra.mxu0 0
    %146 = vmatprep.subr.bf16.mxu0 0
    %147 = vmatpush1.bf16.msra.mxu0 0
    %148 = vmatprep.mubr.bf16.mxu0 0
    %149 = vmatmul.mubr.bf16.gmra.mrb[0].mxu0 %v101
    %v150 = vpop.f32.mrb[0].mxu0
    %v151 = vadd.f32 %v85, %v150
    %v152 = vpop.f32.mrb[0].mxu0
    %v153 = vpop.f32.mrb[0].mxu0
    %v154 = vadd.f32 %v85, %v153
    %v155 = vpop.f32.mrb[0].mxu0
    %156 = vmatprep.mubr.bf16.mxu0 0
    %157 = vmatmul.mubr.bf16.gmra.mrb[0].mxu0 %v104
    %v158 = vpop.f32.mrb[0].mxu0
    %v159 = vadd.f32 %v85, %v158
    %v160 = vpop.f32.mrb[0].mxu0
    %v161 = vpop.f32.mrb[0].mxu0
    %v162 = vadd.f32 %v85, %v161
    %v163 = vpop.f32.mrb[0].mxu0
    %164 = vmatprep.mubr.bf16.mxu0 0
    %165 = vmatmul.mubr.bf16.gmra.mrb[0].mxu0 %v107
    %v166 = vpop.f32.mrb[0].mxu0
    %v167 = vadd.f32 %v85, %v166
    %v168 = vpop.f32.mrb[0].mxu0
    %v169 = vpop.f32.mrb[0].mxu0
    %v170 = vadd.f32 %v85, %v169
    %v171 = vpop.f32.mrb[0].mxu0
    %172 = vmatprep.mubr.bf16.mxu0 0
    %173 = vmatmul.mubr.bf16.gmra.mrb[0].mxu0 %v110
    %v174 = vpop.f32.mrb[0].mxu0
    %v175 = vadd.f32 %v85, %v174
    %v176 = vpop.f32.mrb[0].mxu0
    %v177 = vpop.f32.mrb[0].mxu0
    %v178 = vpop.f32.mrb[0].mxu0
    %179 = vdwg.mxu0
    %v180 = vmax.f32 %v151, 0.0
    %v181 = vmax.f32 %v154, 0.0
    %v182 = vmax.f32 %v159, 0.0
    %v183 = vmax.f32 %v162, 0.0
    %v184 = vmax.f32 %v167, 0.0
    %v185 = vmax.f32 %v170, 0.0
    %v186 = vmax.f32 %v175, 0.0
    %v187 = vpack.c.bf16 %v181, %v180
    %v188 = vpack.c.bf16 %v183, %v182
    %v189 = vpack.c.bf16 %v185, %v184
    %v190 = vpack.c.bf16 %v186, %v186
    %v191 = vld [vmem:[%s6] sm:$0xff]
    %v192 = vld [vmem:[%s6 + $0x8] sm:$0xff]
    %v193 = vld [vmem:[%s6 + $0x10] sm:$0xff]
    %v194 = vld [vmem:[%s6 + $0x18] sm:$0xff]
    %v195 = vld [vmem:[%s6 + $0x20] sm:$0xff]
    %v196 = vld [vmem:[%s6 + $0x28] sm:$0xff]
    %v197 = vld [vmem:[%s6 + $0x30] sm:$0xff]
    %v198 = vld [vmem:[%s6 + $0x38] sm:$0xff]
    %v207 = vunpack.c.l.b16 %v191
    %v208 = vunpack.c.h.b16 %v191
    %v209 = vunpack.c.l.b16 %v192
    %v210 = vunpack.c.h.b16 %v192
    %v211 = vunpack.c.l.b16 %v193
    %v212 = vunpack.c.h.b16 %v193
    %v213 = vunpack.c.l.b16 %v194
    %v214 = vunpack.c.h.b16 %v194
    %v215 = vunpack.c.l.b16 %v195
    %v216 = vunpack.c.h.b16 %v195
    %v217 = vunpack.c.l.b16 %v196
    %v218 = vunpack.c.h.b16 %v196
    %v219 = vunpack.c.l.b16 %v197
    %v220 = vunpack.c.h.b16 %v197
    %v221 = vunpack.c.l.b16 %v198
    %v222 = vunpack.c.h.b16 %v198
    %v223 = vpack.c.b16 %v209, %v207
    %v224 = vpack.c.b16 %v210, %v208
    %v225 = vpack.c.b16 %v213, %v211
    %v226 = vpack.c.b16 %v214, %v212
    %v227 = vpack.c.b16 %v217, %v215
    %v228 = vpack.c.b16 %v218, %v216
    %v229 = vpack.c.b16 %v221, %v219
    %v230 = vpack.c.b16 %v222, %v220
    %vm239 = vcmask 523264
    %v241 = vsel %vm239, %v187, 0
    %v244 = vsel %vm239, %v188, 0
    %v247 = vsel %vm239, %v189, 0
    %v250 = vsel %vm239, %v190, 0
    %252 = vmatprep.subr.bf16.mxu0 %v224
    %253 = vmatpush1.bf16.msra.mxu0 %v223
    %254 = vmatprep.subr.bf16.mxu0 %v226
    %255 = vmatpush1.bf16.msra.mxu0 %v225
    %256 = vmatprep.subr.bf16.mxu0 %v228
    %257 = vmatpush1.bf16.msra.mxu0 %v227
    %258 = vmatprep.subr.bf16.mxu0 %v230
    %259 = vmatpush1.bf16.msra.mxu0 %v229
    %260 = vmatprep.subr.bf16.mxu0 0
    %261 = vmatpush1.bf16.msra.mxu0 0
    %262 = vmatprep.subr.bf16.mxu0 0
    %263 = vmatpush1.bf16.msra.mxu0 0
    %264 = vmatprep.subr.bf16.mxu0 0
    %265 = vmatpush1.bf16.msra.mxu0 0
    %266 = vmatprep.subr.bf16.mxu0 0
    %267 = vmatpush1.bf16.msra.mxu0 0
    %268 = vmatprep.subr.bf16.mxu0 0
    %269 = vmatpush1.bf16.msra.mxu0 0
    %270 = vmatprep.subr.bf16.mxu0 0
    %271 = vmatpush1.bf16.msra.mxu0 0
    %272 = vmatprep.subr.bf16.mxu0 0
    %273 = vmatpush1.bf16.msra.mxu0 0
    %274 = vmatprep.subr.bf16.mxu0 0
    %275 = vmatpush1.bf16.msra.mxu0 0
    %276 = vmatprep.subr.bf16.mxu0 0
    %277 = vmatpush1.bf16.msra.mxu0 0
    %278 = vmatprep.subr.bf16.mxu0 0
    %279 = vmatpush1.bf16.msra.mxu0 0
    %280 = vmatprep.subr.bf16.mxu0 0
    %281 = vmatpush1.bf16.msra.mxu0 0
    %282 = vmatprep.subr.bf16.mxu0 0
    %283 = vmatpush1.bf16.msra.mxu0 0
    %284 = vmatprep.mubr.bf16.mxu0 0
    %285 = vmatmul.mubr.bf16.gmra.mrb[0].mxu0 %v241
    %v286 = vpop.f32.mrb[0].mxu0
    %v287 = vadd.f32 0.0, %v286
    %v288 = vpop.f32.mrb[0].mxu0
    %v289 = vadd.f32 0.0, %v288
    %v290 = vpop.f32.mrb[0].mxu0
    %v291 = vadd.f32 0.0, %v290
    %v292 = vpop.f32.mrb[0].mxu0
    %v293 = vadd.f32 0.0, %v292
    %294 = vmatprep.mubr.bf16.mxu0 0
    %295 = vmatmul.mubr.bf16.gmra.mrb[0].mxu0 %v244
    %v296 = vpop.f32.mrb[0].mxu0
    %v297 = vadd.f32 0.0, %v296
    %v298 = vpop.f32.mrb[0].mxu0
    %v299 = vadd.f32 0.0, %v298
    %v300 = vpop.f32.mrb[0].mxu0
    %v301 = vadd.f32 0.0, %v300
    %v302 = vpop.f32.mrb[0].mxu0
    %v303 = vadd.f32 0.0, %v302
    %304 = vmatprep.mubr.bf16.mxu0 0
    %305 = vmatmul.mubr.bf16.gmra.mrb[0].mxu0 %v247
    %v306 = vpop.f32.mrb[0].mxu0
    %v307 = vadd.f32 0.0, %v306
    %v308 = vpop.f32.mrb[0].mxu0
    %v309 = vadd.f32 0.0, %v308
    %v310 = vpop.f32.mrb[0].mxu0
    %v311 = vadd.f32 0.0, %v310
    %v312 = vpop.f32.mrb[0].mxu0
    %v313 = vadd.f32 0.0, %v312
    %314 = vmatprep.mubr.bf16.mxu0 0
    %315 = vmatmul.mubr.bf16.gmra.mrb[0].mxu0 %v250
    %v316 = vpop.f32.mrb[0].mxu0
    %v317 = vpop.f32.mrb[0].mxu0
    %v318 = vadd.f32 0.0, %v317
    %v319 = vpop.f32.mrb[0].mxu0
    %v320 = vpop.f32.mrb[0].mxu0
    %321 = vdwg.mxu0
    %v322 = vld [vmem:[%s2] sm:$0xff]
    %v323 = vld [vmem:[%s2 + $0x8] sm:$0xff]
    %v324 = vld [vmem:[%s2 + $0x10] sm:$0xff]
    %v325 = vld [vmem:[%s2 + $0x18] sm:$0xff]
    %v326 = vld [vmem:[%s2 + $0x20] sm:$0xff]
    %v327 = vld [vmem:[%s2 + $0x28] sm:$0xff]
    %v328 = vld [vmem:[%s2 + $0x30] sm:$0xff]
    %v329 = vld [vmem:[%s11] sm:$0x1]
    %v331 = vlaneseq
    %v332 = vshrl.u32 %v331, 7
    %v333 = vsub.s32 0, %v332
    %v334 = vrot.slane %v329, %v333
    %v335 = vld [vmem:[%s12] sm:$0x1]
    %v337 = vlaneseq
    %v338 = vshrl.u32 %v337, 7
    %v339 = vsub.s32 0, %v338
    %v340 = vrot.slane %v335, %v339
    %v341 = vld [vmem:[%s13] sm:$0x1]
    %v343 = vlaneseq
    %v344 = vshrl.u32 %v343, 7
    %v345 = vsub.s32 0, %v344
    %v346 = vrot.slane %v341, %v345
    %v347 = vld [vmem:[%s8] sm:$0x1]
    %v349 = vlaneseq
    %v350 = vshrl.u32 %v349, 7
    %v351 = vsub.s32 0, %v350
    %v352 = vrot.slane %v347, %v351
    %v354 = vld [vmem:[%s15] sm:$0x3]
    %v356 = vlaneseq
    %v357 = vshrl.u32 %v356, 7
    %v358 = vsub.s32 0, %v357
    %v359 = vrot.slane %v354, %v358
    %v360 = vlaneseq
    %v361 = vshrl.u32 %v360, 7
    %v362 = vsub.s32 1, %v361
    %v363 = vrot.slane %v354, %v362
    %v366 = vld [vmem:[%s18] sm:$0x3]
    %v368 = vlaneseq
    %v369 = vshrl.u32 %v368, 7
    %v370 = vsub.s32 0, %v369
    %v371 = vrot.slane %v366, %v370
    %v372 = vlaneseq
    %v373 = vshrl.u32 %v372, 7
    %v374 = vsub.s32 1, %v373
    %v375 = vrot.slane %v366, %v374
    %v378 = vld [vmem:[%s19] sm:$0x1]
    %v380 = vlaneseq
    %v381 = vshrl.u32 %v380, 7
    %v382 = vsub.s32 0, %v381
    %v383 = vrot.slane %v378, %v382
    %v385 = vld [vmem:[%s21] sm:$0x3]
    %v387 = vlaneseq
    %v388 = vshrl.u32 %v387, 7
    %v389 = vsub.s32 0, %v388
    %v390 = vrot.slane %v385, %v389
    %v391 = vlaneseq
    %v392 = vshrl.u32 %v391, 7
    %v393 = vsub.s32 1, %v392
    %v394 = vrot.slane %v385, %v393
    %v397 = vld [vmem:[%s22] sm:$0x1]
    %v399 = vlaneseq
    %v400 = vshrl.u32 %v399, 7
    %v401 = vsub.s32 0, %v400
    %v402 = vrot.slane %v397, %v401
    %v403 = vpack.c.bf16 0.0, 0.0
    %v404 = vld [vmem:[%s10] sm:$0xff]
    %v405 = vld [vmem:[%s10 + $0x8] sm:$0xff]
    %v406 = vld [vmem:[%s10 + $0x10] sm:$0xf]
    %v407 = vld [vmem:[%s10 + $0x14] sm:$0xff]
    %v408 = vld [vmem:[%s10 + $0x1c] sm:$0xff]
    %v409 = vld [vmem:[%s10 + $0x24] sm:$0xf]
    %v410 = vld [vmem:[%s10 + $0x28] sm:$0xff]
    %v411 = vld [vmem:[%s10 + $0x30] sm:$0xff]
    %v412 = vld [vmem:[%s10 + $0x38] sm:$0xf]
    %v413 = vld [vmem:[%s10 + $0x3c] sm:$0xff]
    %v414 = vld [vmem:[%s10 + $0x44] sm:$0xff]
    %v415 = vld [vmem:[%s10 + $0x4c] sm:$0xf]
    %v416 = vld [vmem:[%s10 + $0x50] sm:$0xff]
    %v417 = vld [vmem:[%s10 + $0x58] sm:$0xff]
    %v418 = vld [vmem:[%s10 + $0x60] sm:$0xf]
    %v419 = vld [vmem:[%s10 + $0x64] sm:$0xff]
    %v420 = vld [vmem:[%s10 + $0x6c] sm:$0xff]
    %v421 = vld [vmem:[%s10 + $0x74] sm:$0xf]
    %v422 = vld [vmem:[%s10 + $0x78] sm:$0xff]
    %v423 = vld [vmem:[%s10 + $0x80] sm:$0xff]
    %v424 = vld [vmem:[%s10 + $0x88] sm:$0xf]
    %v425 = vld [vmem:[%s10 + $0x8c] sm:$0xff]
    %v426 = vld [vmem:[%s10 + $0x94] sm:$0xff]
    %v427 = vld [vmem:[%s10 + $0x9c] sm:$0xf]
    %v428 = vld [vmem:[%s10 + $0xa0] sm:$0xff]
    %v429 = vld [vmem:[%s10 + $0xa8] sm:$0xff]
    %v430 = vld [vmem:[%s10 + $0xb0] sm:$0xf]
    %v431 = vld [vmem:[%s10 + $0xb4] sm:$0xff]
    %v432 = vld [vmem:[%s10 + $0xbc] sm:$0xff]
    %v433 = vld [vmem:[%s10 + $0xc4] sm:$0xf]
    %v434 = vld [vmem:[%s10 + $0xc8] sm:$0xff]
    %v435 = vld [vmem:[%s10 + $0xd0] sm:$0xff]
    %v436 = vld [vmem:[%s10 + $0xd8] sm:$0xf]
    %v437 = vld [vmem:[%s10 + $0xdc] sm:$0xff]
    %v438 = vld [vmem:[%s10 + $0xe4] sm:$0xff]
    %v439 = vld [vmem:[%s10 + $0xec] sm:$0xf]
    %v440 = vld [vmem:[%s10 + $0xf0] sm:$0xff]
    %v441 = vld [vmem:[%s10 + $0xf8] sm:$0xff]
    %v442 = vld [vmem:[%s10 + $0x100] sm:$0xf]
    %v443 = vld [vmem:[%s10 + $0x104] sm:$0xff]
    %v444 = vld [vmem:[%s10 + $0x10c] sm:$0xff]
    %v445 = vld [vmem:[%s10 + $0x114] sm:$0xf]
    %v446 = vld [vmem:[%s10 + $0x118] sm:$0xff]
    %v447 = vld [vmem:[%s10 + $0x120] sm:$0xff]
    %v448 = vld [vmem:[%s10 + $0x128] sm:$0xf]
    %v449 = vld [vmem:[%s10 + $0x12c] sm:$0xff]
    %v450 = vld [vmem:[%s10 + $0x134] sm:$0xff]
    %v451 = vld [vmem:[%s10 + $0x13c] sm:$0xf]
    %v500 = vunpack.c.l.b16 %v404
    %v501 = vunpack.c.h.b16 %v404
    %v502 = vunpack.c.l.b16 %v405
    %v503 = vunpack.c.h.b16 %v405
    %v504 = vunpack.c.l.b16 %v406
    %v505 = vunpack.c.l.b16 %v407
    %v506 = vunpack.c.h.b16 %v407
    %v507 = vunpack.c.l.b16 %v408
    %v508 = vunpack.c.h.b16 %v408
    %v509 = vunpack.c.l.b16 %v409
    %v510 = vunpack.c.l.b16 %v410
    %v511 = vunpack.c.h.b16 %v410
    %v512 = vunpack.c.l.b16 %v411
    %v513 = vunpack.c.h.b16 %v411
    %v514 = vunpack.c.l.b16 %v412
    %v515 = vunpack.c.l.b16 %v413
    %v516 = vunpack.c.h.b16 %v413
    %v517 = vunpack.c.l.b16 %v414
    %v518 = vunpack.c.h.b16 %v414
    %v519 = vunpack.c.l.b16 %v415
    %v520 = vunpack.c.l.b16 %v416
    %v521 = vunpack.c.h.b16 %v416
    %v522 = vunpack.c.l.b16 %v417
    %v523 = vunpack.c.h.b16 %v417
    %v524 = vunpack.c.l.b16 %v418
    %v525 = vunpack.c.l.b16 %v419
    %v526 = vunpack.c.h.b16 %v419
    %v527 = vunpack.c.l.b16 %v420
    %v528 = vunpack.c.h.b16 %v420
    %v529 = vunpack.c.l.b16 %v421
    %v530 = vunpack.c.l.b16 %v422
    %v531 = vunpack.c.h.b16 %v422
    %v532 = vunpack.c.l.b16 %v423
    %v533 = vunpack.c.h.b16 %v423
    %v534 = vunpack.c.l.b16 %v424
    %v535 = vunpack.c.l.b16 %v425
    %v536 = vunpack.c.h.b16 %v425
    %v537 = vunpack.c.l.b16 %v426
    %v538 = vunpack.c.h.b16 %v426
    %v539 = vunpack.c.l.b16 %v427
    %v540 = vunpack.c.l.b16 %v428
    %v541 = vunpack.c.h.b16 %v428
    %v542 = vunpack.c.l.b16 %v429
    %v543 = vunpack.c.h.b16 %v429
    %v544 = vunpack.c.l.b16 %v430
    %v545 = vunpack.c.l.b16 %v431
    %v546 = vunpack.c.h.b16 %v431
    %v547 = vunpack.c.l.b16 %v432
    %v548 = vunpack.c.h.b16 %v432
    %v549 = vunpack.c.l.b16 %v433
    %v550 = vunpack.c.l.b16 %v434
    %v551 = vunpack.c.h.b16 %v434
    %v552 = vunpack.c.l.b16 %v435
    %v553 = vunpack.c.h.b16 %v435
    %v554 = vunpack.c.l.b16 %v436
    %v555 = vunpack.c.l.b16 %v437
    %v556 = vunpack.c.h.b16 %v437
    %v557 = vunpack.c.l.b16 %v438
    %v558 = vunpack.c.h.b16 %v438
    %v559 = vunpack.c.l.b16 %v439
    %v560 = vunpack.c.l.b16 %v440
    %v561 = vunpack.c.h.b16 %v440
    %v562 = vunpack.c.l.b16 %v441
    %v563 = vunpack.c.h.b16 %v441
    %v564 = vunpack.c.l.b16 %v442
    %v565 = vunpack.c.l.b16 %v443
    %v566 = vunpack.c.h.b16 %v443
    %v567 = vunpack.c.l.b16 %v444
    %v568 = vunpack.c.h.b16 %v444
    %v569 = vunpack.c.l.b16 %v445
    %v570 = vunpack.c.l.b16 %v446
    %v571 = vunpack.c.h.b16 %v446
    %v572 = vunpack.c.l.b16 %v447
    %v573 = vunpack.c.h.b16 %v447
    %v574 = vunpack.c.l.b16 %v448
    %v575 = vunpack.c.l.b16 %v449
    %v576 = vunpack.c.h.b16 %v449
    %v577 = vunpack.c.l.b16 %v450
    %v578 = vunpack.c.h.b16 %v450
    %v579 = vunpack.c.l.b16 %v451
    %v580 = vpack.c.b16 %v505, %v500
    %v581 = vpack.c.b16 %v506, %v501
    %v582 = vpack.c.b16 %v507, %v502
    %v583 = vpack.c.b16 %v508, %v503
    %v584 = vpack.c.b16 %v509, %v504
    %v585 = vpack.c.b16 %v515, %v510
    %v586 = vpack.c.b16 %v516, %v511
    %v587 = vpack.c.b16 %v517, %v512
    %v588 = vpack.c.b16 %v518, %v513
    %v589 = vpack.c.b16 %v519, %v514
    %v590 = vpack.c.b16 %v525, %v520
    %v591 = vpack.c.b16 %v526, %v521
    %v592 = vpack.c.b16 %v527, %v522
    %v593 = vpack.c.b16 %v528, %v523
    %v594 = vpack.c.b16 %v529, %v524
    %v595 = vpack.c.b16 %v535, %v530
    %v596 = vpack.c.b16 %v536, %v531
    %v597 = vpack.c.b16 %v537, %v532
    %v598 = vpack.c.b16 %v538, %v533
    %v599 = vpack.c.b16 %v539, %v534
    %v600 = vpack.c.b16 %v545, %v540
    %v601 = vpack.c.b16 %v546, %v541
    %v602 = vpack.c.b16 %v547, %v542
    %v603 = vpack.c.b16 %v548, %v543
    %v604 = vpack.c.b16 %v549, %v544
    %v605 = vpack.c.b16 %v555, %v550
    %v606 = vpack.c.b16 %v556, %v551
    %v607 = vpack.c.b16 %v557, %v552
    %v608 = vpack.c.b16 %v558, %v553
    %v609 = vpack.c.b16 %v559, %v554
    %v610 = vpack.c.b16 %v565, %v560
    %v611 = vpack.c.b16 %v566, %v561
    %v612 = vpack.c.b16 %v567, %v562
    %v613 = vpack.c.b16 %v568, %v563
    %v614 = vpack.c.b16 %v569, %v564
    %v615 = vpack.c.b16 %v575, %v570
    %v616 = vpack.c.b16 %v576, %v571
    %v617 = vpack.c.b16 %v577, %v572
    %v618 = vpack.c.b16 %v578, %v573
    %v619 = vpack.c.b16 %v579, %v574
    %660 = vmatprep.subr.bf16.mxu0 %v581
    %661 = vmatpush1.bf16.msra.mxu0 %v580
    %662 = vmatprep.subr.bf16.mxu0 %v586
    %663 = vmatpush1.bf16.msra.mxu0 %v585
    %664 = vmatprep.subr.bf16.mxu0 %v591
    %665 = vmatpush1.bf16.msra.mxu0 %v590
    %666 = vmatprep.subr.bf16.mxu0 %v596
    %667 = vmatpush1.bf16.msra.mxu0 %v595
    %668 = vmatprep.subr.bf16.mxu0 %v601
    %669 = vmatpush1.bf16.msra.mxu0 %v600
    %670 = vmatprep.subr.bf16.mxu0 %v606
    %671 = vmatpush1.bf16.msra.mxu0 %v605
    %672 = vmatprep.subr.bf16.mxu0 %v611
    %673 = vmatpush1.bf16.msra.mxu0 %v610
    %674 = vmatprep.subr.bf16.mxu0 %v616
    %675 = vmatpush1.bf16.msra.mxu0 %v615
    %676 = vmatprep.subr.bf16.mxu0 0
    %677 = vmatpush1.bf16.msra.mxu0 0
    %678 = vmatprep.subr.bf16.mxu0 0
    %679 = vmatpush1.bf16.msra.mxu0 0
    %680 = vmatprep.subr.bf16.mxu0 0
    %681 = vmatpush1.bf16.msra.mxu0 0
    %682 = vmatprep.subr.bf16.mxu0 0
    %683 = vmatpush1.bf16.msra.mxu0 0
    %684 = vmatprep.subr.bf16.mxu0 0
    %685 = vmatpush1.bf16.msra.mxu0 0
    %686 = vmatprep.subr.bf16.mxu0 0
    %687 = vmatpush1.bf16.msra.mxu0 0
    %688 = vmatprep.subr.bf16.mxu0 0
    %689 = vmatpush1.bf16.msra.mxu0 0
    %690 = vmatprep.subr.bf16.mxu0 0
    %691 = vmatpush1.bf16.msra.mxu0 0
    %692 = vmatprep.mubr.bf16.mxu0 0
    %693 = vmatmul.mubr.bf16.gmra.mrb[0].mxu0 %v403
    %v694 = vpop.f32.mrb[0].mxu0
    %v695 = vadd.f32 0.0, %v694
    %v696 = vpop.f32.mrb[0].mxu0
    %v697 = vadd.f32 0.0, %v696
    %v698 = vpop.f32.mrb[0].mxu0
    %v699 = vpop.f32.mrb[0].mxu0
    %700 = vdwg.mxu0
    %701 = vmatprep.subr.bf16.mxu0 %v583
    %702 = vmatpush1.bf16.msra.mxu0 %v582
    %703 = vmatprep.subr.bf16.mxu0 %v588
    %704 = vmatpush1.bf16.msra.mxu0 %v587
    %705 = vmatprep.subr.bf16.mxu0 %v593
    %706 = vmatpush1.bf16.msra.mxu0 %v592
    %707 = vmatprep.subr.bf16.mxu0 %v598
    %708 = vmatpush1.bf16.msra.mxu0 %v597
    %709 = vmatprep.subr.bf16.mxu0 %v603
    %710 = vmatpush1.bf16.msra.mxu0 %v602
    %711 = vmatprep.subr.bf16.mxu0 %v608
    %712 = vmatpush1.bf16.msra.mxu0 %v607
    %713 = vmatprep.subr.bf16.mxu0 %v613
    %714 = vmatpush1.bf16.msra.mxu0 %v612
    %715 = vmatprep.subr.bf16.mxu0 %v618
    %716 = vmatpush1.bf16.msra.mxu0 %v617
    %717 = vmatprep.subr.bf16.mxu0 0
    %718 = vmatpush1.bf16.msra.mxu0 0
    %719 = vmatprep.subr.bf16.mxu0 0
    %720 = vmatpush1.bf16.msra.mxu0 0
    %721 = vmatprep.subr.bf16.mxu0 0
    %722 = vmatpush1.bf16.msra.mxu0 0
    %723 = vmatprep.subr.bf16.mxu0 0
    %724 = vmatpush1.bf16.msra.mxu0 0
    %725 = vmatprep.subr.bf16.mxu0 0
    %726 = vmatpush1.bf16.msra.mxu0 0
    %727 = vmatprep.subr.bf16.mxu0 0
    %728 = vmatpush1.bf16.msra.mxu0 0
    %729 = vmatprep.subr.bf16.mxu0 0
    %730 = vmatpush1.bf16.msra.mxu0 0
    %731 = vmatprep.subr.bf16.mxu0 0
    %732 = vmatpush1.bf16.msra.mxu0 0
    %733 = vmatprep.mubr.bf16.mxu0 0
    %734 = vmatmul.mubr.bf16.gmra.mrb[0].mxu0 %v403
    %v735 = vpop.f32.mrb[0].mxu0
    %v736 = vadd.f32 0.0, %v735
    %v737 = vpop.f32.mrb[0].mxu0
    %v738 = vadd.f32 0.0, %v737
    %v739 = vpop.f32.mrb[0].mxu0
    %v740 = vpop.f32.mrb[0].mxu0
    %741 = vdwg.mxu0
    %742 = vmatprep.subr.bf16.mxu0 0
    %743 = vmatpush1.bf16.msra.mxu0 %v584
    %744 = vmatprep.subr.bf16.mxu0 0
    %745 = vmatpush1.bf16.msra.mxu0 %v589
    %746 = vmatprep.subr.bf16.mxu0 0
    %747 = vmatpush1.bf16.msra.mxu0 %v594
    %748 = vmatprep.subr.bf16.mxu0 0
    %749 = vmatpush1.bf16.msra.mxu0 %v599
    %750 = vmatprep.subr.bf16.mxu0 0
    %751 = vmatpush1.bf16.msra.mxu0 %v604
    %752 = vmatprep.subr.bf16.mxu0 0
    %753 = vmatpush1.bf16.msra.mxu0 %v609
    %754 = vmatprep.subr.bf16.mxu0 0
    %755 = vmatpush1.bf16.msra.mxu0 %v614
    %756 = vmatprep.subr.bf16.mxu0 0
    %757 = vmatpush1.bf16.msra.mxu0 %v619
    %758 = vmatprep.subr.bf16.mxu0 0
    %759 = vmatpush1.bf16.msra.mxu0 0
    %760 = vmatprep.subr.bf16.mxu0 0
    %761 = vmatpush1.bf16.msra.mxu0 0
    %762 = vmatprep.subr.bf16.mxu0 0
    %763 = vmatpush1.bf16.msra.mxu0 0
    %764 = vmatprep.subr.bf16.mxu0 0
    %765 = vmatpush1.bf16.msra.mxu0 0
    %766 = vmatprep.subr.bf16.mxu0 0
    %767 = vmatpush1.bf16.msra.mxu0 0
    %768 = vmatprep.subr.bf16.mxu0 0
    %769 = vmatpush1.bf16.msra.mxu0 0
    %770 = vmatprep.subr.bf16.mxu0 0
    %771 = vmatpush1.bf16.msra.mxu0 0
    %772 = vmatprep.subr.bf16.mxu0 0
    %773 = vmatpush1.bf16.msra.mxu0 0
    %774 = vmatprep.mubr.bf16.mxu0 0
    %775 = vmatmul.mubr.bf16.gmra.mrb[0].mxu0 %v403
    %v776 = vpop.f32.mrb[0].mxu0
    %v777 = vadd.f32 0.0, %v776
    %v778 = vpop.f32.mrb[0].mxu0
    %v779 = vpop.f32.mrb[0].mxu0
    %v780 = vpop.f32.mrb[0].mxu0
    %781 = vdwg.mxu0
    %783 = vrot.lane.b32.xlu0 %v695, 64
    %v784 = vpop.permute.xlu0 %783
    %v786 = vadd.f32 %v289, %v784
    %787 = vrot.lane.b32.xlu0 %v334, 64
    %v788 = vpop.permute.xlu0 %787
    %v790 = vadd.f32 %v786, %v788
    %v791 = vmax.f32 %v790, 0.0
    %792 = vrot.lane.b32.xlu0 %v340, 64
    %v793 = vpop.permute.xlu0 %792
    %v795 = vadd.f32 %v695, %v793
    %v796 = vmax.f32 %v795, 0.0
    %798 = vrot.lane.b32.xlu0 %v791, 64
    %v799 = vpop.permute.xlu0 %798
    %v801 = vsel %vm239, %v799, %v796
    %v802 = vpack.c.bf16 %v801, %v801
    %v803 = vld [vmem:[%s14] sm:$0xff]
    %v804 = vld [vmem:[%s14 + $0x8] sm:$0xff]
    %v805 = vld [vmem:[%s14 + $0x10] sm:$0xff]
    %v806 = vld [vmem:[%s14 + $0x18] sm:$0xff]
    %v807 = vld [vmem:[%s14 + $0x20] sm:$0xff]
    %v808 = vld [vmem:[%s14 + $0x28] sm:$0xff]
    %v809 = vld [vmem:[%s14 + $0x30] sm:$0xff]
    %v810 = vld [vmem:[%s14 + $0x38] sm:$0xff]
    %v811 = vld [vmem:[%s14 + $0x40] sm:$0xff]
    %v812 = vld [vmem:[%s14 + $0x48] sm:$0xff]
    %v813 = vld [vmem:[%s14 + $0x50] sm:$0xff]
    %v814 = vld [vmem:[%s14 + $0x58] sm:$0xff]
    %v815 = vld [vmem:[%s14 + $0x60] sm:$0xff]
    %v816 = vld [vmem:[%s14 + $0x68] sm:$0xff]
    %v817 = vld [vmem:[%s14 + $0x70] sm:$0xff]
    %v818 = vld [vmem:[%s14 + $0x78] sm:$0xff]
    %v835 = vunpack.c.l.b16 %v803
    %v836 = vunpack.c.h.b16 %v803
    %v837 = vunpack.c.l.b16 %v804
    %v838 = vunpack.c.h.b16 %v804
    %v839 = vunpack.c.l.b16 %v805
    %v840 = vunpack.c.h.b16 %v805
    %v841 = vunpack.c.l.b16 %v806
    %v842 = vunpack.c.h.b16 %v806
    %v843 = vunpack.c.l.b16 %v807
    %v844 = vunpack.c.h.b16 %v807
    %v845 = vunpack.c.l.b16 %v808
    %v846 = vunpack.c.h.b16 %v808
    %v847 = vunpack.c.l.b16 %v809
    %v848 = vunpack.c.h.b16 %v809
    %v849 = vunpack.c.l.b16 %v810
    %v850 = vunpack.c.h.b16 %v810
    %v851 = vunpack.c.l.b16 %v811
    %v852 = vunpack.c.h.b16 %v811
    %v853 = vunpack.c.l.b16 %v812
    %v854 = vunpack.c.h.b16 %v812
    %v855 = vunpack.c.l.b16 %v813
    %v856 = vunpack.c.h.b16 %v813
    %v857 = vunpack.c.l.b16 %v814
    %v858 = vunpack.c.h.b16 %v814
    %v859 = vunpack.c.l.b16 %v815
    %v860 = vunpack.c.h.b16 %v815
    %v861 = vunpack.c.l.b16 %v816
    %v862 = vunpack.c.h.b16 %v816
    %v863 = vunpack.c.l.b16 %v817
    %v864 = vunpack.c.h.b16 %v817
    %v865 = vunpack.c.l.b16 %v818
    %v866 = vunpack.c.h.b16 %v818
    %v867 = vpack.c.b16 %v837, %v835
    %v868 = vpack.c.b16 %v838, %v836
    %v869 = vpack.c.b16 %v841, %v839
    %v870 = vpack.c.b16 %v842, %v840
    %v871 = vpack.c.b16 %v845, %v843
    %v872 = vpack.c.b16 %v846, %v844
    %v873 = vpack.c.b16 %v849, %v847
    %v874 = vpack.c.b16 %v850, %v848
    %v875 = vpack.c.b16 %v853, %v851
    %v876 = vpack.c.b16 %v854, %v852
    %v877 = vpack.c.b16 %v857, %v855
    %v878 = vpack.c.b16 %v858, %v856
    %v879 = vpack.c.b16 %v861, %v859
    %v880 = vpack.c.b16 %v862, %v860
    %v881 = vpack.c.b16 %v865, %v863
    %v882 = vpack.c.b16 %v866, %v864
    %899 = vmatprep.subr.bf16.mxu0 %v868
    %900 = vmatpush1.bf16.msra.mxu0 %v867
    %901 = vmatprep.subr.bf16.mxu0 %v870
    %902 = vmatpush1.bf16.msra.mxu0 %v869
    %903 = vmatprep.subr.bf16.mxu0 %v872
    %904 = vmatpush1.bf16.msra.mxu0 %v871
    %905 = vmatprep.subr.bf16.mxu0 %v874
    %906 = vmatpush1.bf16.msra.mxu0 %v873
    %907 = vmatprep.subr.bf16.mxu0 %v876
    %908 = vmatpush1.bf16.msra.mxu0 %v875
    %909 = vmatprep.subr.bf16.mxu0 %v878
    %910 = vmatpush1.bf16.msra.mxu0 %v877
    %911 = vmatprep.subr.bf16.mxu0 %v880
    %912 = vmatpush1.bf16.msra.mxu0 %v879
    %913 = vmatprep.subr.bf16.mxu0 %v882
    %914 = vmatpush1.bf16.msra.mxu0 %v881
    %915 = vmatprep.subr.bf16.mxu0 0
    %916 = vmatpush1.bf16.msra.mxu0 0
    %917 = vmatprep.subr.bf16.mxu0 0
    %918 = vmatpush1.bf16.msra.mxu0 0
    %919 = vmatprep.subr.bf16.mxu0 0
    %920 = vmatpush1.bf16.msra.mxu0 0
    %921 = vmatprep.subr.bf16.mxu0 0
    %922 = vmatpush1.bf16.msra.mxu0 0
    %923 = vmatprep.subr.bf16.mxu0 0
    %924 = vmatpush1.bf16.msra.mxu0 0
    %925 = vmatprep.subr.bf16.mxu0 0
    %926 = vmatpush1.bf16.msra.mxu0 0
    %927 = vmatprep.subr.bf16.mxu0 0
    %928 = vmatpush1.bf16.msra.mxu0 0
    %929 = vmatprep.subr.bf16.mxu0 0
    %930 = vmatpush1.bf16.msra.mxu0 0
    %931 = vmatprep.mubr.bf16.mxu0 0
    %932 = vmatmul.mubr.bf16.gmra.mrb[0].mxu0 %v802
    %v933 = vpop.f32.mrb[0].mxu0
    %v934 = vadd.f32 %v359, %v933
    %v935 = vpop.f32.mrb[0].mxu0
    %v936 = vadd.f32 %v363, %v935
    %v937 = vpop.f32.mrb[0].mxu0
    %v938 = vpop.f32.mrb[0].mxu0
    %939 = vdwg.mxu0
    %v940 = vmax.f32 %v936, 0.0
    %vm941 = vcmp.ne.f32.partialorder %v936, %v936
    %v942 = vadd.f32 %v936, 0.0
    %v943 = vand.u32 2147483647, %v936
    %v944 = vsub.f32 0.0, %v943
    %v945 = vmul.f32 %v944, 1.442695
    %v946 = vpow.pop %v945
    %v947 = vadd.f32 %v946, 1.0
    %v948 = vlog2.pop %v947
    %v949 = vmul.f32 %v948, 0.6931472
    %v950 = vmul.f32 -0.5, %v946
    %v951 = vadd.f32 %v950, 1.0
    %v952 = vmul.f32 %v951, %v946
    %v953 = vand.u32 2147483647, %v946
    %vm954 = vcmp.lt.f32.partialorder %v953, 0.0004427343
    %v955 = vsel %vm954, %v952, %v949
    %v956 = vadd.f32 %v940, %v955
    %v957 = vsel %vm941, %v942, %v956
    %v958 = vmul.f32 %v322, %v957
    %v959 = vadd.f32 %v934, %v958
    %v960 = vpack.c.bf16 %v959, %v959
    %v961 = vld [vmem:[%s7] sm:$0xf]
    %v962 = vld [vmem:[%s7 + $0x4] sm:$0xf]
    %v963 = vld [vmem:[%s7 + $0x8] sm:$0xf]
    %v964 = vld [vmem:[%s7 + $0xc] sm:$0xf]
    %v965 = vld [vmem:[%s7 + $0x10] sm:$0xf]
    %v966 = vld [vmem:[%s7 + $0x14] sm:$0xf]
    %v967 = vld [vmem:[%s7 + $0x18] sm:$0xf]
    %v968 = vld [vmem:[%s7 + $0x1c] sm:$0xf]
    %v977 = vunpack.c.l.b16 %v961
    %v978 = vunpack.c.l.b16 %v962
    %v979 = vunpack.c.l.b16 %v963
    %v980 = vunpack.c.l.b16 %v964
    %v981 = vunpack.c.l.b16 %v965
    %v982 = vunpack.c.l.b16 %v966
    %v983 = vunpack.c.l.b16 %v967
    %v984 = vunpack.c.l.b16 %v968
    %v985 = vpack.c.b16 %v978, %v977
    %v986 = vpack.c.b16 %v980, %v979
    %v987 = vpack.c.b16 %v982, %v981
    %v988 = vpack.c.b16 %v984, %v983
    %v994 = vsel %vm239, %v960, 0
    %996 = vmatprep.subr.bf16.mxu0 0
    %997 = vmatpush1.bf16.msra.mxu0 %v985
    %998 = vmatprep.subr.bf16.mxu0 0
    %999 = vmatpush1.bf16.msra.mxu0 %v986
    %1000 = vmatprep.subr.bf16.mxu0 0
    %1001 = vmatpush1.bf16.msra.mxu0 %v987
    %1002 = vmatprep.subr.bf16.mxu0 0
    %1003 = vmatpush1.bf16.msra.mxu0 %v988
    %1004 = vmatprep.subr.bf16.mxu0 0
    %1005 = vmatpush1.bf16.msra.mxu0 0
    %1006 = vmatprep.subr.bf16.mxu0 0
    %1007 = vmatpush1.bf16.msra.mxu0 0
    %1008 = vmatprep.subr.bf16.mxu0 0
    %1009 = vmatpush1.bf16.msra.mxu0 0
    %1010 = vmatprep.subr.bf16.mxu0 0
    %1011 = vmatpush1.bf16.msra.mxu0 0
    %1012 = vmatprep.subr.bf16.mxu0 0
    %1013 = vmatpush1.bf16.msra.mxu0 0
    %1014 = vmatprep.subr.bf16.mxu0 0
    %1015 = vmatpush1.bf16.msra.mxu0 0
    %1016 = vmatprep.subr.bf16.mxu0 0
    %1017 = vmatpush1.bf16.msra.mxu0 0
    %1018 = vmatprep.subr.bf16.mxu0 0
    %1019 = vmatpush1.bf16.msra.mxu0 0
    %1020 = vmatprep.subr.bf16.mxu0 0
    %1021 = vmatpush1.bf16.msra.mxu0 0
    %1022 = vmatprep.subr.bf16.mxu0 0
    %1023 = vmatpush1.bf16.msra.mxu0 0
    %1024 = vmatprep.subr.bf16.mxu0 0
    %1025 = vmatpush1.bf16.msra.mxu0 0
    %1026 = vmatprep.subr.bf16.mxu0 0
    %1027 = vmatpush1.bf16.msra.mxu0 0
    %1028 = vmatprep.mubr.bf16.mxu0 0
    %1029 = vmatmul.mubr.bf16.gmra.mrb[0].mxu0 %v994
    %v1030 = vpop.f32.mrb[0].mxu0
    %v1031 = vadd.f32 %v352, %v1030
    %v1032 = vpop.f32.mrb[0].mxu0
    %v1033 = vpop.f32.mrb[0].mxu0
    %v1034 = vpop.f32.mrb[0].mxu0
    %1035 = vdwg.mxu0
    %v1036 = vmax.f32 %v1031, 0.0
    %v1037 = vpack.c.bf16 %v1036, %v1036
    %v1038 = vld [vmem:[%s9] sm:$0xff]
    %v1039 = vld [vmem:[%s9 + $0x8] sm:$0xff]
    %v1040 = vld [vmem:[%s9 + $0x10] sm:$0xff]
    %v1041 = vld [vmem:[%s9 + $0x18] sm:$0xff]
    %v1042 = vld [vmem:[%s9 + $0x20] sm:$0xff]
    %v1043 = vld [vmem:[%s9 + $0x28] sm:$0xff]
    %v1044 = vld [vmem:[%s9 + $0x30] sm:$0xff]
    %v1045 = vld [vmem:[%s9 + $0x38] sm:$0xff]
    %v1054 = vunpack.c.l.b16 %v1038
    %v1055 = vunpack.c.h.b16 %v1038
    %v1056 = vunpack.c.l.b16 %v1039
    %v1057 = vunpack.c.h.b16 %v1039
    %v1058 = vunpack.c.l.b16 %v1040
    %v1059 = vunpack.c.h.b16 %v1040
    %v1060 = vunpack.c.l.b16 %v1041
    %v1061 = vunpack.c.h.b16 %v1041
    %v1062 = vunpack.c.l.b16 %v1042
    %v1063 = vunpack.c.h.b16 %v1042
    %v1064 = vunpack.c.l.b16 %v1043
    %v1065 = vunpack.c.h.b16 %v1043
    %v1066 = vunpack.c.l.b16 %v1044
    %v1067 = vunpack.c.h.b16 %v1044
    %v1068 = vunpack.c.l.b16 %v1045
    %v1069 = vunpack.c.h.b16 %v1045
    %v1070 = vpack.c.b16 %v1056, %v1054
    %v1071 = vpack.c.b16 %v1057, %v1055
    %v1072 = vpack.c.b16 %v1060, %v1058
    %v1073 = vpack.c.b16 %v1061, %v1059
    %v1074 = vpack.c.b16 %v1064, %v1062
    %v1075 = vpack.c.b16 %v1065, %v1063
    %v1076 = vpack.c.b16 %v1068, %v1066
    %v1077 = vpack.c.b16 %v1069, %v1067
    %v1087 = vsel %vm239, %v1037, 0
    %1089 = vmatprep.subr.bf16.mxu0 %v1071
    %1090 = vmatpush1.bf16.msra.mxu0 %v1070
    %1091 = vmatprep.subr.bf16.mxu0 %v1073
    %1092 = vmatpush1.bf16.msra.mxu0 %v1072
    %1093 = vmatprep.subr.bf16.mxu0 %v1075
    %1094 = vmatpush1.bf16.msra.mxu0 %v1074
    %1095 = vmatprep.subr.bf16.mxu0 %v1077
    %1096 = vmatpush1.bf16.msra.mxu0 %v1076
    %1097 = vmatprep.subr.bf16.mxu0 0
    %1098 = vmatpush1.bf16.msra.mxu0 0
    %1099 = vmatprep.subr.bf16.mxu0 0
    %1100 = vmatpush1.bf16.msra.mxu0 0
    %1101 = vmatprep.subr.bf16.mxu0 0
    %1102 = vmatpush1.bf16.msra.mxu0 0
    %1103 = vmatprep.subr.bf16.mxu0 0
    %1104 = vmatpush1.bf16.msra.mxu0 0
    %1105 = vmatprep.subr.bf16.mxu0 0
    %1106 = vmatpush1.bf16.msra.mxu0 0
    %1107 = vmatprep.subr.bf16.mxu0 0
    %1108 = vmatpush1.bf16.msra.mxu0 0
    %1109 = vmatprep.subr.bf16.mxu0 0
    %1110 = vmatpush1.bf16.msra.mxu0 0
    %1111 = vmatprep.subr.bf16.mxu0 0
    %1112 = vmatpush1.bf16.msra.mxu0 0
    %1113 = vmatprep.subr.bf16.mxu0 0
    %1114 = vmatpush1.bf16.msra.mxu0 0
    %1115 = vmatprep.subr.bf16.mxu0 0
    %1116 = vmatpush1.bf16.msra.mxu0 0
    %1117 = vmatprep.subr.bf16.mxu0 0
    %1118 = vmatpush1.bf16.msra.mxu0 0
    %1119 = vmatprep.subr.bf16.mxu0 0
    %1120 = vmatpush1.bf16.msra.mxu0 0
    %1121 = vmatprep.mubr.bf16.mxu0 0
    %1122 = vmatmul.mubr.bf16.gmra.mrb[0].mxu0 %v1087
    %v1123 = vpop.f32.mrb[0].mxu0
    %v1124 = vadd.f32 0.0, %v1123
    %v1125 = vpop.f32.mrb[0].mxu0
    %v1126 = vadd.f32 0.0, %v1125
    %v1127 = vpop.f32.mrb[0].mxu0
    %v1128 = vpop.f32.mrb[0].mxu0
    %1129 = vdwg.mxu0
    %1131 = vrot.lane.b32.xlu0 %v736, 64
    %v1132 = vpop.permute.xlu0 %1131
    %v1134 = vadd.f32 %v1126, %v1132
    %1135 = vrot.lane.b32.xlu0 %v346, 64
    %v1136 = vpop.permute.xlu0 %1135
    %v1138 = vadd.f32 %v1134, %v1136
    %v1139 = vmax.f32 %v1138, 0.0
    %v1140 = vadd.f32 %v287, %v1124
    %v1141 = vadd.f32 %v289, %v1126
    %v1142 = vadd.f32 %v1140, %v371
    %v1143 = vadd.f32 %v1141, %v375
    %v1144 = vadd.f32 %v1142, %v738
    %v1145 = vxor.u32 %v1144, 2147483648
    %v1146 = vmul.f32 %v1145, 1.442695
    %v1147 = vpow.pop %v1146
    %v1148 = vadd.f32 %v1147, 1.0
    %v1149 = vrcp.pop %v1148
    %v1150 = vmul.f32 1.0, %v1149
    %v1151 = vadd.f32 %v777, %v383
    %v1152 = vmul.f32 %v1150, %v1151
    %v1153 = vadd.f32 %v1143, %v1152
    %v1154 = vtanh.pop %v1153
    %v1155 = vsub.f32 1.0, %v1150
    %1157 = vrot.lane.b32.xlu0 %v1154, 64
    %v1158 = vpop.permute.xlu0 %1157
    %v1160 = vmul.f32 %v1155, %v1158
    %v1161 = vmul.f32 %v1150, 0.0
    %v1162 = vadd.f32 %v1160, %v1161
    %v1163 = vpack.c.bf16 %v1162, %v1162
    %v1164 = vld [vmem:[%s20] sm:$0xff]
    %v1165 = vld [vmem:[%s20 + $0x8] sm:$0xff]
    %v1166 = vld [vmem:[%s20 + $0x10] sm:$0xff]
    %v1167 = vld [vmem:[%s20 + $0x18] sm:$0xff]
    %v1168 = vld [vmem:[%s20 + $0x20] sm:$0xff]
    %v1169 = vld [vmem:[%s20 + $0x28] sm:$0xff]
    %v1170 = vld [vmem:[%s20 + $0x30] sm:$0xff]
    %v1171 = vld [vmem:[%s20 + $0x38] sm:$0xff]
    %1173 = vrot.lane.b32.xlu0 %v1163, 64
    %v1174 = vpop.permute.xlu0 %1173
    %v1183 = vunpack.c.l.b16 %v1164
    %v1184 = vunpack.c.h.b16 %v1164
    %v1185 = vunpack.c.l.b16 %v1165
    %v1186 = vunpack.c.h.b16 %v1165
    %v1187 = vunpack.c.l.b16 %v1166
    %v1188 = vunpack.c.h.b16 %v1166
    %v1189 = vunpack.c.l.b16 %v1167
    %v1190 = vunpack.c.h.b16 %v1167
    %v1191 = vunpack.c.l.b16 %v1168
    %v1192 = vunpack.c.h.b16 %v1168
    %v1193 = vunpack.c.l.b16 %v1169
    %v1194 = vunpack.c.h.b16 %v1169
    %v1195 = vunpack.c.l.b16 %v1170
    %v1196 = vunpack.c.h.b16 %v1170
    %v1197 = vunpack.c.l.b16 %v1171
    %v1198 = vunpack.c.h.b16 %v1171
    %v1199 = vpack.c.b16 %v1185, %v1183
    %v1200 = vpack.c.b16 %v1186, %v1184
    %v1201 = vpack.c.b16 %v1189, %v1187
    %v1202 = vpack.c.b16 %v1190, %v1188
    %v1203 = vpack.c.b16 %v1193, %v1191
    %v1204 = vpack.c.b16 %v1194, %v1192
    %v1205 = vpack.c.b16 %v1197, %v1195
    %v1206 = vpack.c.b16 %v1198, %v1196
    %v1216 = vsel %vm239, %v1174, 0
    %1218 = vmatprep.subr.bf16.mxu0 %v1200
    %1219 = vmatpush1.bf16.msra.mxu0 %v1199
    %1220 = vmatprep.subr.bf16.mxu0 %v1202
    %1221 = vmatpush1.bf16.msra.mxu0 %v1201
    %1222 = vmatprep.subr.bf16.mxu0 %v1204
    %1223 = vmatpush1.bf16.msra.mxu0 %v1203
    %1224 = vmatprep.subr.bf16.mxu0 %v1206
    %1225 = vmatpush1.bf16.msra.mxu0 %v1205
    %1226 = vmatprep.subr.bf16.mxu0 0
    %1227 = vmatpush1.bf16.msra.mxu0 0
    %1228 = vmatprep.subr.bf16.mxu0 0
    %1229 = vmatpush1.bf16.msra.mxu0 0
    %1230 = vmatprep.subr.bf16.mxu0 0
    %1231 = vmatpush1.bf16.msra.mxu0 0
    %1232 = vmatprep.subr.bf16.mxu0 0
    %1233 = vmatpush1.bf16.msra.mxu0 0
    %1234 = vmatprep.subr.bf16.mxu0 0
    %1235 = vmatpush1.bf16.msra.mxu0 0
    %1236 = vmatprep.subr.bf16.mxu0 0
    %1237 = vmatpush1.bf16.msra.mxu0 0
    %1238 = vmatprep.subr.bf16.mxu0 0
    %1239 = vmatpush1.bf16.msra.mxu0 0
    %1240 = vmatprep.subr.bf16.mxu0 0
    %1241 = vmatpush1.bf16.msra.mxu0 0
    %1242 = vmatprep.subr.bf16.mxu0 0
    %1243 = vmatpush1.bf16.msra.mxu0 0
    %1244 = vmatprep.subr.bf16.mxu0 0
    %1245 = vmatpush1.bf16.msra.mxu0 0
    %1246 = vmatprep.subr.bf16.mxu0 0
    %1247 = vmatpush1.bf16.msra.mxu0 0
    %1248 = vmatprep.subr.bf16.mxu0 0
    %1249 = vmatpush1.bf16.msra.mxu0 0
    %1250 = vmatprep.mubr.bf16.mxu0 0
    %1251 = vmatmul.mubr.bf16.gmra.mrb[0].mxu0 %v1216
    %v1252 = vpop.f32.mrb[0].mxu0
    %v1253 = vadd.f32 %v390, %v1252
    %v1254 = vpop.f32.mrb[0].mxu0
    %v1255 = vadd.f32 %v394, %v1254
    %v1256 = vpop.f32.mrb[0].mxu0
    %v1257 = vpop.f32.mrb[0].mxu0
    %1258 = vdwg.mxu0
    %v1259 = vadd.f32 %v1253, %v697
    %v1260 = vxor.u32 %v1259, 2147483648
    %v1261 = vmul.f32 %v1260, 1.442695
    %v1262 = vpow.pop %v1261
    %v1263 = vadd.f32 %v1262, 1.0
    %v1264 = vrcp.pop %v1263
    %v1265 = vmul.f32 1.0, %v1264
    %1266 = vrot.lane.b32.xlu0 %v402, 64
    %v1267 = vpop.permute.xlu0 %1266
    %v1269 = vadd.f32 %v736, %v1267
    %1271 = vrot.lane.b32.xlu0 %v1269, 64
    %v1272 = vpop.permute.xlu0 %1271
    %v1274 = vmul.f32 %v1265, %v1272
    %v1275 = vadd.f32 %v1255, %v1274
    %v1276 = vtanh.pop %v1275
    %v1277 = vsub.f32 1.0, %v1265
    %1279 = vrot.lane.b32.xlu0 %v1276, 64
    %v1280 = vpop.permute.xlu0 %1279
    %v1282 = vmul.f32 %v1277, %v1280
    %v1283 = vmul.f32 %v1265, 0.0
    %v1284 = vadd.f32 %v1282, %v1283
    %v1285 = vmul.f32 %v957, %v957
    %v1286 = vrcp.pop %v1285
    %v1287 = vlog2.pop %v957
    %v1288 = vmul.f32 %v1287, 0.6931472
    %1290 = vrot.lane.b32.xlu0 %v1288, 64
    %v1291 = vpop.permute.xlu0 %1290
    %v1293 = vsub.f32 %v1288, %v1291
    %v1294 = vmul.f32 %v1293, 2.0
    %1296 = vrot.lane.b32.xlu0 %v934, 64
    %v1297 = vpop.permute.xlu0 %1296
    %v1299 = vsub.f32 %v934, %v1297
    %v1300 = vmul.f32 %v1299, %v1299
    %v1301 = vadd.f32 %v1285, %v1300
    %1303 = vrot.lane.b32.xlu0 %v1286, 64
    %v1304 = vpop.permute.xlu0 %1303
    %v1306 = vmul.f32 %v1301, %v1304
    %1308 = vrot.lane.b32.xlu0 %v1306, 64
    %v1309 = vpop.permute.xlu0 %1308
    %v1311 = vadd.f32 %v1294, %v1309
    %v1312 = vsub.f32 %v1311, 1.0
    %v1313 = vmul.f32 %v1312, 0.5
    %v1314 = vadd.f32 %v1313, 0.0
    %1316 = vrot.lane.b32.xlu0 %v1284, 64
    %v1317 = vpop.permute.xlu0 %1316
    %v1319 = vsel %vm239, %v1317, %v1162
    %v1320 = vpack.c.bf16 %v1319, %v1319
    %1321 = vmatprep.subr.bf16.mxu0 %v581
    %1322 = vmatpush1.bf16.msra.mxu0 %v580
    %1323 = vmatprep.subr.bf16.mxu0 %v586
    %1324 = vmatpush1.bf16.msra.mxu0 %v585
    %1325 = vmatprep.subr.bf16.mxu0 %v591
    %1326 = vmatpush1.bf16.msra.mxu0 %v590
    %1327 = vmatprep.subr.bf16.mxu0 %v596
    %1328 = vmatpush1.bf16.msra.mxu0 %v595
    %1329 = vmatprep.subr.bf16.mxu0 %v601
    %1330 = vmatpush1.bf16.msra.mxu0 %v600
    %1331 = vmatprep.subr.bf16.mxu0 %v606
    %1332 = vmatpush1.bf16.msra.mxu0 %v605
    %1333 = vmatprep.subr.bf16.mxu0 %v611
    %1334 = vmatpush1.bf16.msra.mxu0 %v610
    %1335 = vmatprep.subr.bf16.mxu0 %v616
    %1336 = vmatpush1.bf16.msra.mxu0 %v615
    %1337 = vmatprep.subr.bf16.mxu0 0
    %1338 = vmatpush1.bf16.msra.mxu0 0
    %1339 = vmatprep.subr.bf16.mxu0 0
    %1340 = vmatpush1.bf16.msra.mxu0 0
    %1341 = vmatprep.subr.bf16.mxu0 0
    %1342 = vmatpush1.bf16.msra.mxu0 0
    %1343 = vmatprep.subr.bf16.mxu0 0
    %1344 = vmatpush1.bf16.msra.mxu0 0
    %1345 = vmatprep.subr.bf16.mxu0 0
    %1346 = vmatpush1.bf16.msra.mxu0 0
    %1347 = vmatprep.subr.bf16.mxu0 0
    %1348 = vmatpush1.bf16.msra.mxu0 0
    %1349 = vmatprep.subr.bf16.mxu0 0
    %1350 = vmatpush1.bf16.msra.mxu0 0
    %1351 = vmatprep.subr.bf16.mxu0 0
    %1352 = vmatpush1.bf16.msra.mxu0 0
    %1353 = vmatprep.mubr.bf16.mxu0 0
    %1354 = vmatmul.mubr.bf16.gmra.mrb[0].mxu0 %v1320
    %v1355 = vpop.f32.mrb[0].mxu0
    %v1356 = vadd.f32 0.0, %v1355
    %v1357 = vpop.f32.mrb[0].mxu0
    %v1358 = vadd.f32 0.0, %v1357
    %v1359 = vpop.f32.mrb[0].mxu0
    %v1360 = vpop.f32.mrb[0].mxu0
    %1361 = vdwg.mxu0
    %1362 = vmatprep.subr.bf16.mxu0 %v583
    %1363 = vmatpush1.bf16.msra.mxu0 %v582
    %1364 = vmatprep.subr.bf16.mxu0 %v588
    %1365 = vmatpush1.bf16.msra.mxu0 %v587
    %1366 = vmatprep.subr.bf16.mxu0 %v593
    %1367 = vmatpush1.bf16.msra.mxu0 %v592
    %1368 = vmatprep.subr.bf16.mxu0 %v598
    %1369 = vmatpush1.bf16.msra.mxu0 %v597
    %1370 = vmatprep.subr.bf16.mxu0 %v603
    %1371 = vmatpush1.bf16.msra.mxu0 %v602
    %1372 = vmatprep.subr.bf16.mxu0 %v608
    %1373 = vmatpush1.bf16.msra.mxu0 %v607
    %1374 = vmatprep.subr.bf16.mxu0 %v613
    %1375 = vmatpush1.bf16.msra.mxu0 %v612
    %1376 = vmatprep.subr.bf16.mxu0 %v618
    %1377 = vmatpush1.bf16.msra.mxu0 %v617
    %1378 = vmatprep.subr.bf16.mxu0 0
    %1379 = vmatpush1.bf16.msra.mxu0 0
    %1380 = vmatprep.subr.bf16.mxu0 0
    %1381 = vmatpush1.bf16.msra.mxu0 0
    %1382 = vmatprep.subr.bf16.mxu0 0
    %1383 = vmatpush1.bf16.msra.mxu0 0
    %1384 = vmatprep.subr.bf16.mxu0 0
    %1385 = vmatpush1.bf16.msra.mxu0 0
    %1386 = vmatprep.subr.bf16.mxu0 0
    %1387 = vmatpush1.bf16.msra.mxu0 0
    %1388 = vmatprep.subr.bf16.mxu0 0
    %1389 = vmatpush1.bf16.msra.mxu0 0
    %1390 = vmatprep.subr.bf16.mxu0 0
    %1391 = vmatpush1.bf16.msra.mxu0 0
    %1392 = vmatprep.subr.bf16.mxu0 0
    %1393 = vmatpush1.bf16.msra.mxu0 0
    %1394 = vmatprep.mubr.bf16.mxu0 0
    %1395 = vmatmul.mubr.bf16.gmra.mrb[0].mxu0 %v1320
    %v1396 = vpop.f32.mrb[0].mxu0
    %v1397 = vadd.f32 0.0, %v1396
    %v1398 = vpop.f32.mrb[0].mxu0
    %v1399 = vadd.f32 0.0, %v1398
    %v1400 = vpop.f32.mrb[0].mxu0
    %v1401 = vpop.f32.mrb[0].mxu0
    %1402 = vdwg.mxu0
    %1403 = vmatprep.subr.bf16.mxu0 0
    %1404 = vmatpush1.bf16.msra.mxu0 %v584
    %1405 = vmatprep.subr.bf16.mxu0 0
    %1406 = vmatpush1.bf16.msra.mxu0 %v589
    %1407 = vmatprep.subr.bf16.mxu0 0
    %1408 = vmatpush1.bf16.msra.mxu0 %v594
    %1409 = vmatprep.subr.bf16.mxu0 0
    %1410 = vmatpush1.bf16.msra.mxu0 %v599
    %1411 = vmatprep.subr.bf16.mxu0 0
    %1412 = vmatpush1.bf16.msra.mxu0 %v604
    %1413 = vmatprep.subr.bf16.mxu0 0
    %1414 = vmatpush1.bf16.msra.mxu0 %v609
    %1415 = vmatprep.subr.bf16.mxu0 0
    %1416 = vmatpush1.bf16.msra.mxu0 %v614
    %1417 = vmatprep.subr.bf16.mxu0 0
    %1418 = vmatpush1.bf16.msra.mxu0 %v619
    %1419 = vmatprep.subr.bf16.mxu0 0
    %1420 = vmatpush1.bf16.msra.mxu0 0
    %1421 = vmatprep.subr.bf16.mxu0 0
    %1422 = vmatpush1.bf16.msra.mxu0 0
    %1423 = vmatprep.subr.bf16.mxu0 0
    %1424 = vmatpush1.bf16.msra.mxu0 0
    %1425 = vmatprep.subr.bf16.mxu0 0
    %1426 = vmatpush1.bf16.msra.mxu0 0
    %1427 = vmatprep.subr.bf16.mxu0 0
    %1428 = vmatpush1.bf16.msra.mxu0 0
    %1429 = vmatprep.subr.bf16.mxu0 0
    %1430 = vmatpush1.bf16.msra.mxu0 0
    %1431 = vmatprep.subr.bf16.mxu0 0
    %1432 = vmatpush1.bf16.msra.mxu0 0
    %1433 = vmatprep.subr.bf16.mxu0 0
    %1434 = vmatpush1.bf16.msra.mxu0 0
    %1435 = vmatprep.mubr.bf16.mxu0 0
    %1436 = vmatmul.mubr.bf16.gmra.mrb[0].mxu0 %v1320
    %v1437 = vpop.f32.mrb[0].mxu0
    %v1438 = vadd.f32 0.0, %v1437
    %v1439 = vpop.f32.mrb[0].mxu0
    %v1440 = vpop.f32.mrb[0].mxu0
    %v1441 = vpop.f32.mrb[0].mxu0
    %1442 = vdwg.mxu0
    %1444 = vrot.lane.b32.xlu0 %v1356, 64
    %v1445 = vpop.permute.xlu0 %1444
    %v1447 = vadd.f32 %v293, %v1445
    %v1448 = vadd.f32 %v1447, %v788
    %v1449 = vmax.f32 %v1448, 0.0
    %v1450 = vadd.f32 %v1356, %v793
    %v1451 = vmax.f32 %v1450, 0.0
    %1453 = vrot.lane.b32.xlu0 %v1449, 64
    %v1454 = vpop.permute.xlu0 %1453
    %v1456 = vsel %vm239, %v1454, %v1451
    %v1457 = vpack.c.bf16 %v1456, %v1456
    %1458 = vmatprep.subr.bf16.mxu0 %v868
    %1459 = vmatpush1.bf16.msra.mxu0 %v867
    %1460 = vmatprep.subr.bf16.mxu0 %v870
    %1461 = vmatpush1.bf16.msra.mxu0 %v869
    %1462 = vmatprep.subr.bf16.mxu0 %v872
    %1463 = vmatpush1.bf16.msra.mxu0 %v871
    %1464 = vmatprep.subr.bf16.mxu0 %v874
    %1465 = vmatpush1.bf16.msra.mxu0 %v873
    %1466 = vmatprep.subr.bf16.mxu0 %v876
    %1467 = vmatpush1.bf16.msra.mxu0 %v875
    %1468 = vmatprep.subr.bf16.mxu0 %v878
    %1469 = vmatpush1.bf16.msra.mxu0 %v877
    %1470 = vmatprep.subr.bf16.mxu0 %v880
    %1471 = vmatpush1.bf16.msra.mxu0 %v879
    %1472 = vmatprep.subr.bf16.mxu0 %v882
    %1473 = vmatpush1.bf16.msra.mxu0 %v881
    %1474 = vmatprep.subr.bf16.mxu0 0
    %1475 = vmatpush1.bf16.msra.mxu0 0
    %1476 = vmatprep.subr.bf16.mxu0 0
    %1477 = vmatpush1.bf16.msra.mxu0 0
    %1478 = vmatprep.subr.bf16.mxu0 0
    %1479 = vmatpush1.bf16.msra.mxu0 0
    %1480 = vmatprep.subr.bf16.mxu0 0
    %1481 = vmatpush1.bf16.msra.mxu0 0
    %1482 = vmatprep.subr.bf16.mxu0 0
    %1483 = vmatpush1.bf16.msra.mxu0 0
    %1484 = vmatprep.subr.bf16.mxu0 0
    %1485 = vmatpush1.bf16.msra.mxu0 0
    %1486 = vmatprep.subr.bf16.mxu0 0
    %1487 = vmatpush1.bf16.msra.mxu0 0
    %1488 = vmatprep.subr.bf16.mxu0 0
    %1489 = vmatpush1.bf16.msra.mxu0 0
    %1490 = vmatprep.mubr.bf16.mxu0 0
    %1491 = vmatmul.mubr.bf16.gmra.mrb[0].mxu0 %v1457
    %v1492 = vpop.f32.mrb[0].mxu0
    %v1493 = vadd.f32 %v359, %v1492
    %v1494 = vpop.f32.mrb[0].mxu0
    %v1495 = vadd.f32 %v363, %v1494
    %v1496 = vpop.f32.mrb[0].mxu0
    %v1497 = vpop.f32.mrb[0].mxu0
    %1498 = vdwg.mxu0
    %v1499 = vmax.f32 %v1495, 0.0
    %vm1500 = vcmp.ne.f32.partialorder %v1495, %v1495
    %v1501 = vadd.f32 %v1495, 0.0
    %v1502 = vand.u32 2147483647, %v1495
    %v1503 = vsub.f32 0.0, %v1502
    %v1504 = vmul.f32 %v1503, 1.442695
    %v1505 = vpow.pop %v1504
    %v1506 = vadd.f32 %v1505, 1.0
    %v1507 = vlog2.pop %v1506
    %v1508 = vmul.f32 %v1507, 0.6931472
    %v1509 = vmul.f32 -0.5, %v1505
    %v1510 = vadd.f32 %v1509, 1.0
    %v1511 = vmul.f32 %v1510, %v1505
    %v1512 = vand.u32 2147483647, %v1505
    %vm1513 = vcmp.lt.f32.partialorder %v1512, 0.0004427343
    %v1514 = vsel %vm1513, %v1511, %v1508
    %v1515 = vadd.f32 %v1499, %v1514
    %v1516 = vsel %vm1500, %v1501, %v1515
    %v1517 = vmul.f32 %v323, %v1516
    %v1518 = vadd.f32 %v1493, %v1517
    %v1519 = vpack.c.bf16 %v1518, %v1518
    %v1521 = vsel %vm239, %v1519, 0
    %1523 = vmatprep.subr.bf16.mxu0 0
    %1524 = vmatpush1.bf16.msra.mxu0 %v985
    %1525 = vmatprep.subr.bf16.mxu0 0
    %1526 = vmatpush1.bf16.msra.mxu0 %v986
    %1527 = vmatprep.subr.bf16.mxu0 0
    %1528 = vmatpush1.bf16.msra.mxu0 %v987
    %1529 = vmatprep.subr.bf16.mxu0 0
    %1530 = vmatpush1.bf16.msra.mxu0 %v988
    %1531 = vmatprep.subr.bf16.mxu0 0
    %1532 = vmatpush1.bf16.msra.mxu0 0
    %1533 = vmatprep.subr.bf16.mxu0 0
    %1534 = vmatpush1.bf16.msra.mxu0 0
    %1535 = vmatprep.subr.bf16.mxu0 0
    %1536 = vmatpush1.bf16.msra.mxu0 0
    %1537 = vmatprep.subr.bf16.mxu0 0
    %1538 = vmatpush1.bf16.msra.mxu0 0
    %1539 = vmatprep.subr.bf16.mxu0 0
    %1540 = vmatpush1.bf16.msra.mxu0 0
    %1541 = vmatprep.subr.bf16.mxu0 0
    %1542 = vmatpush1.bf16.msra.mxu0 0
    %1543 = vmatprep.subr.bf16.mxu0 0
    %1544 = vmatpush1.bf16.msra.mxu0 0
    %1545 = vmatprep.subr.bf16.mxu0 0
    %1546 = vmatpush1.bf16.msra.mxu0 0
    %1547 = vmatprep.subr.bf16.mxu0 0
    %1548 = vmatpush1.bf16.msra.mxu0 0
    %1549 = vmatprep.subr.bf16.mxu0 0
    %1550 = vmatpush1.bf16.msra.mxu0 0
    %1551 = vmatprep.subr.bf16.mxu0 0
    %1552 = vmatpush1.bf16.msra.mxu0 0
    %1553 = vmatprep.subr.bf16.mxu0 0
    %1554 = vmatpush1.bf16.msra.mxu0 0
    %1555 = vmatprep.mubr.bf16.mxu0 0
    %1556 = vmatmul.mubr.bf16.gmra.mrb[0].mxu0 %v1521
    %v1557 = vpop.f32.mrb[0].mxu0
    %v1558 = vadd.f32 %v352, %v1557
    %v1559 = vpop.f32.mrb[0].mxu0
    %v1560 = vpop.f32.mrb[0].mxu0
    %v1561 = vpop.f32.mrb[0].mxu0
    %1562 = vdwg.mxu0
    %v1563 = vmax.f32 %v1558, 0.0
    %v1564 = vpack.c.bf16 %v1563, %v1563
    %v1566 = vsel %vm239, %v1564, 0
    %1568 = vmatprep.subr.bf16.mxu0 %v1071
    %1569 = vmatpush1.bf16.msra.mxu0 %v1070
    %1570 = vmatprep.subr.bf16.mxu0 %v1073
    %1571 = vmatpush1.bf16.msra.mxu0 %v1072
    %1572 = vmatprep.subr.bf16.mxu0 %v1075
    %1573 = vmatpush1.bf16.msra.mxu0 %v1074
    %1574 = vmatprep.subr.bf16.mxu0 %v1077
    %1575 = vmatpush1.bf16.msra.mxu0 %v1076
    %1576 = vmatprep.subr.bf16.mxu0 0
    %1577 = vmatpush1.bf16.msra.mxu0 0
    %1578 = vmatprep.subr.bf16.mxu0 0
    %1579 = vmatpush1.bf16.msra.mxu0 0
    %1580 = vmatprep.subr.bf16.mxu0 0
    %1581 = vmatpush1.bf16.msra.mxu0 0
    %1582 = vmatprep.subr.bf16.mxu0 0
    %1583 = vmatpush1.bf16.msra.mxu0 0
    %1584 = vmatprep.subr.bf16.mxu0 0
    %1585 = vmatpush1.bf16.msra.mxu0 0
    %1586 = vmatprep.subr.bf16.mxu0 0
    %1587 = vmatpush1.bf16.msra.mxu0 0
    %1588 = vmatprep.subr.bf16.mxu0 0
    %1589 = vmatpush1.bf16.msra.mxu0 0
    %1590 = vmatprep.subr.bf16.mxu0 0
    %1591 = vmatpush1.bf16.msra.mxu0 0
    %1592 = vmatprep.subr.bf16.mxu0 0
    %1593 = vmatpush1.bf16.msra.mxu0 0
    %1594 = vmatprep.subr.bf16.mxu0 0
    %1595 = vmatpush1.bf16.msra.mxu0 0
    %1596 = vmatprep.subr.bf16.mxu0 0
    %1597 = vmatpush1.bf16.msra.mxu0 0
    %1598 = vmatprep.subr.bf16.mxu0 0
    %1599 = vmatpush1.bf16.msra.mxu0 0
    %1600 = vmatprep.mubr.bf16.mxu0 0
    %1601 = vmatmul.mubr.bf16.gmra.mrb[0].mxu0 %v1566
    %v1602 = vpop.f32.mrb[0].mxu0
    %v1603 = vadd.f32 0.0, %v1602
    %v1604 = vpop.f32.mrb[0].mxu0
    %v1605 = vadd.f32 0.0, %v1604
    %v1606 = vpop.f32.mrb[0].mxu0
    %v1607 = vpop.f32.mrb[0].mxu0
    %1608 = vdwg.mxu0
    %1610 = vrot.lane.b32.xlu0 %v1397, 64
    %v1611 = vpop.permute.xlu0 %1610
    %v1613 = vadd.f32 %v1605, %v1611
    %v1614 = vadd.f32 %v1613, %v1136
    %v1615 = vmax.f32 %v1614, 0.0
    %v1616 = vadd.f32 %v291, %v1603
    %v1617 = vadd.f32 %v293, %v1605
    %v1618 = vadd.f32 %v1616, %v371
    %v1619 = vadd.f32 %v1617, %v375
    %v1620 = vadd.f32 %v1618, %v1399
    %v1621 = vxor.u32 %v1620, 2147483648
    %v1622 = vmul.f32 %v1621, 1.442695
    %v1623 = vpow.pop %v1622
    %v1624 = vadd.f32 %v1623, 1.0
    %v1625 = vrcp.pop %v1624
    %v1626 = vmul.f32 1.0, %v1625
    %v1627 = vadd.f32 %v1438, %v383
    %v1628 = vmul.f32 %v1626, %v1627
    %v1629 = vadd.f32 %v1619, %v1628
    %v1630 = vtanh.pop %v1629
    %v1631 = vsub.f32 1.0, %v1626
    %1633 = vrot.lane.b32.xlu0 %v1630, 64
    %v1634 = vpop.permute.xlu0 %1633
    %v1636 = vmul.f32 %v1631, %v1634
    %v1637 = vmul.f32 %v1626, %v1162
    %v1638 = vadd.f32 %v1636, %v1637
    %v1639 = vpack.c.bf16 %v1638, %v1638
    %1641 = vrot.lane.b32.xlu0 %v1639, 64
    %v1642 = vpop.permute.xlu0 %1641
    %v1644 = vsel %vm239, %v1642, 0
    %1646 = vmatprep.subr.bf16.mxu0 %v1200
    %1647 = vmatpush1.bf16.msra.mxu0 %v1199
    %1648 = vmatprep.subr.bf16.mxu0 %v1202
    %1649 = vmatpush1.bf16.msra.mxu0 %v1201
    %1650 = vmatprep.subr.bf16.mxu0 %v1204
    %1651 = vmatpush1.bf16.msra.mxu0 %v1203
    %1652 = vmatprep.subr.bf16.mxu0 %v1206
    %1653 = vmatpush1.bf16.msra.mxu0 %v1205
    %1654 = vmatprep.subr.bf16.mxu0 0
    %1655 = vmatpush1.bf16.msra.mxu0 0
    %1656 = vmatprep.subr.bf16.mxu0 0
    %1657 = vmatpush1.bf16.msra.mxu0 0
    %1658 = vmatprep.subr.bf16.mxu0 0
    %1659 = vmatpush1.bf16.msra.mxu0 0
    %1660 = vmatprep.subr.bf16.mxu0 0
    %1661 = vmatpush1.bf16.msra.mxu0 0
    %1662 = vmatprep.subr.bf16.mxu0 0
    %1663 = vmatpush1.bf16.msra.mxu0 0
    %1664 = vmatprep.subr.bf16.mxu0 0
    %1665 = vmatpush1.bf16.msra.mxu0 0
    %1666 = vmatprep.subr.bf16.mxu0 0
    %1667 = vmatpush1.bf16.msra.mxu0 0
    %1668 = vmatprep.subr.bf16.mxu0 0
    %1669 = vmatpush1.bf16.msra.mxu0 0
    %1670 = vmatprep.subr.bf16.mxu0 0
    %1671 = vmatpush1.bf16.msra.mxu0 0
    %1672 = vmatprep.subr.bf16.mxu0 0
    %1673 = vmatpush1.bf16.msra.mxu0 0
    %1674 = vmatprep.subr.bf16.mxu0 0
    %1675 = vmatpush1.bf16.msra.mxu0 0
    %1676 = vmatprep.subr.bf16.mxu0 0
    %1677 = vmatpush1.bf16.msra.mxu0 0
    %1678 = vmatprep.mubr.bf16.mxu0 0
    %1679 = vmatmul.mubr.bf16.gmra.mrb[0].mxu0 %v1644
    %v1680 = vpop.f32.mrb[0].mxu0
    %v1681 = vadd.f32 %v390, %v1680
    %v1682 = vpop.f32.mrb[0].mxu0
    %v1683 = vadd.f32 %v394, %v1682
    %v1684 = vpop.f32.mrb[0].mxu0
    %v1685 = vpop.f32.mrb[0].mxu0
    %1686 = vdwg.mxu0
    %v1687 = vadd.f32 %v1681, %v1358
    %v1688 = vxor.u32 %v1687, 2147483648
    %v1689 = vmul.f32 %v1688, 1.442695
    %v1690 = vpow.pop %v1689
    %v1691 = vadd.f32 %v1690, 1.0
    %v1692 = vrcp.pop %v1691
    %v1693 = vmul.f32 1.0, %v1692
    %v1694 = vadd.f32 %v1397, %v1267
    %1696 = vrot.lane.b32.xlu0 %v1694, 64
    %v1697 = vpop.permute.xlu0 %1696
    %v1699 = vmul.f32 %v1693, %v1697
    %v1700 = vadd.f32 %v1683, %v1699
    %v1701 = vtanh.pop %v1700
    %v1702 = vsub.f32 1.0, %v1693
    %1704 = vrot.lane.b32.xlu0 %v1701, 64
    %v1705 = vpop.permute.xlu0 %1704
    %v1707 = vmul.f32 %v1702, %v1705
    %v1708 = vmul.f32 %v1693, %v1284
    %v1709 = vadd.f32 %v1707, %v1708
    %v1710 = vmul.f32 %v1516, %v1516
    %v1711 = vrcp.pop %v1710
    %v1712 = vlog2.pop %v1516
    %v1713 = vmul.f32 %v1712, 0.6931472
    %1715 = vrot.lane.b32.xlu0 %v1713, 64
    %v1716 = vpop.permute.xlu0 %1715
    %v1718 = vsub.f32 %v1713, %v1716
    %v1719 = vmul.f32 %v1718, 2.0
    %1721 = vrot.lane.b32.xlu0 %v1493, 64
    %v1722 = vpop.permute.xlu0 %1721
    %v1724 = vsub.f32 %v1493, %v1722
    %v1725 = vmul.f32 %v1724, %v1724
    %v1726 = vadd.f32 %v1710, %v1725
    %1728 = vrot.lane.b32.xlu0 %v1711, 64
    %v1729 = vpop.permute.xlu0 %1728
    %v1731 = vmul.f32 %v1726, %v1729
    %1733 = vrot.lane.b32.xlu0 %v1731, 64
    %v1734 = vpop.permute.xlu0 %1733
    %v1736 = vadd.f32 %v1719, %v1734
    %v1737 = vsub.f32 %v1736, 1.0
    %v1738 = vmul.f32 %v1737, 0.5
    %v1739 = vadd.f32 %v1314, %v1738
    %1741 = vrot.lane.b32.xlu0 %v1709, 64
    %v1742 = vpop.permute.xlu0 %1741
    %v1744 = vsel %vm239, %v1742, %v1638
    %v1745 = vpack.c.bf16 %v1744, %v1744
    %1746 = vmatprep.subr.bf16.mxu0 %v581
    %1747 = vmatpush1.bf16.msra.mxu0 %v580
    %1748 = vmatprep.subr.bf16.mxu0 %v586
    %1749 = vmatpush1.bf16.msra.mxu0 %v585
    %1750 = vmatprep.subr.bf16.mxu0 %v591
    %1751 = vmatpush1.bf16.msra.mxu0 %v590
    %1752 = vmatprep.subr.bf16.mxu0 %v596
    %1753 = vmatpush1.bf16.msra.mxu0 %v595
    %1754 = vmatprep.subr.bf16.mxu0 %v601
    %1755 = vmatpush1.bf16.msra.mxu0 %v600
    %1756 = vmatprep.subr.bf16.mxu0 %v606
    %1757 = vmatpush1.bf16.msra.mxu0 %v605
    %1758 = vmatprep.subr.bf16.mxu0 %v611
    %1759 = vmatpush1.bf16.msra.mxu0 %v610
    %1760 = vmatprep.subr.bf16.mxu0 %v616
    %1761 = vmatpush1.bf16.msra.mxu0 %v615
    %1762 = vmatprep.subr.bf16.mxu0 0
    %1763 = vmatpush1.bf16.msra.mxu0 0
    %1764 = vmatprep.subr.bf16.mxu0 0
    %1765 = vmatpush1.bf16.msra.mxu0 0
    %1766 = vmatprep.subr.bf16.mxu0 0
    %1767 = vmatpush1.bf16.msra.mxu0 0
    %1768 = vmatprep.subr.bf16.mxu0 0
    %1769 = vmatpush1.bf16.msra.mxu0 0
    %1770 = vmatprep.subr.bf16.mxu0 0
    %1771 = vmatpush1.bf16.msra.mxu0 0
    %1772 = vmatprep.subr.bf16.mxu0 0
    %1773 = vmatpush1.bf16.msra.mxu0 0
    %1774 = vmatprep.subr.bf16.mxu0 0
    %1775 = vmatpush1.bf16.msra.mxu0 0
    %1776 = vmatprep.subr.bf16.mxu0 0
    %1777 = vmatpush1.bf16.msra.mxu0 0
    %1778 = vmatprep.mubr.bf16.mxu0 0
    %1779 = vmatmul.mubr.bf16.gmra.mrb[0].mxu0 %v1745
    %v1780 = vpop.f32.mrb[0].mxu0
    %v1781 = vadd.f32 0.0, %v1780
    %v1782 = vpop.f32.mrb[0].mxu0
    %v1783 = vadd.f32 0.0, %v1782
    %v1784 = vpop.f32.mrb[0].mxu0
    %v1785 = vpop.f32.mrb[0].mxu0
    %1786 = vdwg.mxu0
    %1787 = vmatprep.subr.bf16.mxu0 %v583
    %1788 = vmatpush1.bf16.msra.mxu0 %v582
    %1789 = vmatprep.subr.bf16.mxu0 %v588
    %1790 = vmatpush1.bf16.msra.mxu0 %v587
    %1791 = vmatprep.subr.bf16.mxu0 %v593
    %1792 = vmatpush1.bf16.msra.mxu0 %v592
    %1793 = vmatprep.subr.bf16.mxu0 %v598
    %1794 = vmatpush1.bf16.msra.mxu0 %v597
    %1795 = vmatprep.subr.bf16.mxu0 %v603
    %1796 = vmatpush1.bf16.msra.mxu0 %v602
    %1797 = vmatprep.subr.bf16.mxu0 %v608
    %1798 = vmatpush1.bf16.msra.mxu0 %v607
    %1799 = vmatprep.subr.bf16.mxu0 %v613
    %1800 = vmatpush1.bf16.msra.mxu0 %v612
    %1801 = vmatprep.subr.bf16.mxu0 %v618
    %1802 = vmatpush1.bf16.msra.mxu0 %v617
    %1803 = vmatprep.subr.bf16.mxu0 0
    %1804 = vmatpush1.bf16.msra.mxu0 0
    %1805 = vmatprep.subr.bf16.mxu0 0
    %1806 = vmatpush1.bf16.msra.mxu0 0
    %1807 = vmatprep.subr.bf16.mxu0 0
    %1808 = vmatpush1.bf16.msra.mxu0 0
    %1809 = vmatprep.subr.bf16.mxu0 0
    %1810 = vmatpush1.bf16.msra.mxu0 0
    %1811 = vmatprep.subr.bf16.mxu0 0
    %1812 = vmatpush1.bf16.msra.mxu0 0
    %1813 = vmatprep.subr.bf16.mxu0 0
    %1814 = vmatpush1.bf16.msra.mxu0 0
    %1815 = vmatprep.subr.bf16.mxu0 0
    %1816 = vmatpush1.bf16.msra.mxu0 0
    %1817 = vmatprep.subr.bf16.mxu0 0
    %1818 = vmatpush1.bf16.msra.mxu0 0
    %1819 = vmatprep.mubr.bf16.mxu0 0
    %1820 = vmatmul.mubr.bf16.gmra.mrb[0].mxu0 %v1745
    %v1821 = vpop.f32.mrb[0].mxu0
    %v1822 = vadd.f32 0.0, %v1821
    %v1823 = vpop.f32.mrb[0].mxu0
    %v1824 = vadd.f32 0.0, %v1823
    %v1825 = vpop.f32.mrb[0].mxu0
    %v1826 = vpop.f32.mrb[0].mxu0
    %1827 = vdwg.mxu0
    %1828 = vmatprep.subr.bf16.mxu0 0
    %1829 = vmatpush1.bf16.msra.mxu0 %v584
    %1830 = vmatprep.subr.bf16.mxu0 0
    %1831 = vmatpush1.bf16.msra.mxu0 %v589
    %1832 = vmatprep.subr.bf16.mxu0 0
    %1833 = vmatpush1.bf16.msra.mxu0 %v594
    %1834 = vmatprep.subr.bf16.mxu0 0
    %1835 = vmatpush1.bf16.msra.mxu0 %v599
    %1836 = vmatprep.subr.bf16.mxu0 0
    %1837 = vmatpush1.bf16.msra.mxu0 %v604
    %1838 = vmatprep.subr.bf16.mxu0 0
    %1839 = vmatpush1.bf16.msra.mxu0 %v609
    %1840 = vmatprep.subr.bf16.mxu0 0
    %1841 = vmatpush1.bf16.msra.mxu0 %v614
    %1842 = vmatprep.subr.bf16.mxu0 0
    %1843 = vmatpush1.bf16.msra.mxu0 %v619
    %1844 = vmatprep.subr.bf16.mxu0 0
    %1845 = vmatpush1.bf16.msra.mxu0 0
    %1846 = vmatprep.subr.bf16.mxu0 0
    %1847 = vmatpush1.bf16.msra.mxu0 0
    %1848 = vmatprep.subr.bf16.mxu0 0
    %1849 = vmatpush1.bf16.msra.mxu0 0
    %1850 = vmatprep.subr.bf16.mxu0 0
    %1851 = vmatpush1.bf16.msra.mxu0 0
    %1852 = vmatprep.subr.bf16.mxu0 0
    %1853 = vmatpush1.bf16.msra.mxu0 0
    %1854 = vmatprep.subr.bf16.mxu0 0
    %1855 = vmatpush1.bf16.msra.mxu0 0
    %1856 = vmatprep.subr.bf16.mxu0 0
    %1857 = vmatpush1.bf16.msra.mxu0 0
    %1858 = vmatprep.subr.bf16.mxu0 0
    %1859 = vmatpush1.bf16.msra.mxu0 0
    %1860 = vmatprep.mubr.bf16.mxu0 0
    %1861 = vmatmul.mubr.bf16.gmra.mrb[0].mxu0 %v1745
    %v1862 = vpop.f32.mrb[0].mxu0
    %v1863 = vadd.f32 0.0, %v1862
    %v1864 = vpop.f32.mrb[0].mxu0
    %v1865 = vpop.f32.mrb[0].mxu0
    %v1866 = vpop.f32.mrb[0].mxu0
    %1867 = vdwg.mxu0
    %1869 = vrot.lane.b32.xlu0 %v1781, 64
    %v1870 = vpop.permute.xlu0 %1869
    %v1872 = vadd.f32 %v299, %v1870
    %v1873 = vadd.f32 %v1872, %v788
    %v1874 = vmax.f32 %v1873, 0.0
    %v1875 = vadd.f32 %v1781, %v793
    %v1876 = vmax.f32 %v1875, 0.0
    %1878 = vrot.lane.b32.xlu0 %v1874, 64
    %v1879 = vpop.permute.xlu0 %1878
    %v1881 = vsel %vm239, %v1879, %v1876
    %v1882 = vpack.c.bf16 %v1881, %v1881
    %1883 = vmatprep.subr.bf16.mxu0 %v868
    %1884 = vmatpush1.bf16.msra.mxu0 %v867
    %1885 = vmatprep.subr.bf16.mxu0 %v870
    %1886 = vmatpush1.bf16.msra.mxu0 %v869
    %1887 = vmatprep.subr.bf16.mxu0 %v872
    %1888 = vmatpush1.bf16.msra.mxu0 %v871
    %1889 = vmatprep.subr.bf16.mxu0 %v874
    %1890 = vmatpush1.bf16.msra.mxu0 %v873
    %1891 = vmatprep.subr.bf16.mxu0 %v876
    %1892 = vmatpush1.bf16.msra.mxu0 %v875
    %1893 = vmatprep.subr.bf16.mxu0 %v878
    %1894 = vmatpush1.bf16.msra.mxu0 %v877
    %1895 = vmatprep.subr.bf16.mxu0 %v880
    %1896 = vmatpush1.bf16.msra.mxu0 %v879
    %1897 = vmatprep.subr.bf16.mxu0 %v882
    %1898 = vmatpush1.bf16.msra.mxu0 %v881
    %1899 = vmatprep.subr.bf16.mxu0 0
    %1900 = vmatpush1.bf16.msra.mxu0 0
    %1901 = vmatprep.subr.bf16.mxu0 0
    %1902 = vmatpush1.bf16.msra.mxu0 0
    %1903 = vmatprep.subr.bf16.mxu0 0
    %1904 = vmatpush1.bf16.msra.mxu0 0
    %1905 = vmatprep.subr.bf16.mxu0 0
    %1906 = vmatpush1.bf16.msra.mxu0 0
    %1907 = vmatprep.subr.bf16.mxu0 0
    %1908 = vmatpush1.bf16.msra.mxu0 0
    %1909 = vmatprep.subr.bf16.mxu0 0
    %1910 = vmatpush1.bf16.msra.mxu0 0
    %1911 = vmatprep.subr.bf16.mxu0 0
    %1912 = vmatpush1.bf16.msra.mxu0 0
    %1913 = vmatprep.subr.bf16.mxu0 0
    %1914 = vmatpush1.bf16.msra.mxu0 0
    %1915 = vmatprep.mubr.bf16.mxu0 0
    %1916 = vmatmul.mubr.bf16.gmra.mrb[0].mxu0 %v1882
    %v1917 = vpop.f32.mrb[0].mxu0
    %v1918 = vadd.f32 %v359, %v1917
    %v1919 = vpop.f32.mrb[0].mxu0
    %v1920 = vadd.f32 %v363, %v1919
    %v1921 = vpop.f32.mrb[0].mxu0
    %v1922 = vpop.f32.mrb[0].mxu0
    %1923 = vdwg.mxu0
    %v1924 = vmax.f32 %v1920, 0.0
    %vm1925 = vcmp.ne.f32.partialorder %v1920, %v1920
    %v1926 = vadd.f32 %v1920, 0.0
    %v1927 = vand.u32 2147483647, %v1920
    %v1928 = vsub.f32 0.0, %v1927
    %v1929 = vmul.f32 %v1928, 1.442695
    %v1930 = vpow.pop %v1929
    %v1931 = vadd.f32 %v1930, 1.0
    %v1932 = vlog2.pop %v1931
    %v1933 = vmul.f32 %v1932, 0.6931472
    %v1934 = vmul.f32 -0.5, %v1930
    %v1935 = vadd.f32 %v1934, 1.0
    %v1936 = vmul.f32 %v1935, %v1930
    %v1937 = vand.u32 2147483647, %v1930
    %vm1938 = vcmp.lt.f32.partialorder %v1937, 0.0004427343
    %v1939 = vsel %vm1938, %v1936, %v1933
    %v1940 = vadd.f32 %v1924, %v1939
    %v1941 = vsel %vm1925, %v1926, %v1940
    %v1942 = vmul.f32 %v324, %v1941
    %v1943 = vadd.f32 %v1918, %v1942
    %v1944 = vpack.c.bf16 %v1943, %v1943
    %v1946 = vsel %vm239, %v1944, 0
    %1948 = vmatprep.subr.bf16.mxu0 0
    %1949 = vmatpush1.bf16.msra.mxu0 %v985
    %1950 = vmatprep.subr.bf16.mxu0 0
    %1951 = vmatpush1.bf16.msra.mxu0 %v986
    %1952 = vmatprep.subr.bf16.mxu0 0
    %1953 = vmatpush1.bf16.msra.mxu0 %v987
    %1954 = vmatprep.subr.bf16.mxu0 0
    %1955 = vmatpush1.bf16.msra.mxu0 %v988
    %1956 = vmatprep.subr.bf16.mxu0 0
    %1957 = vmatpush1.bf16.msra.mxu0 0
    %1958 = vmatprep.subr.bf16.mxu0 0
    %1959 = vmatpush1.bf16.msra.mxu0 0
    %1960 = vmatprep.subr.bf16.mxu0 0
    %1961 = vmatpush1.bf16.msra.mxu0 0
    %1962 = vmatprep.subr.bf16.mxu0 0
    %1963 = vmatpush1.bf16.msra.mxu0 0
    %1964 = vmatprep.subr.bf16.mxu0 0
    %1965 = vmatpush1.bf16.msra.mxu0 0
    %1966 = vmatprep.subr.bf16.mxu0 0
    %1967 = vmatpush1.bf16.msra.mxu0 0
    %1968 = vmatprep.subr.bf16.mxu0 0
    %1969 = vmatpush1.bf16.msra.mxu0 0
    %1970 = vmatprep.subr.bf16.mxu0 0
    %1971 = vmatpush1.bf16.msra.mxu0 0
    %1972 = vmatprep.subr.bf16.mxu0 0
    %1973 = vmatpush1.bf16.msra.mxu0 0
    %1974 = vmatprep.subr.bf16.mxu0 0
    %1975 = vmatpush1.bf16.msra.mxu0 0
    %1976 = vmatprep.subr.bf16.mxu0 0
    %1977 = vmatpush1.bf16.msra.mxu0 0
    %1978 = vmatprep.subr.bf16.mxu0 0
    %1979 = vmatpush1.bf16.msra.mxu0 0
    %1980 = vmatprep.mubr.bf16.mxu0 0
    %1981 = vmatmul.mubr.bf16.gmra.mrb[0].mxu0 %v1946
    %v1982 = vpop.f32.mrb[0].mxu0
    %v1983 = vadd.f32 %v352, %v1982
    %v1984 = vpop.f32.mrb[0].mxu0
    %v1985 = vpop.f32.mrb[0].mxu0
    %v1986 = vpop.f32.mrb[0].mxu0
    %1987 = vdwg.mxu0
    %v1988 = vmax.f32 %v1983, 0.0
    %v1989 = vpack.c.bf16 %v1988, %v1988
    %v1991 = vsel %vm239, %v1989, 0
    %1993 = vmatprep.subr.bf16.mxu0 %v1071
    %1994 = vmatpush1.bf16.msra.mxu0 %v1070
    %1995 = vmatprep.subr.bf16.mxu0 %v1073
    %1996 = vmatpush1.bf16.msra.mxu0 %v1072
    %1997 = vmatprep.subr.bf16.mxu0 %v1075
    %1998 = vmatpush1.bf16.msra.mxu0 %v1074
    %1999 = vmatprep.subr.bf16.mxu0 %v1077
    %2000 = vmatpush1.bf16.msra.mxu0 %v1076
    %2001 = vmatprep.subr.bf16.mxu0 0
    %2002 = vmatpush1.bf16.msra.mxu0 0
    %2003 = vmatprep.subr.bf16.mxu0 0
    %2004 = vmatpush1.bf16.msra.mxu0 0
    %2005 = vmatprep.subr.bf16.mxu0 0
    %2006 = vmatpush1.bf16.msra.mxu0 0
    %2007 = vmatprep.subr.bf16.mxu0 0
    %2008 = vmatpush1.bf16.msra.mxu0 0
    %2009 = vmatprep.subr.bf16.mxu0 0
    %2010 = vmatpush1.bf16.msra.mxu0 0
    %2011 = vmatprep.subr.bf16.mxu0 0
    %2012 = vmatpush1.bf16.msra.mxu0 0
    %2013 = vmatprep.subr.bf16.mxu0 0
    %2014 = vmatpush1.bf16.msra.mxu0 0
    %2015 = vmatprep.subr.bf16.mxu0 0
    %2016 = vmatpush1.bf16.msra.mxu0 0
    %2017 = vmatprep.subr.bf16.mxu0 0
    %2018 = vmatpush1.bf16.msra.mxu0 0
    %2019 = vmatprep.subr.bf16.mxu0 0
    %2020 = vmatpush1.bf16.msra.mxu0 0
    %2021 = vmatprep.subr.bf16.mxu0 0
    %2022 = vmatpush1.bf16.msra.mxu0 0
    %2023 = vmatprep.subr.bf16.mxu0 0
    %2024 = vmatpush1.bf16.msra.mxu0 0
    %2025 = vmatprep.mubr.bf16.mxu0 0
    %2026 = vmatmul.mubr.bf16.gmra.mrb[0].mxu0 %v1991
    %v2027 = vpop.f32.mrb[0].mxu0
    %v2028 = vadd.f32 0.0, %v2027
    %v2029 = vpop.f32.mrb[0].mxu0
    %v2030 = vadd.f32 0.0, %v2029
    %v2031 = vpop.f32.mrb[0].mxu0
    %v2032 = vpop.f32.mrb[0].mxu0
    %2033 = vdwg.mxu0
    %2035 = vrot.lane.b32.xlu0 %v1822, 64
    %v2036 = vpop.permute.xlu0 %2035
    %v2038 = vadd.f32 %v2030, %v2036
    %v2039 = vadd.f32 %v2038, %v1136
    %v2040 = vmax.f32 %v2039, 0.0
    %v2041 = vadd.f32 %v297, %v2028
    %v2042 = vadd.f32 %v299, %v2030
    %v2043 = vadd.f32 %v2041, %v371
    %v2044 = vadd.f32 %v2042, %v375
    %v2045 = vadd.f32 %v2043, %v1824
    %v2046 = vxor.u32 %v2045, 2147483648
    %v2047 = vmul.f32 %v2046, 1.442695
    %v2048 = vpow.pop %v2047
    %v2049 = vadd.f32 %v2048, 1.0
    %v2050 = vrcp.pop %v2049
    %v2051 = vmul.f32 1.0, %v2050
    %v2052 = vadd.f32 %v1863, %v383
    %v2053 = vmul.f32 %v2051, %v2052
    %v2054 = vadd.f32 %v2044, %v2053
    %v2055 = vtanh.pop %v2054
    %v2056 = vsub.f32 1.0, %v2051
    %2058 = vrot.lane.b32.xlu0 %v2055, 64
    %v2059 = vpop.permute.xlu0 %2058
    %v2061 = vmul.f32 %v2056, %v2059
    %v2062 = vmul.f32 %v2051, %v1638
    %v2063 = vadd.f32 %v2061, %v2062
    %v2064 = vpack.c.bf16 %v2063, %v2063
    %2066 = vrot.lane.b32.xlu0 %v2064, 64
    %v2067 = vpop.permute.xlu0 %2066
    %v2069 = vsel %vm239, %v2067, 0
    %2071 = vmatprep.subr.bf16.mxu0 %v1200
    %2072 = vmatpush1.bf16.msra.mxu0 %v1199
    %2073 = vmatprep.subr.bf16.mxu0 %v1202
    %2074 = vmatpush1.bf16.msra.mxu0 %v1201
    %2075 = vmatprep.subr.bf16.mxu0 %v1204
    %2076 = vmatpush1.bf16.msra.mxu0 %v1203
    %2077 = vmatprep.subr.bf16.mxu0 %v1206
    %2078 = vmatpush1.bf16.msra.mxu0 %v1205
    %2079 = vmatprep.subr.bf16.mxu0 0
    %2080 = vmatpush1.bf16.msra.mxu0 0
    %2081 = vmatprep.subr.bf16.mxu0 0
    %2082 = vmatpush1.bf16.msra.mxu0 0
    %2083 = vmatprep.subr.bf16.mxu0 0
    %2084 = vmatpush1.bf16.msra.mxu0 0
    %2085 = vmatprep.subr.bf16.mxu0 0
    %2086 = vmatpush1.bf16.msra.mxu0 0
    %2087 = vmatprep.subr.bf16.mxu0 0
    %2088 = vmatpush1.bf16.msra.mxu0 0
    %2089 = vmatprep.subr.bf16.mxu0 0
    %2090 = vmatpush1.bf16.msra.mxu0 0
    %2091 = vmatprep.subr.bf16.mxu0 0
    %2092 = vmatpush1.bf16.msra.mxu0 0
    %2093 = vmatprep.subr.bf16.mxu0 0
    %2094 = vmatpush1.bf16.msra.mxu0 0
    %2095 = vmatprep.subr.bf16.mxu0 0
    %2096 = vmatpush1.bf16.msra.mxu0 0
    %2097 = vmatprep.subr.bf16.mxu0 0
    %2098 = vmatpush1.bf16.msra.mxu0 0
    %2099 = vmatprep.subr.bf16.mxu0 0
    %2100 = vmatpush1.bf16.msra.mxu0 0
    %2101 = vmatprep.subr.bf16.mxu0 0
    %2102 = vmatpush1.bf16.msra.mxu0 0
    %2103 = vmatprep.mubr.bf16.mxu0 0
    %2104 = vmatmul.mubr.bf16.gmra.mrb[0].mxu0 %v2069
    %v2105 = vpop.f32.mrb[0].mxu0
    %v2106 = vadd.f32 %v390, %v2105
    %v2107 = vpop.f32.mrb[0].mxu0
    %v2108 = vadd.f32 %v394, %v2107
    %v2109 = vpop.f32.mrb[0].mxu0
    %v2110 = vpop.f32.mrb[0].mxu0
    %2111 = vdwg.mxu0
    %v2112 = vadd.f32 %v2106, %v1783
    %v2113 = vxor.u32 %v2112, 2147483648
    %v2114 = vmul.f32 %v2113, 1.442695
    %v2115 = vpow.pop %v2114
    %v2116 = vadd.f32 %v2115, 1.0
    %v2117 = vrcp.pop %v2116
    %v2118 = vmul.f32 1.0, %v2117
    %v2119 = vadd.f32 %v1822, %v1267
    %2121 = vrot.lane.b32.xlu0 %v2119, 64
    %v2122 = vpop.permute.xlu0 %2121
    %v2124 = vmul.f32 %v2118, %v2122
    %v2125 = vadd.f32 %v2108, %v2124
    %v2126 = vtanh.pop %v2125
    %v2127 = vsub.f32 1.0, %v2118
    %2129 = vrot.lane.b32.xlu0 %v2126, 64
    %v2130 = vpop.permute.xlu0 %2129
    %v2132 = vmul.f32 %v2127, %v2130
    %v2133 = vmul.f32 %v2118, %v1709
    %v2134 = vadd.f32 %v2132, %v2133
    %v2135 = vmul.f32 %v1941, %v1941
    %v2136 = vrcp.pop %v2135
    %v2137 = vlog2.pop %v1941
    %v2138 = vmul.f32 %v2137, 0.6931472
    %2140 = vrot.lane.b32.xlu0 %v2138, 64
    %v2141 = vpop.permute.xlu0 %2140
    %v2143 = vsub.f32 %v2138, %v2141
    %v2144 = vmul.f32 %v2143, 2.0
    %2146 = vrot.lane.b32.xlu0 %v1918, 64
    %v2147 = vpop.permute.xlu0 %2146
    %v2149 = vsub.f32 %v1918, %v2147
    %v2150 = vmul.f32 %v2149, %v2149
    %v2151 = vadd.f32 %v2135, %v2150
    %2153 = vrot.lane.b32.xlu0 %v2136, 64
    %v2154 = vpop.permute.xlu0 %2153
    %v2156 = vmul.f32 %v2151, %v2154
    %2158 = vrot.lane.b32.xlu0 %v2156, 64
    %v2159 = vpop.permute.xlu0 %2158
    %v2161 = vadd.f32 %v2144, %v2159
    %v2162 = vsub.f32 %v2161, 1.0
    %v2163 = vmul.f32 %v2162, 0.5
    %v2164 = vadd.f32 %v1739, %v2163
    %2166 = vrot.lane.b32.xlu0 %v2134, 64
    %v2167 = vpop.permute.xlu0 %2166
    %v2169 = vsel %vm239, %v2167, %v2063
    %v2170 = vpack.c.bf16 %v2169, %v2169
    %2171 = vmatprep.subr.bf16.mxu0 %v581
    %2172 = vmatpush1.bf16.msra.mxu0 %v580
    %2173 = vmatprep.subr.bf16.mxu0 %v586
    %2174 = vmatpush1.bf16.msra.mxu0 %v585
    %2175 = vmatprep.subr.bf16.mxu0 %v591
    %2176 = vmatpush1.bf16.msra.mxu0 %v590
    %2177 = vmatprep.subr.bf16.mxu0 %v596
    %2178 = vmatpush1.bf16.msra.mxu0 %v595
    %2179 = vmatprep.subr.bf16.mxu0 %v601
    %2180 = vmatpush1.bf16.msra.mxu0 %v600
    %2181 = vmatprep.subr.bf16.mxu0 %v606
    %2182 = vmatpush1.bf16.msra.mxu0 %v605
    %2183 = vmatprep.subr.bf16.mxu0 %v611
    %2184 = vmatpush1.bf16.msra.mxu0 %v610
    %2185 = vmatprep.subr.bf16.mxu0 %v616
    %2186 = vmatpush1.bf16.msra.mxu0 %v615
    %2187 = vmatprep.subr.bf16.mxu0 0
    %2188 = vmatpush1.bf16.msra.mxu0 0
    %2189 = vmatprep.subr.bf16.mxu0 0
    %2190 = vmatpush1.bf16.msra.mxu0 0
    %2191 = vmatprep.subr.bf16.mxu0 0
    %2192 = vmatpush1.bf16.msra.mxu0 0
    %2193 = vmatprep.subr.bf16.mxu0 0
    %2194 = vmatpush1.bf16.msra.mxu0 0
    %2195 = vmatprep.subr.bf16.mxu0 0
    %2196 = vmatpush1.bf16.msra.mxu0 0
    %2197 = vmatprep.subr.bf16.mxu0 0
    %2198 = vmatpush1.bf16.msra.mxu0 0
    %2199 = vmatprep.subr.bf16.mxu0 0
    %2200 = vmatpush1.bf16.msra.mxu0 0
    %2201 = vmatprep.subr.bf16.mxu0 0
    %2202 = vmatpush1.bf16.msra.mxu0 0
    %2203 = vmatprep.mubr.bf16.mxu0 0
    %2204 = vmatmul.mubr.bf16.gmra.mrb[0].mxu0 %v2170
    %v2205 = vpop.f32.mrb[0].mxu0
    %v2206 = vadd.f32 0.0, %v2205
    %v2207 = vpop.f32.mrb[0].mxu0
    %v2208 = vadd.f32 0.0, %v2207
    %v2209 = vpop.f32.mrb[0].mxu0
    %v2210 = vpop.f32.mrb[0].mxu0
    %2211 = vdwg.mxu0
    %2212 = vmatprep.subr.bf16.mxu0 %v583
    %2213 = vmatpush1.bf16.msra.mxu0 %v582
    %2214 = vmatprep.subr.bf16.mxu0 %v588
    %2215 = vmatpush1.bf16.msra.mxu0 %v587
    %2216 = vmatprep.subr.bf16.mxu0 %v593
    %2217 = vmatpush1.bf16.msra.mxu0 %v592
    %2218 = vmatprep.subr.bf16.mxu0 %v598
    %2219 = vmatpush1.bf16.msra.mxu0 %v597
    %2220 = vmatprep.subr.bf16.mxu0 %v603
    %2221 = vmatpush1.bf16.msra.mxu0 %v602
    %2222 = vmatprep.subr.bf16.mxu0 %v608
    %2223 = vmatpush1.bf16.msra.mxu0 %v607
    %2224 = vmatprep.subr.bf16.mxu0 %v613
    %2225 = vmatpush1.bf16.msra.mxu0 %v612
    %2226 = vmatprep.subr.bf16.mxu0 %v618
    %2227 = vmatpush1.bf16.msra.mxu0 %v617
    %2228 = vmatprep.subr.bf16.mxu0 0
    %2229 = vmatpush1.bf16.msra.mxu0 0
    %2230 = vmatprep.subr.bf16.mxu0 0
    %2231 = vmatpush1.bf16.msra.mxu0 0
    %2232 = vmatprep.subr.bf16.mxu0 0
    %2233 = vmatpush1.bf16.msra.mxu0 0
    %2234 = vmatprep.subr.bf16.mxu0 0
    %2235 = vmatpush1.bf16.msra.mxu0 0
    %2236 = vmatprep.subr.bf16.mxu0 0
    %2237 = vmatpush1.bf16.msra.mxu0 0
    %2238 = vmatprep.subr.bf16.mxu0 0
    %2239 = vmatpush1.bf16.msra.mxu0 0
    %2240 = vmatprep.subr.bf16.mxu0 0
    %2241 = vmatpush1.bf16.msra.mxu0 0
    %2242 = vmatprep.subr.bf16.mxu0 0
    %2243 = vmatpush1.bf16.msra.mxu0 0
    %2244 = vmatprep.mubr.bf16.mxu0 0
    %2245 = vmatmul.mubr.bf16.gmra.mrb[0].mxu0 %v2170
    %v2246 = vpop.f32.mrb[0].mxu0
    %v2247 = vadd.f32 0.0, %v2246
    %v2248 = vpop.f32.mrb[0].mxu0
    %v2249 = vadd.f32 0.0, %v2248
    %v2250 = vpop.f32.mrb[0].mxu0
    %v2251 = vpop.f32.mrb[0].mxu0
    %2252 = vdwg.mxu0
    %2253 = vmatprep.subr.bf16.mxu0 0
    %2254 = vmatpush1.bf16.msra.mxu0 %v584
    %2255 = vmatprep.subr.bf16.mxu0 0
    %2256 = vmatpush1.bf16.msra.mxu0 %v589
    %2257 = vmatprep.subr.bf16.mxu0 0
    %2258 = vmatpush1.bf16.msra.mxu0 %v594
    %2259 = vmatprep.subr.bf16.mxu0 0
    %2260 = vmatpush1.bf16.msra.mxu0 %v599
    %2261 = vmatprep.subr.bf16.mxu0 0
    %2262 = vmatpush1.bf16.msra.mxu0 %v604
    %2263 = vmatprep.subr.bf16.mxu0 0
    %2264 = vmatpush1.bf16.msra.mxu0 %v609
    %2265 = vmatprep.subr.bf16.mxu0 0
    %2266 = vmatpush1.bf16.msra.mxu0 %v614
    %2267 = vmatprep.subr.bf16.mxu0 0
    %2268 = vmatpush1.bf16.msra.mxu0 %v619
    %2269 = vmatprep.subr.bf16.mxu0 0
    %2270 = vmatpush1.bf16.msra.mxu0 0
    %2271 = vmatprep.subr.bf16.mxu0 0
    %2272 = vmatpush1.bf16.msra.mxu0 0
    %2273 = vmatprep.subr.bf16.mxu0 0
    %2274 = vmatpush1.bf16.msra.mxu0 0
    %2275 = vmatprep.subr.bf16.mxu0 0
    %2276 = vmatpush1.bf16.msra.mxu0 0
    %2277 = vmatprep.subr.bf16.mxu0 0
    %2278 = vmatpush1.bf16.msra.mxu0 0
    %2279 = vmatprep.subr.bf16.mxu0 0
    %2280 = vmatpush1.bf16.msra.mxu0 0
    %2281 = vmatprep.subr.bf16.mxu0 0
    %2282 = vmatpush1.bf16.msra.mxu0 0
    %2283 = vmatprep.subr.bf16.mxu0 0
    %2284 = vmatpush1.bf16.msra.mxu0 0
    %2285 = vmatprep.mubr.bf16.mxu0 0
    %2286 = vmatmul.mubr.bf16.gmra.mrb[0].mxu0 %v2170
    %v2287 = vpop.f32.mrb[0].mxu0
    %v2288 = vadd.f32 0.0, %v2287
    %v2289 = vpop.f32.mrb[0].mxu0
    %v2290 = vpop.f32.mrb[0].mxu0
    %v2291 = vpop.f32.mrb[0].mxu0
    %2292 = vdwg.mxu0
    %2294 = vrot.lane.b32.xlu0 %v2206, 64
    %v2295 = vpop.permute.xlu0 %2294
    %v2297 = vadd.f32 %v303, %v2295
    %v2298 = vadd.f32 %v2297, %v788
    %v2299 = vmax.f32 %v2298, 0.0
    %v2300 = vadd.f32 %v2206, %v793
    %v2301 = vmax.f32 %v2300, 0.0
    %2303 = vrot.lane.b32.xlu0 %v2299, 64
    %v2304 = vpop.permute.xlu0 %2303
    %v2306 = vsel %vm239, %v2304, %v2301
    %v2307 = vpack.c.bf16 %v2306, %v2306
    %2308 = vmatprep.subr.bf16.mxu0 %v868
    %2309 = vmatpush1.bf16.msra.mxu0 %v867
    %2310 = vmatprep.subr.bf16.mxu0 %v870
    %2311 = vmatpush1.bf16.msra.mxu0 %v869
    %2312 = vmatprep.subr.bf16.mxu0 %v872
    %2313 = vmatpush1.bf16.msra.mxu0 %v871
    %2314 = vmatprep.subr.bf16.mxu0 %v874
    %2315 = vmatpush1.bf16.msra.mxu0 %v873
    %2316 = vmatprep.subr.bf16.mxu0 %v876
    %2317 = vmatpush1.bf16.msra.mxu0 %v875
    %2318 = vmatprep.subr.bf16.mxu0 %v878
    %2319 = vmatpush1.bf16.msra.mxu0 %v877
    %2320 = vmatprep.subr.bf16.mxu0 %v880
    %2321 = vmatpush1.bf16.msra.mxu0 %v879
    %2322 = vmatprep.subr.bf16.mxu0 %v882
    %2323 = vmatpush1.bf16.msra.mxu0 %v881
    %2324 = vmatprep.subr.bf16.mxu0 0
    %2325 = vmatpush1.bf16.msra.mxu0 0
    %2326 = vmatprep.subr.bf16.mxu0 0
    %2327 = vmatpush1.bf16.msra.mxu0 0
    %2328 = vmatprep.subr.bf16.mxu0 0
    %2329 = vmatpush1.bf16.msra.mxu0 0
    %2330 = vmatprep.subr.bf16.mxu0 0
    %2331 = vmatpush1.bf16.msra.mxu0 0
    %2332 = vmatprep.subr.bf16.mxu0 0
    %2333 = vmatpush1.bf16.msra.mxu0 0
    %2334 = vmatprep.subr.bf16.mxu0 0
    %2335 = vmatpush1.bf16.msra.mxu0 0
    %2336 = vmatprep.subr.bf16.mxu0 0
    %2337 = vmatpush1.bf16.msra.mxu0 0
    %2338 = vmatprep.subr.bf16.mxu0 0
    %2339 = vmatpush1.bf16.msra.mxu0 0
    %2340 = vmatprep.mubr.bf16.mxu0 0
    %2341 = vmatmul.mubr.bf16.gmra.mrb[0].mxu0 %v2307
    %v2342 = vpop.f32.mrb[0].mxu0
    %v2343 = vadd.f32 %v359, %v2342
    %v2344 = vpop.f32.mrb[0].mxu0
    %v2345 = vadd.f32 %v363, %v2344
    %v2346 = vpop.f32.mrb[0].mxu0
    %v2347 = vpop.f32.mrb[0].mxu0
    %2348 = vdwg.mxu0
    %v2349 = vmax.f32 %v2345, 0.0
    %vm2350 = vcmp.ne.f32.partialorder %v2345, %v2345
    %v2351 = vadd.f32 %v2345, 0.0
    %v2352 = vand.u32 2147483647, %v2345
    %v2353 = vsub.f32 0.0, %v2352
    %v2354 = vmul.f32 %v2353, 1.442695
    %v2355 = vpow.pop %v2354
    %v2356 = vadd.f32 %v2355, 1.0
    %v2357 = vlog2.pop %v2356
    %v2358 = vmul.f32 %v2357, 0.6931472
    %v2359 = vmul.f32 -0.5, %v2355
    %v2360 = vadd.f32 %v2359, 1.0
    %v2361 = vmul.f32 %v2360, %v2355
    %v2362 = vand.u32 2147483647, %v2355
    %vm2363 = vcmp.lt.f32.partialorder %v2362, 0.0004427343
    %v2364 = vsel %vm2363, %v2361, %v2358
    %v2365 = vadd.f32 %v2349, %v2364
    %v2366 = vsel %vm2350, %v2351, %v2365
    %v2367 = vmul.f32 %v325, %v2366
    %v2368 = vadd.f32 %v2343, %v2367
    %v2369 = vpack.c.bf16 %v2368, %v2368
    %v2371 = vsel %vm239, %v2369, 0
    %2373 = vmatprep.subr.bf16.mxu0 0
    %2374 = vmatpush1.bf16.msra.mxu0 %v985
    %2375 = vmatprep.subr.bf16.mxu0 0
    %2376 = vmatpush1.bf16.msra.mxu0 %v986
    %2377 = vmatprep.subr.bf16.mxu0 0
    %2378 = vmatpush1.bf16.msra.mxu0 %v987
    %2379 = vmatprep.subr.bf16.mxu0 0
    %2380 = vmatpush1.bf16.msra.mxu0 %v988
    %2381 = vmatprep.subr.bf16.mxu0 0
    %2382 = vmatpush1.bf16.msra.mxu0 0
    %2383 = vmatprep.subr.bf16.mxu0 0
    %2384 = vmatpush1.bf16.msra.mxu0 0
    %2385 = vmatprep.subr.bf16.mxu0 0
    %2386 = vmatpush1.bf16.msra.mxu0 0
    %2387 = vmatprep.subr.bf16.mxu0 0
    %2388 = vmatpush1.bf16.msra.mxu0 0
    %2389 = vmatprep.subr.bf16.mxu0 0
    %2390 = vmatpush1.bf16.msra.mxu0 0
    %2391 = vmatprep.subr.bf16.mxu0 0
    %2392 = vmatpush1.bf16.msra.mxu0 0
    %2393 = vmatprep.subr.bf16.mxu0 0
    %2394 = vmatpush1.bf16.msra.mxu0 0
    %2395 = vmatprep.subr.bf16.mxu0 0
    %2396 = vmatpush1.bf16.msra.mxu0 0
    %2397 = vmatprep.subr.bf16.mxu0 0
    %2398 = vmatpush1.bf16.msra.mxu0 0
    %2399 = vmatprep.subr.bf16.mxu0 0
    %2400 = vmatpush1.bf16.msra.mxu0 0
    %2401 = vmatprep.subr.bf16.mxu0 0
    %2402 = vmatpush1.bf16.msra.mxu0 0
    %2403 = vmatprep.subr.bf16.mxu0 0
    %2404 = vmatpush1.bf16.msra.mxu0 0
    %2405 = vmatprep.mubr.bf16.mxu0 0
    %2406 = vmatmul.mubr.bf16.gmra.mrb[0].mxu0 %v2371
    %v2407 = vpop.f32.mrb[0].mxu0
    %v2408 = vadd.f32 %v352, %v2407
    %v2409 = vpop.f32.mrb[0].mxu0
    %v2410 = vpop.f32.mrb[0].mxu0
    %v2411 = vpop.f32.mrb[0].mxu0
    %2412 = vdwg.mxu0
    %v2413 = vmax.f32 %v2408, 0.0
    %v2414 = vpack.c.bf16 %v2413, %v2413
    %v2416 = vsel %vm239, %v2414, 0
    %2418 = vmatprep.subr.bf16.mxu0 %v1071
    %2419 = vmatpush1.bf16.msra.mxu0 %v1070
    %2420 = vmatprep.subr.bf16.mxu0 %v1073
    %2421 = vmatpush1.bf16.msra.mxu0 %v1072
    %2422 = vmatprep.subr.bf16.mxu0 %v1075
    %2423 = vmatpush1.bf16.msra.mxu0 %v1074
    %2424 = vmatprep.subr.bf16.mxu0 %v1077
    %2425 = vmatpush1.bf16.msra.mxu0 %v1076
    %2426 = vmatprep.subr.bf16.mxu0 0
    %2427 = vmatpush1.bf16.msra.mxu0 0
    %2428 = vmatprep.subr.bf16.mxu0 0
    %2429 = vmatpush1.bf16.msra.mxu0 0
    %2430 = vmatprep.subr.bf16.mxu0 0
    %2431 = vmatpush1.bf16.msra.mxu0 0
    %2432 = vmatprep.subr.bf16.mxu0 0
    %2433 = vmatpush1.bf16.msra.mxu0 0
    %2434 = vmatprep.subr.bf16.mxu0 0
    %2435 = vmatpush1.bf16.msra.mxu0 0
    %2436 = vmatprep.subr.bf16.mxu0 0
    %2437 = vmatpush1.bf16.msra.mxu0 0
    %2438 = vmatprep.subr.bf16.mxu0 0
    %2439 = vmatpush1.bf16.msra.mxu0 0
    %2440 = vmatprep.subr.bf16.mxu0 0
    %2441 = vmatpush1.bf16.msra.mxu0 0
    %2442 = vmatprep.subr.bf16.mxu0 0
    %2443 = vmatpush1.bf16.msra.mxu0 0
    %2444 = vmatprep.subr.bf16.mxu0 0
    %2445 = vmatpush1.bf16.msra.mxu0 0
    %2446 = vmatprep.subr.bf16.mxu0 0
    %2447 = vmatpush1.bf16.msra.mxu0 0
    %2448 = vmatprep.subr.bf16.mxu0 0
    %2449 = vmatpush1.bf16.msra.mxu0 0
    %2450 = vmatprep.mubr.bf16.mxu0 0
    %2451 = vmatmul.mubr.bf16.gmra.mrb[0].mxu0 %v2416
    %v2452 = vpop.f32.mrb[0].mxu0
    %v2453 = vadd.f32 0.0, %v2452
    %v2454 = vpop.f32.mrb[0].mxu0
    %v2455 = vadd.f32 0.0, %v2454
    %v2456 = vpop.f32.mrb[0].mxu0
    %v2457 = vpop.f32.mrb[0].mxu0
    %2458 = vdwg.mxu0
    %2460 = vrot.lane.b32.xlu0 %v2247, 64
    %v2461 = vpop.permute.xlu0 %2460
    %v2463 = vadd.f32 %v2455, %v2461
    %v2464 = vadd.f32 %v2463, %v1136
    %v2465 = vmax.f32 %v2464, 0.0
    %v2466 = vadd.f32 %v301, %v2453
    %v2467 = vadd.f32 %v303, %v2455
    %v2468 = vadd.f32 %v2466, %v371
    %v2469 = vadd.f32 %v2467, %v375
    %v2470 = vadd.f32 %v2468, %v2249
    %v2471 = vxor.u32 %v2470, 2147483648
    %v2472 = vmul.f32 %v2471, 1.442695
    %v2473 = vpow.pop %v2472
    %v2474 = vadd.f32 %v2473, 1.0
    %v2475 = vrcp.pop %v2474
    %v2476 = vmul.f32 1.0, %v2475
    %v2477 = vadd.f32 %v2288, %v383
    %v2478 = vmul.f32 %v2476, %v2477
    %v2479 = vadd.f32 %v2469, %v2478
    %v2480 = vtanh.pop %v2479
    %v2481 = vsub.f32 1.0, %v2476
    %2483 = vrot.lane.b32.xlu0 %v2480, 64
    %v2484 = vpop.permute.xlu0 %2483
    %v2486 = vmul.f32 %v2481, %v2484
    %v2487 = vmul.f32 %v2476, %v2063
    %v2488 = vadd.f32 %v2486, %v2487
    %v2489 = vpack.c.bf16 %v2488, %v2488
    %2491 = vrot.lane.b32.xlu0 %v2489, 64
    %v2492 = vpop.permute.xlu0 %2491
    %v2494 = vsel %vm239, %v2492, 0
    %2496 = vmatprep.subr.bf16.mxu0 %v1200
    %2497 = vmatpush1.bf16.msra.mxu0 %v1199
    %2498 = vmatprep.subr.bf16.mxu0 %v1202
    %2499 = vmatpush1.bf16.msra.mxu0 %v1201
    %2500 = vmatprep.subr.bf16.mxu0 %v1204
    %2501 = vmatpush1.bf16.msra.mxu0 %v1203
    %2502 = vmatprep.subr.bf16.mxu0 %v1206
    %2503 = vmatpush1.bf16.msra.mxu0 %v1205
    %2504 = vmatprep.subr.bf16.mxu0 0
    %2505 = vmatpush1.bf16.msra.mxu0 0
    %2506 = vmatprep.subr.bf16.mxu0 0
    %2507 = vmatpush1.bf16.msra.mxu0 0
    %2508 = vmatprep.subr.bf16.mxu0 0
    %2509 = vmatpush1.bf16.msra.mxu0 0
    %2510 = vmatprep.subr.bf16.mxu0 0
    %2511 = vmatpush1.bf16.msra.mxu0 0
    %2512 = vmatprep.subr.bf16.mxu0 0
    %2513 = vmatpush1.bf16.msra.mxu0 0
    %2514 = vmatprep.subr.bf16.mxu0 0
    %2515 = vmatpush1.bf16.msra.mxu0 0
    %2516 = vmatprep.subr.bf16.mxu0 0
    %2517 = vmatpush1.bf16.msra.mxu0 0
    %2518 = vmatprep.subr.bf16.mxu0 0
    %2519 = vmatpush1.bf16.msra.mxu0 0
    %2520 = vmatprep.subr.bf16.mxu0 0
    %2521 = vmatpush1.bf16.msra.mxu0 0
    %2522 = vmatprep.subr.bf16.mxu0 0
    %2523 = vmatpush1.bf16.msra.mxu0 0
    %2524 = vmatprep.subr.bf16.mxu0 0
    %2525 = vmatpush1.bf16.msra.mxu0 0
    %2526 = vmatprep.subr.bf16.mxu0 0
    %2527 = vmatpush1.bf16.msra.mxu0 0
    %2528 = vmatprep.mubr.bf16.mxu0 0
    %2529 = vmatmul.mubr.bf16.gmra.mrb[0].mxu0 %v2494
    %v2530 = vpop.f32.mrb[0].mxu0
    %v2531 = vadd.f32 %v390, %v2530
    %v2532 = vpop.f32.mrb[0].mxu0
    %v2533 = vadd.f32 %v394, %v2532
    %v2534 = vpop.f32.mrb[0].mxu0
    %v2535 = vpop.f32.mrb[0].mxu0
    %2536 = vdwg.mxu0
    %v2537 = vadd.f32 %v2531, %v2208
    %v2538 = vxor.u32 %v2537, 2147483648
    %v2539 = vmul.f32 %v2538, 1.442695
    %v2540 = vpow.pop %v2539
    %v2541 = vadd.f32 %v2540, 1.0
    %v2542 = vrcp.pop %v2541
    %v2543 = vmul.f32 1.0, %v2542
    %v2544 = vadd.f32 %v2247, %v1267
    %2546 = vrot.lane.b32.xlu0 %v2544, 64
    %v2547 = vpop.permute.xlu0 %2546
    %v2549 = vmul.f32 %v2543, %v2547
    %v2550 = vadd.f32 %v2533, %v2549
    %v2551 = vtanh.pop %v2550
    %v2552 = vsub.f32 1.0, %v2543
    %2554 = vrot.lane.b32.xlu0 %v2551, 64
    %v2555 = vpop.permute.xlu0 %2554
    %v2557 = vmul.f32 %v2552, %v2555
    %v2558 = vmul.f32 %v2543, %v2134
    %v2559 = vadd.f32 %v2557, %v2558
    %v2560 = vmul.f32 %v2366, %v2366
    %v2561 = vrcp.pop %v2560
    %v2562 = vlog2.pop %v2366
    %v2563 = vmul.f32 %v2562, 0.6931472
    %2565 = vrot.lane.b32.xlu0 %v2563, 64
    %v2566 = vpop.permute.xlu0 %2565
    %v2568 = vsub.f32 %v2563, %v2566
    %v2569 = vmul.f32 %v2568, 2.0
    %2571 = vrot.lane.b32.xlu0 %v2343, 64
    %v2572 = vpop.permute.xlu0 %2571
    %v2574 = vsub.f32 %v2343, %v2572
    %v2575 = vmul.f32 %v2574, %v2574
    %v2576 = vadd.f32 %v2560, %v2575
    %2578 = vrot.lane.b32.xlu0 %v2561, 64
    %v2579 = vpop.permute.xlu0 %2578
    %v2581 = vmul.f32 %v2576, %v2579
    %2583 = vrot.lane.b32.xlu0 %v2581, 64
    %v2584 = vpop.permute.xlu0 %2583
    %v2586 = vadd.f32 %v2569, %v2584
    %v2587 = vsub.f32 %v2586, 1.0
    %v2588 = vmul.f32 %v2587, 0.5
    %v2589 = vadd.f32 %v2164, %v2588
    %2591 = vrot.lane.b32.xlu0 %v2559, 64
    %v2592 = vpop.permute.xlu0 %2591
    %v2594 = vsel %vm239, %v2592, %v2488
    %v2595 = vpack.c.bf16 %v2594, %v2594
    %2596 = vmatprep.subr.bf16.mxu0 %v581
    %2597 = vmatpush1.bf16.msra.mxu0 %v580
    %2598 = vmatprep.subr.bf16.mxu0 %v586
    %2599 = vmatpush1.bf16.msra.mxu0 %v585
    %2600 = vmatprep.subr.bf16.mxu0 %v591
    %2601 = vmatpush1.bf16.msra.mxu0 %v590
    %2602 = vmatprep.subr.bf16.mxu0 %v596
    %2603 = vmatpush1.bf16.msra.mxu0 %v595
    %2604 = vmatprep.subr.bf16.mxu0 %v601
    %2605 = vmatpush1.bf16.msra.mxu0 %v600
    %2606 = vmatprep.subr.bf16.mxu0 %v606
    %2607 = vmatpush1.bf16.msra.mxu0 %v605
    %2608 = vmatprep.subr.bf16.mxu0 %v611
    %2609 = vmatpush1.bf16.msra.mxu0 %v610
    %2610 = vmatprep.subr.bf16.mxu0 %v616
    %2611 = vmatpush1.bf16.msra.mxu0 %v615
    %2612 = vmatprep.subr.bf16.mxu0 0
    %2613 = vmatpush1.bf16.msra.mxu0 0
    %2614 = vmatprep.subr.bf16.mxu0 0
    %2615 = vmatpush1.bf16.msra.mxu0 0
    %2616 = vmatprep.subr.bf16.mxu0 0
    %2617 = vmatpush1.bf16.msra.mxu0 0
    %2618 = vmatprep.subr.bf16.mxu0 0
    %2619 = vmatpush1.bf16.msra.mxu0 0
    %2620 = vmatprep.subr.bf16.mxu0 0
    %2621 = vmatpush1.bf16.msra.mxu0 0
    %2622 = vmatprep.subr.bf16.mxu0 0
    %2623 = vmatpush1.bf16.msra.mxu0 0
    %2624 = vmatprep.subr.bf16.mxu0 0
    %2625 = vmatpush1.bf16.msra.mxu0 0
    %2626 = vmatprep.subr.bf16.mxu0 0
    %2627 = vmatpush1.bf16.msra.mxu0 0
    %2628 = vmatprep.mubr.bf16.mxu0 0
    %2629 = vmatmul.mubr.bf16.gmra.mrb[0].mxu0 %v2595
    %v2630 = vpop.f32.mrb[0].mxu0
    %v2631 = vadd.f32 0.0, %v2630
    %v2632 = vpop.f32.mrb[0].mxu0
    %v2633 = vadd.f32 0.0, %v2632
    %v2634 = vpop.f32.mrb[0].mxu0
    %v2635 = vpop.f32.mrb[0].mxu0
    %2636 = vdwg.mxu0
    %2637 = vmatprep.subr.bf16.mxu0 %v583
    %2638 = vmatpush1.bf16.msra.mxu0 %v582
    %2639 = vmatprep.subr.bf16.mxu0 %v588
    %2640 = vmatpush1.bf16.msra.mxu0 %v587
    %2641 = vmatprep.subr.bf16.mxu0 %v593
    %2642 = vmatpush1.bf16.msra.mxu0 %v592
    %2643 = vmatprep.subr.bf16.mxu0 %v598
    %2644 = vmatpush1.bf16.msra.mxu0 %v597
    %2645 = vmatprep.subr.bf16.mxu0 %v603
    %2646 = vmatpush1.bf16.msra.mxu0 %v602
    %2647 = vmatprep.subr.bf16.mxu0 %v608
    %2648 = vmatpush1.bf16.msra.mxu0 %v607
    %2649 = vmatprep.subr.bf16.mxu0 %v613
    %2650 = vmatpush1.bf16.msra.mxu0 %v612
    %2651 = vmatprep.subr.bf16.mxu0 %v618
    %2652 = vmatpush1.bf16.msra.mxu0 %v617
    %2653 = vmatprep.subr.bf16.mxu0 0
    %2654 = vmatpush1.bf16.msra.mxu0 0
    %2655 = vmatprep.subr.bf16.mxu0 0
    %2656 = vmatpush1.bf16.msra.mxu0 0
    %2657 = vmatprep.subr.bf16.mxu0 0
    %2658 = vmatpush1.bf16.msra.mxu0 0
    %2659 = vmatprep.subr.bf16.mxu0 0
    %2660 = vmatpush1.bf16.msra.mxu0 0
    %2661 = vmatprep.subr.bf16.mxu0 0
    %2662 = vmatpush1.bf16.msra.mxu0 0
    %2663 = vmatprep.subr.bf16.mxu0 0
    %2664 = vmatpush1.bf16.msra.mxu0 0
    %2665 = vmatprep.subr.bf16.mxu0 0
    %2666 = vmatpush1.bf16.msra.mxu0 0
    %2667 = vmatprep.subr.bf16.mxu0 0
    %2668 = vmatpush1.bf16.msra.mxu0 0
    %2669 = vmatprep.mubr.bf16.mxu0 0
    %2670 = vmatmul.mubr.bf16.gmra.mrb[0].mxu0 %v2595
    %v2671 = vpop.f32.mrb[0].mxu0
    %v2672 = vadd.f32 0.0, %v2671
    %v2673 = vpop.f32.mrb[0].mxu0
    %v2674 = vadd.f32 0.0, %v2673
    %v2675 = vpop.f32.mrb[0].mxu0
    %v2676 = vpop.f32.mrb[0].mxu0
    %2677 = vdwg.mxu0
    %2678 = vmatprep.subr.bf16.mxu0 0
    %2679 = vmatpush1.bf16.msra.mxu0 %v584
    %2680 = vmatprep.subr.bf16.mxu0 0
    %2681 = vmatpush1.bf16.msra.mxu0 %v589
    %2682 = vmatprep.subr.bf16.mxu0 0
    %2683 = vmatpush1.bf16.msra.mxu0 %v594
    %2684 = vmatprep.subr.bf16.mxu0 0
    %2685 = vmatpush1.bf16.msra.mxu0 %v599
    %2686 = vmatprep.subr.bf16.mxu0 0
    %2687 = vmatpush1.bf16.msra.mxu0 %v604
    %2688 = vmatprep.subr.bf16.mxu0 0
    %2689 = vmatpush1.bf16.msra.mxu0 %v609
    %2690 = vmatprep.subr.bf16.mxu0 0
    %2691 = vmatpush1.bf16.msra.mxu0 %v614
    %2692 = vmatprep.subr.bf16.mxu0 0
    %2693 = vmatpush1.bf16.msra.mxu0 %v619
    %2694 = vmatprep.subr.bf16.mxu0 0
    %2695 = vmatpush1.bf16.msra.mxu0 0
    %2696 = vmatprep.subr.bf16.mxu0 0
    %2697 = vmatpush1.bf16.msra.mxu0 0
    %2698 = vmatprep.subr.bf16.mxu0 0
    %2699 = vmatpush1.bf16.msra.mxu0 0
    %2700 = vmatprep.subr.bf16.mxu0 0
    %2701 = vmatpush1.bf16.msra.mxu0 0
    %2702 = vmatprep.subr.bf16.mxu0 0
    %2703 = vmatpush1.bf16.msra.mxu0 0
    %2704 = vmatprep.subr.bf16.mxu0 0
    %2705 = vmatpush1.bf16.msra.mxu0 0
    %2706 = vmatprep.subr.bf16.mxu0 0
    %2707 = vmatpush1.bf16.msra.mxu0 0
    %2708 = vmatprep.subr.bf16.mxu0 0
    %2709 = vmatpush1.bf16.msra.mxu0 0
    %2710 = vmatprep.mubr.bf16.mxu0 0
    %2711 = vmatmul.mubr.bf16.gmra.mrb[0].mxu0 %v2595
    %v2712 = vpop.f32.mrb[0].mxu0
    %v2713 = vadd.f32 0.0, %v2712
    %v2714 = vpop.f32.mrb[0].mxu0
    %v2715 = vpop.f32.mrb[0].mxu0
    %v2716 = vpop.f32.mrb[0].mxu0
    %2717 = vdwg.mxu0
    %2719 = vrot.lane.b32.xlu0 %v2631, 64
    %v2720 = vpop.permute.xlu0 %2719
    %v2722 = vadd.f32 %v309, %v2720
    %v2723 = vadd.f32 %v2722, %v788
    %v2724 = vmax.f32 %v2723, 0.0
    %v2725 = vadd.f32 %v2631, %v793
    %v2726 = vmax.f32 %v2725, 0.0
    %2728 = vrot.lane.b32.xlu0 %v2724, 64
    %v2729 = vpop.permute.xlu0 %2728
    %v2731 = vsel %vm239, %v2729, %v2726
    %v2732 = vpack.c.bf16 %v2731, %v2731
    %2733 = vmatprep.subr.bf16.mxu0 %v868
    %2734 = vmatpush1.bf16.msra.mxu0 %v867
    %2735 = vmatprep.subr.bf16.mxu0 %v870
    %2736 = vmatpush1.bf16.msra.mxu0 %v869
    %2737 = vmatprep.subr.bf16.mxu0 %v872
    %2738 = vmatpush1.bf16.msra.mxu0 %v871
    %2739 = vmatprep.subr.bf16.mxu0 %v874
    %2740 = vmatpush1.bf16.msra.mxu0 %v873
    %2741 = vmatprep.subr.bf16.mxu0 %v876
    %2742 = vmatpush1.bf16.msra.mxu0 %v875
    %2743 = vmatprep.subr.bf16.mxu0 %v878
    %2744 = vmatpush1.bf16.msra.mxu0 %v877
    %2745 = vmatprep.subr.bf16.mxu0 %v880
    %2746 = vmatpush1.bf16.msra.mxu0 %v879
    %2747 = vmatprep.subr.bf16.mxu0 %v882
    %2748 = vmatpush1.bf16.msra.mxu0 %v881
    %2749 = vmatprep.subr.bf16.mxu0 0
    %2750 = vmatpush1.bf16.msra.mxu0 0
    %2751 = vmatprep.subr.bf16.mxu0 0
    %2752 = vmatpush1.bf16.msra.mxu0 0
    %2753 = vmatprep.subr.bf16.mxu0 0
    %2754 = vmatpush1.bf16.msra.mxu0 0
    %2755 = vmatprep.subr.bf16.mxu0 0
    %2756 = vmatpush1.bf16.msra.mxu0 0
    %2757 = vmatprep.subr.bf16.mxu0 0
    %2758 = vmatpush1.bf16.msra.mxu0 0
    %2759 = vmatprep.subr.bf16.mxu0 0
    %2760 = vmatpush1.bf16.msra.mxu0 0
    %2761 = vmatprep.subr.bf16.mxu0 0
    %2762 = vmatpush1.bf16.msra.mxu0 0
    %2763 = vmatprep.subr.bf16.mxu0 0
    %2764 = vmatpush1.bf16.msra.mxu0 0
    %2765 = vmatprep.mubr.bf16.mxu0 0
    %2766 = vmatmul.mubr.bf16.gmra.mrb[0].mxu0 %v2732
    %v2767 = vpop.f32.mrb[0].mxu0
    %v2768 = vadd.f32 %v359, %v2767
    %v2769 = vpop.f32.mrb[0].mxu0
    %v2770 = vadd.f32 %v363, %v2769
    %v2771 = vpop.f32.mrb[0].mxu0
    %v2772 = vpop.f32.mrb[0].mxu0
    %2773 = vdwg.mxu0
    %v2774 = vmax.f32 %v2770, 0.0
    %vm2775 = vcmp.ne.f32.partialorder %v2770, %v2770
    %v2776 = vadd.f32 %v2770, 0.0
    %v2777 = vand.u32 2147483647, %v2770
    %v2778 = vsub.f32 0.0, %v2777
    %v2779 = vmul.f32 %v2778, 1.442695
    %v2780 = vpow.pop %v2779
    %v2781 = vadd.f32 %v2780, 1.0
    %v2782 = vlog2.pop %v2781
    %v2783 = vmul.f32 %v2782, 0.6931472
    %v2784 = vmul.f32 -0.5, %v2780
    %v2785 = vadd.f32 %v2784, 1.0
    %v2786 = vmul.f32 %v2785, %v2780
    %v2787 = vand.u32 2147483647, %v2780
    %vm2788 = vcmp.lt.f32.partialorder %v2787, 0.0004427343
    %v2789 = vsel %vm2788, %v2786, %v2783
    %v2790 = vadd.f32 %v2774, %v2789
    %v2791 = vsel %vm2775, %v2776, %v2790
    %v2792 = vmul.f32 %v326, %v2791
    %v2793 = vadd.f32 %v2768, %v2792
    %v2794 = vpack.c.bf16 %v2793, %v2793
    %v2796 = vsel %vm239, %v2794, 0
    %2798 = vmatprep.subr.bf16.mxu0 0
    %2799 = vmatpush1.bf16.msra.mxu0 %v985
    %2800 = vmatprep.subr.bf16.mxu0 0
    %2801 = vmatpush1.bf16.msra.mxu0 %v986
    %2802 = vmatprep.subr.bf16.mxu0 0
    %2803 = vmatpush1.bf16.msra.mxu0 %v987
    %2804 = vmatprep.subr.bf16.mxu0 0
    %2805 = vmatpush1.bf16.msra.mxu0 %v988
    %2806 = vmatprep.subr.bf16.mxu0 0
    %2807 = vmatpush1.bf16.msra.mxu0 0
    %2808 = vmatprep.subr.bf16.mxu0 0
    %2809 = vmatpush1.bf16.msra.mxu0 0
    %2810 = vmatprep.subr.bf16.mxu0 0
    %2811 = vmatpush1.bf16.msra.mxu0 0
    %2812 = vmatprep.subr.bf16.mxu0 0
    %2813 = vmatpush1.bf16.msra.mxu0 0
    %2814 = vmatprep.subr.bf16.mxu0 0
    %2815 = vmatpush1.bf16.msra.mxu0 0
    %2816 = vmatprep.subr.bf16.mxu0 0
    %2817 = vmatpush1.bf16.msra.mxu0 0
    %2818 = vmatprep.subr.bf16.mxu0 0
    %2819 = vmatpush1.bf16.msra.mxu0 0
    %2820 = vmatprep.subr.bf16.mxu0 0
    %2821 = vmatpush1.bf16.msra.mxu0 0
    %2822 = vmatprep.subr.bf16.mxu0 0
    %2823 = vmatpush1.bf16.msra.mxu0 0
    %2824 = vmatprep.subr.bf16.mxu0 0
    %2825 = vmatpush1.bf16.msra.mxu0 0
    %2826 = vmatprep.subr.bf16.mxu0 0
    %2827 = vmatpush1.bf16.msra.mxu0 0
    %2828 = vmatprep.subr.bf16.mxu0 0
    %2829 = vmatpush1.bf16.msra.mxu0 0
    %2830 = vmatprep.mubr.bf16.mxu0 0
    %2831 = vmatmul.mubr.bf16.gmra.mrb[0].mxu0 %v2796
    %v2832 = vpop.f32.mrb[0].mxu0
    %v2833 = vadd.f32 %v352, %v2832
    %v2834 = vpop.f32.mrb[0].mxu0
    %v2835 = vpop.f32.mrb[0].mxu0
    %v2836 = vpop.f32.mrb[0].mxu0
    %2837 = vdwg.mxu0
    %v2838 = vmax.f32 %v2833, 0.0
    %v2839 = vpack.c.bf16 %v2838, %v2838
    %v2841 = vsel %vm239, %v2839, 0
    %2843 = vmatprep.subr.bf16.mxu0 %v1071
    %2844 = vmatpush1.bf16.msra.mxu0 %v1070
    %2845 = vmatprep.subr.bf16.mxu0 %v1073
    %2846 = vmatpush1.bf16.msra.mxu0 %v1072
    %2847 = vmatprep.subr.bf16.mxu0 %v1075
    %2848 = vmatpush1.bf16.msra.mxu0 %v1074
    %2849 = vmatprep.subr.bf16.mxu0 %v1077
    %2850 = vmatpush1.bf16.msra.mxu0 %v1076
    %2851 = vmatprep.subr.bf16.mxu0 0
    %2852 = vmatpush1.bf16.msra.mxu0 0
    %2853 = vmatprep.subr.bf16.mxu0 0
    %2854 = vmatpush1.bf16.msra.mxu0 0
    %2855 = vmatprep.subr.bf16.mxu0 0
    %2856 = vmatpush1.bf16.msra.mxu0 0
    %2857 = vmatprep.subr.bf16.mxu0 0
    %2858 = vmatpush1.bf16.msra.mxu0 0
    %2859 = vmatprep.subr.bf16.mxu0 0
    %2860 = vmatpush1.bf16.msra.mxu0 0
    %2861 = vmatprep.subr.bf16.mxu0 0
    %2862 = vmatpush1.bf16.msra.mxu0 0
    %2863 = vmatprep.subr.bf16.mxu0 0
    %2864 = vmatpush1.bf16.msra.mxu0 0
    %2865 = vmatprep.subr.bf16.mxu0 0
    %2866 = vmatpush1.bf16.msra.mxu0 0
    %2867 = vmatprep.subr.bf16.mxu0 0
    %2868 = vmatpush1.bf16.msra.mxu0 0
    %2869 = vmatprep.subr.bf16.mxu0 0
    %2870 = vmatpush1.bf16.msra.mxu0 0
    %2871 = vmatprep.subr.bf16.mxu0 0
    %2872 = vmatpush1.bf16.msra.mxu0 0
    %2873 = vmatprep.subr.bf16.mxu0 0
    %2874 = vmatpush1.bf16.msra.mxu0 0
    %2875 = vmatprep.mubr.bf16.mxu0 0
    %2876 = vmatmul.mubr.bf16.gmra.mrb[0].mxu0 %v2841
    %v2877 = vpop.f32.mrb[0].mxu0
    %v2878 = vadd.f32 0.0, %v2877
    %v2879 = vpop.f32.mrb[0].mxu0
    %v2880 = vadd.f32 0.0, %v2879
    %v2881 = vpop.f32.mrb[0].mxu0
    %v2882 = vpop.f32.mrb[0].mxu0
    %2883 = vdwg.mxu0
    %2885 = vrot.lane.b32.xlu0 %v2672, 64
    %v2886 = vpop.permute.xlu0 %2885
    %v2888 = vadd.f32 %v2880, %v2886
    %v2889 = vadd.f32 %v2888, %v1136
    %v2890 = vmax.f32 %v2889, 0.0
    %v2891 = vadd.f32 %v307, %v2878
    %v2892 = vadd.f32 %v309, %v2880
    %v2893 = vadd.f32 %v2891, %v371
    %v2894 = vadd.f32 %v2892, %v375
    %v2895 = vadd.f32 %v2893, %v2674
    %v2896 = vxor.u32 %v2895, 2147483648
    %v2897 = vmul.f32 %v2896, 1.442695
    %v2898 = vpow.pop %v2897
    %v2899 = vadd.f32 %v2898, 1.0
    %v2900 = vrcp.pop %v2899
    %v2901 = vmul.f32 1.0, %v2900
    %v2902 = vadd.f32 %v2713, %v383
    %v2903 = vmul.f32 %v2901, %v2902
    %v2904 = vadd.f32 %v2894, %v2903
    %v2905 = vtanh.pop %v2904
    %v2906 = vsub.f32 1.0, %v2901
    %2908 = vrot.lane.b32.xlu0 %v2905, 64
    %v2909 = vpop.permute.xlu0 %2908
    %v2911 = vmul.f32 %v2906, %v2909
    %v2912 = vmul.f32 %v2901, %v2488
    %v2913 = vadd.f32 %v2911, %v2912
    %v2914 = vpack.c.bf16 %v2913, %v2913
    %2916 = vrot.lane.b32.xlu0 %v2914, 64
    %v2917 = vpop.permute.xlu0 %2916
    %v2919 = vsel %vm239, %v2917, 0
    %2921 = vmatprep.subr.bf16.mxu0 %v1200
    %2922 = vmatpush1.bf16.msra.mxu0 %v1199
    %2923 = vmatprep.subr.bf16.mxu0 %v1202
    %2924 = vmatpush1.bf16.msra.mxu0 %v1201
    %2925 = vmatprep.subr.bf16.mxu0 %v1204
    %2926 = vmatpush1.bf16.msra.mxu0 %v1203
    %2927 = vmatprep.subr.bf16.mxu0 %v1206
    %2928 = vmatpush1.bf16.msra.mxu0 %v1205
    %2929 = vmatprep.subr.bf16.mxu0 0
    %2930 = vmatpush1.bf16.msra.mxu0 0
    %2931 = vmatprep.subr.bf16.mxu0 0
    %2932 = vmatpush1.bf16.msra.mxu0 0
    %2933 = vmatprep.subr.bf16.mxu0 0
    %2934 = vmatpush1.bf16.msra.mxu0 0
    %2935 = vmatprep.subr.bf16.mxu0 0
    %2936 = vmatpush1.bf16.msra.mxu0 0
    %2937 = vmatprep.subr.bf16.mxu0 0
    %2938 = vmatpush1.bf16.msra.mxu0 0
    %2939 = vmatprep.subr.bf16.mxu0 0
    %2940 = vmatpush1.bf16.msra.mxu0 0
    %2941 = vmatprep.subr.bf16.mxu0 0
    %2942 = vmatpush1.bf16.msra.mxu0 0
    %2943 = vmatprep.subr.bf16.mxu0 0
    %2944 = vmatpush1.bf16.msra.mxu0 0
    %2945 = vmatprep.subr.bf16.mxu0 0
    %2946 = vmatpush1.bf16.msra.mxu0 0
    %2947 = vmatprep.subr.bf16.mxu0 0
    %2948 = vmatpush1.bf16.msra.mxu0 0
    %2949 = vmatprep.subr.bf16.mxu0 0
    %2950 = vmatpush1.bf16.msra.mxu0 0
    %2951 = vmatprep.subr.bf16.mxu0 0
    %2952 = vmatpush1.bf16.msra.mxu0 0
    %2953 = vmatprep.mubr.bf16.mxu0 0
    %2954 = vmatmul.mubr.bf16.gmra.mrb[0].mxu0 %v2919
    %v2955 = vpop.f32.mrb[0].mxu0
    %v2956 = vadd.f32 %v390, %v2955
    %v2957 = vpop.f32.mrb[0].mxu0
    %v2958 = vadd.f32 %v394, %v2957
    %v2959 = vpop.f32.mrb[0].mxu0
    %v2960 = vpop.f32.mrb[0].mxu0
    %2961 = vdwg.mxu0
    %v2962 = vadd.f32 %v2956, %v2633
    %v2963 = vxor.u32 %v2962, 2147483648
    %v2964 = vmul.f32 %v2963, 1.442695
    %v2965 = vpow.pop %v2964
    %v2966 = vadd.f32 %v2965, 1.0
    %v2967 = vrcp.pop %v2966
    %v2968 = vmul.f32 1.0, %v2967
    %v2969 = vadd.f32 %v2672, %v1267
    %2971 = vrot.lane.b32.xlu0 %v2969, 64
    %v2972 = vpop.permute.xlu0 %2971
    %v2974 = vmul.f32 %v2968, %v2972
    %v2975 = vadd.f32 %v2958, %v2974
    %v2976 = vtanh.pop %v2975
    %v2977 = vsub.f32 1.0, %v2968
    %2979 = vrot.lane.b32.xlu0 %v2976, 64
    %v2980 = vpop.permute.xlu0 %2979
    %v2982 = vmul.f32 %v2977, %v2980
    %v2983 = vmul.f32 %v2968, %v2559
    %v2984 = vadd.f32 %v2982, %v2983
    %v2985 = vmul.f32 %v2791, %v2791
    %v2986 = vrcp.pop %v2985
    %v2987 = vlog2.pop %v2791
    %v2988 = vmul.f32 %v2987, 0.6931472
    %2990 = vrot.lane.b32.xlu0 %v2988, 64
    %v2991 = vpop.permute.xlu0 %2990
    %v2993 = vsub.f32 %v2988, %v2991
    %v2994 = vmul.f32 %v2993, 2.0
    %2996 = vrot.lane.b32.xlu0 %v2768, 64
    %v2997 = vpop.permute.xlu0 %2996
    %v2999 = vsub.f32 %v2768, %v2997
    %v3000 = vmul.f32 %v2999, %v2999
    %v3001 = vadd.f32 %v2985, %v3000
    %3003 = vrot.lane.b32.xlu0 %v2986, 64
    %v3004 = vpop.permute.xlu0 %3003
    %v3006 = vmul.f32 %v3001, %v3004
    %3008 = vrot.lane.b32.xlu0 %v3006, 64
    %v3009 = vpop.permute.xlu0 %3008
    %v3011 = vadd.f32 %v2994, %v3009
    %v3012 = vsub.f32 %v3011, 1.0
    %v3013 = vmul.f32 %v3012, 0.5
    %v3014 = vadd.f32 %v2589, %v3013
    %3016 = vrot.lane.b32.xlu0 %v2984, 64
    %v3017 = vpop.permute.xlu0 %3016
    %v3019 = vsel %vm239, %v3017, %v2913
    %v3020 = vpack.c.bf16 %v3019, %v3019
    %3021 = vmatprep.subr.bf16.mxu0 %v581
    %3022 = vmatpush1.bf16.msra.mxu0 %v580
    %3023 = vmatprep.subr.bf16.mxu0 %v586
    %3024 = vmatpush1.bf16.msra.mxu0 %v585
    %3025 = vmatprep.subr.bf16.mxu0 %v591
    %3026 = vmatpush1.bf16.msra.mxu0 %v590
    %3027 = vmatprep.subr.bf16.mxu0 %v596
    %3028 = vmatpush1.bf16.msra.mxu0 %v595
    %3029 = vmatprep.subr.bf16.mxu0 %v601
    %3030 = vmatpush1.bf16.msra.mxu0 %v600
    %3031 = vmatprep.subr.bf16.mxu0 %v606
    %3032 = vmatpush1.bf16.msra.mxu0 %v605
    %3033 = vmatprep.subr.bf16.mxu0 %v611
    %3034 = vmatpush1.bf16.msra.mxu0 %v610
    %3035 = vmatprep.subr.bf16.mxu0 %v616
    %3036 = vmatpush1.bf16.msra.mxu0 %v615
    %3037 = vmatprep.subr.bf16.mxu0 0
    %3038 = vmatpush1.bf16.msra.mxu0 0
    %3039 = vmatprep.subr.bf16.mxu0 0
    %3040 = vmatpush1.bf16.msra.mxu0 0
    %3041 = vmatprep.subr.bf16.mxu0 0
    %3042 = vmatpush1.bf16.msra.mxu0 0
    %3043 = vmatprep.subr.bf16.mxu0 0
    %3044 = vmatpush1.bf16.msra.mxu0 0
    %3045 = vmatprep.subr.bf16.mxu0 0
    %3046 = vmatpush1.bf16.msra.mxu0 0
    %3047 = vmatprep.subr.bf16.mxu0 0
    %3048 = vmatpush1.bf16.msra.mxu0 0
    %3049 = vmatprep.subr.bf16.mxu0 0
    %3050 = vmatpush1.bf16.msra.mxu0 0
    %3051 = vmatprep.subr.bf16.mxu0 0
    %3052 = vmatpush1.bf16.msra.mxu0 0
    %3053 = vmatprep.mubr.bf16.mxu0 0
    %3054 = vmatmul.mubr.bf16.gmra.mrb[0].mxu0 %v3020
    %v3055 = vpop.f32.mrb[0].mxu0
    %v3056 = vadd.f32 0.0, %v3055
    %v3057 = vpop.f32.mrb[0].mxu0
    %v3058 = vadd.f32 0.0, %v3057
    %v3059 = vpop.f32.mrb[0].mxu0
    %v3060 = vpop.f32.mrb[0].mxu0
    %3061 = vdwg.mxu0
    %3062 = vmatprep.subr.bf16.mxu0 %v583
    %3063 = vmatpush1.bf16.msra.mxu0 %v582
    %3064 = vmatprep.subr.bf16.mxu0 %v588
    %3065 = vmatpush1.bf16.msra.mxu0 %v587
    %3066 = vmatprep.subr.bf16.mxu0 %v593
    %3067 = vmatpush1.bf16.msra.mxu0 %v592
    %3068 = vmatprep.subr.bf16.mxu0 %v598
    %3069 = vmatpush1.bf16.msra.mxu0 %v597
    %3070 = vmatprep.subr.bf16.mxu0 %v603
    %3071 = vmatpush1.bf16.msra.mxu0 %v602
    %3072 = vmatprep.subr.bf16.mxu0 %v608
    %3073 = vmatpush1.bf16.msra.mxu0 %v607
    %3074 = vmatprep.subr.bf16.mxu0 %v613
    %3075 = vmatpush1.bf16.msra.mxu0 %v612
    %3076 = vmatprep.subr.bf16.mxu0 %v618
    %3077 = vmatpush1.bf16.msra.mxu0 %v617
    %3078 = vmatprep.subr.bf16.mxu0 0
    %3079 = vmatpush1.bf16.msra.mxu0 0
    %3080 = vmatprep.subr.bf16.mxu0 0
    %3081 = vmatpush1.bf16.msra.mxu0 0
    %3082 = vmatprep.subr.bf16.mxu0 0
    %3083 = vmatpush1.bf16.msra.mxu0 0
    %3084 = vmatprep.subr.bf16.mxu0 0
    %3085 = vmatpush1.bf16.msra.mxu0 0
    %3086 = vmatprep.subr.bf16.mxu0 0
    %3087 = vmatpush1.bf16.msra.mxu0 0
    %3088 = vmatprep.subr.bf16.mxu0 0
    %3089 = vmatpush1.bf16.msra.mxu0 0
    %3090 = vmatprep.subr.bf16.mxu0 0
    %3091 = vmatpush1.bf16.msra.mxu0 0
    %3092 = vmatprep.subr.bf16.mxu0 0
    %3093 = vmatpush1.bf16.msra.mxu0 0
    %3094 = vmatprep.mubr.bf16.mxu0 0
    %3095 = vmatmul.mubr.bf16.gmra.mrb[0].mxu0 %v3020
    %v3096 = vpop.f32.mrb[0].mxu0
    %v3097 = vadd.f32 0.0, %v3096
    %v3098 = vpop.f32.mrb[0].mxu0
    %v3099 = vadd.f32 0.0, %v3098
    %v3100 = vpop.f32.mrb[0].mxu0
    %v3101 = vpop.f32.mrb[0].mxu0
    %3102 = vdwg.mxu0
    %3103 = vmatprep.subr.bf16.mxu0 0
    %3104 = vmatpush1.bf16.msra.mxu0 %v584
    %3105 = vmatprep.subr.bf16.mxu0 0
    %3106 = vmatpush1.bf16.msra.mxu0 %v589
    %3107 = vmatprep.subr.bf16.mxu0 0
    %3108 = vmatpush1.bf16.msra.mxu0 %v594
    %3109 = vmatprep.subr.bf16.mxu0 0
    %3110 = vmatpush1.bf16.msra.mxu0 %v599
    %3111 = vmatprep.subr.bf16.mxu0 0
    %3112 = vmatpush1.bf16.msra.mxu0 %v604
    %3113 = vmatprep.subr.bf16.mxu0 0
    %3114 = vmatpush1.bf16.msra.mxu0 %v609
    %3115 = vmatprep.subr.bf16.mxu0 0
    %3116 = vmatpush1.bf16.msra.mxu0 %v614
    %3117 = vmatprep.subr.bf16.mxu0 0
    %3118 = vmatpush1.bf16.msra.mxu0 %v619
    %3119 = vmatprep.subr.bf16.mxu0 0
    %3120 = vmatpush1.bf16.msra.mxu0 0
    %3121 = vmatprep.subr.bf16.mxu0 0
    %3122 = vmatpush1.bf16.msra.mxu0 0
    %3123 = vmatprep.subr.bf16.mxu0 0
    %3124 = vmatpush1.bf16.msra.mxu0 0
    %3125 = vmatprep.subr.bf16.mxu0 0
    %3126 = vmatpush1.bf16.msra.mxu0 0
    %3127 = vmatprep.subr.bf16.mxu0 0
    %3128 = vmatpush1.bf16.msra.mxu0 0
    %3129 = vmatprep.subr.bf16.mxu0 0
    %3130 = vmatpush1.bf16.msra.mxu0 0
    %3131 = vmatprep.subr.bf16.mxu0 0
    %3132 = vmatpush1.bf16.msra.mxu0 0
    %3133 = vmatprep.subr.bf16.mxu0 0
    %3134 = vmatpush1.bf16.msra.mxu0 0
    %3135 = vmatprep.mubr.bf16.mxu0 0
    %3136 = vmatmul.mubr.bf16.gmra.mrb[0].mxu0 %v3020
    %v3137 = vpop.f32.mrb[0].mxu0
    %v3138 = vadd.f32 0.0, %v3137
    %v3139 = vpop.f32.mrb[0].mxu0
    %v3140 = vpop.f32.mrb[0].mxu0
    %v3141 = vpop.f32.mrb[0].mxu0
    %3142 = vdwg.mxu0
    %3144 = vrot.lane.b32.xlu0 %v3056, 64
    %v3145 = vpop.permute.xlu0 %3144
    %v3147 = vadd.f32 %v313, %v3145
    %v3148 = vadd.f32 %v3147, %v788
    %v3149 = vmax.f32 %v3148, 0.0
    %v3150 = vadd.f32 %v3056, %v793
    %v3151 = vmax.f32 %v3150, 0.0
    %3153 = vrot.lane.b32.xlu0 %v3149, 64
    %v3154 = vpop.permute.xlu0 %3153
    %v3156 = vsel %vm239, %v3154, %v3151
    %v3157 = vpack.c.bf16 %v3156, %v3156
    %3158 = vmatprep.subr.bf16.mxu0 %v868
    %3159 = vmatpush1.bf16.msra.mxu0 %v867
    %3160 = vmatprep.subr.bf16.mxu0 %v870
    %3161 = vmatpush1.bf16.msra.mxu0 %v869
    %3162 = vmatprep.subr.bf16.mxu0 %v872
    %3163 = vmatpush1.bf16.msra.mxu0 %v871
    %3164 = vmatprep.subr.bf16.mxu0 %v874
    %3165 = vmatpush1.bf16.msra.mxu0 %v873
    %3166 = vmatprep.subr.bf16.mxu0 %v876
    %3167 = vmatpush1.bf16.msra.mxu0 %v875
    %3168 = vmatprep.subr.bf16.mxu0 %v878
    %3169 = vmatpush1.bf16.msra.mxu0 %v877
    %3170 = vmatprep.subr.bf16.mxu0 %v880
    %3171 = vmatpush1.bf16.msra.mxu0 %v879
    %3172 = vmatprep.subr.bf16.mxu0 %v882
    %3173 = vmatpush1.bf16.msra.mxu0 %v881
    %3174 = vmatprep.subr.bf16.mxu0 0
    %3175 = vmatpush1.bf16.msra.mxu0 0
    %3176 = vmatprep.subr.bf16.mxu0 0
    %3177 = vmatpush1.bf16.msra.mxu0 0
    %3178 = vmatprep.subr.bf16.mxu0 0
    %3179 = vmatpush1.bf16.msra.mxu0 0
    %3180 = vmatprep.subr.bf16.mxu0 0
    %3181 = vmatpush1.bf16.msra.mxu0 0
    %3182 = vmatprep.subr.bf16.mxu0 0
    %3183 = vmatpush1.bf16.msra.mxu0 0
    %3184 = vmatprep.subr.bf16.mxu0 0
    %3185 = vmatpush1.bf16.msra.mxu0 0
    %3186 = vmatprep.subr.bf16.mxu0 0
    %3187 = vmatpush1.bf16.msra.mxu0 0
    %3188 = vmatprep.subr.bf16.mxu0 0
    %3189 = vmatpush1.bf16.msra.mxu0 0
    %3190 = vmatprep.mubr.bf16.mxu0 0
    %3191 = vmatmul.mubr.bf16.gmra.mrb[0].mxu0 %v3157
    %v3192 = vpop.f32.mrb[0].mxu0
    %v3193 = vadd.f32 %v359, %v3192
    %v3194 = vpop.f32.mrb[0].mxu0
    %v3195 = vadd.f32 %v363, %v3194
    %v3196 = vpop.f32.mrb[0].mxu0
    %v3197 = vpop.f32.mrb[0].mxu0
    %3198 = vdwg.mxu0
    %v3199 = vmax.f32 %v3195, 0.0
    %vm3200 = vcmp.ne.f32.partialorder %v3195, %v3195
    %v3201 = vadd.f32 %v3195, 0.0
    %v3202 = vand.u32 2147483647, %v3195
    %v3203 = vsub.f32 0.0, %v3202
    %v3204 = vmul.f32 %v3203, 1.442695
    %v3205 = vpow.pop %v3204
    %v3206 = vadd.f32 %v3205, 1.0
    %v3207 = vlog2.pop %v3206
    %v3208 = vmul.f32 %v3207, 0.6931472
    %v3209 = vmul.f32 -0.5, %v3205
    %v3210 = vadd.f32 %v3209, 1.0
    %v3211 = vmul.f32 %v3210, %v3205
    %v3212 = vand.u32 2147483647, %v3205
    %vm3213 = vcmp.lt.f32.partialorder %v3212, 0.0004427343
    %v3214 = vsel %vm3213, %v3211, %v3208
    %v3215 = vadd.f32 %v3199, %v3214
    %v3216 = vsel %vm3200, %v3201, %v3215
    %v3217 = vmul.f32 %v327, %v3216
    %v3218 = vadd.f32 %v3193, %v3217
    %v3219 = vpack.c.bf16 %v3218, %v3218
    %v3221 = vsel %vm239, %v3219, 0
    %3223 = vmatprep.subr.bf16.mxu0 0
    %3224 = vmatpush1.bf16.msra.mxu0 %v985
    %3225 = vmatprep.subr.bf16.mxu0 0
    %3226 = vmatpush1.bf16.msra.mxu0 %v986
    %3227 = vmatprep.subr.bf16.mxu0 0
    %3228 = vmatpush1.bf16.msra.mxu0 %v987
    %3229 = vmatprep.subr.bf16.mxu0 0
    %3230 = vmatpush1.bf16.msra.mxu0 %v988
    %3231 = vmatprep.subr.bf16.mxu0 0
    %3232 = vmatpush1.bf16.msra.mxu0 0
    %3233 = vmatprep.subr.bf16.mxu0 0
    %3234 = vmatpush1.bf16.msra.mxu0 0
    %3235 = vmatprep.subr.bf16.mxu0 0
    %3236 = vmatpush1.bf16.msra.mxu0 0
    %3237 = vmatprep.subr.bf16.mxu0 0
    %3238 = vmatpush1.bf16.msra.mxu0 0
    %3239 = vmatprep.subr.bf16.mxu0 0
    %3240 = vmatpush1.bf16.msra.mxu0 0
    %3241 = vmatprep.subr.bf16.mxu0 0
    %3242 = vmatpush1.bf16.msra.mxu0 0
    %3243 = vmatprep.subr.bf16.mxu0 0
    %3244 = vmatpush1.bf16.msra.mxu0 0
    %3245 = vmatprep.subr.bf16.mxu0 0
    %3246 = vmatpush1.bf16.msra.mxu0 0
    %3247 = vmatprep.subr.bf16.mxu0 0
    %3248 = vmatpush1.bf16.msra.mxu0 0
    %3249 = vmatprep.subr.bf16.mxu0 0
    %3250 = vmatpush1.bf16.msra.mxu0 0
    %3251 = vmatprep.subr.bf16.mxu0 0
    %3252 = vmatpush1.bf16.msra.mxu0 0
    %3253 = vmatprep.subr.bf16.mxu0 0
    %3254 = vmatpush1.bf16.msra.mxu0 0
    %3255 = vmatprep.mubr.bf16.mxu0 0
    %3256 = vmatmul.mubr.bf16.gmra.mrb[0].mxu0 %v3221
    %v3257 = vpop.f32.mrb[0].mxu0
    %v3258 = vadd.f32 %v352, %v3257
    %v3259 = vpop.f32.mrb[0].mxu0
    %v3260 = vpop.f32.mrb[0].mxu0
    %v3261 = vpop.f32.mrb[0].mxu0
    %3262 = vdwg.mxu0
    %v3263 = vmax.f32 %v3258, 0.0
    %v3264 = vpack.c.bf16 %v3263, %v3263
    %v3266 = vsel %vm239, %v3264, 0
    %3268 = vmatprep.subr.bf16.mxu0 %v1071
    %3269 = vmatpush1.bf16.msra.mxu0 %v1070
    %3270 = vmatprep.subr.bf16.mxu0 %v1073
    %3271 = vmatpush1.bf16.msra.mxu0 %v1072
    %3272 = vmatprep.subr.bf16.mxu0 %v1075
    %3273 = vmatpush1.bf16.msra.mxu0 %v1074
    %3274 = vmatprep.subr.bf16.mxu0 %v1077
    %3275 = vmatpush1.bf16.msra.mxu0 %v1076
    %3276 = vmatprep.subr.bf16.mxu0 0
    %3277 = vmatpush1.bf16.msra.mxu0 0
    %3278 = vmatprep.subr.bf16.mxu0 0
    %3279 = vmatpush1.bf16.msra.mxu0 0
    %3280 = vmatprep.subr.bf16.mxu0 0
    %3281 = vmatpush1.bf16.msra.mxu0 0
    %3282 = vmatprep.subr.bf16.mxu0 0
    %3283 = vmatpush1.bf16.msra.mxu0 0
    %3284 = vmatprep.subr.bf16.mxu0 0
    %3285 = vmatpush1.bf16.msra.mxu0 0
    %3286 = vmatprep.subr.bf16.mxu0 0
    %3287 = vmatpush1.bf16.msra.mxu0 0
    %3288 = vmatprep.subr.bf16.mxu0 0
    %3289 = vmatpush1.bf16.msra.mxu0 0
    %3290 = vmatprep.subr.bf16.mxu0 0
    %3291 = vmatpush1.bf16.msra.mxu0 0
    %3292 = vmatprep.subr.bf16.mxu0 0
    %3293 = vmatpush1.bf16.msra.mxu0 0
    %3294 = vmatprep.subr.bf16.mxu0 0
    %3295 = vmatpush1.bf16.msra.mxu0 0
    %3296 = vmatprep.subr.bf16.mxu0 0
    %3297 = vmatpush1.bf16.msra.mxu0 0
    %3298 = vmatprep.subr.bf16.mxu0 0
    %3299 = vmatpush1.bf16.msra.mxu0 0
    %3300 = vmatprep.mubr.bf16.mxu0 0
    %3301 = vmatmul.mubr.bf16.gmra.mrb[0].mxu0 %v3266
    %v3302 = vpop.f32.mrb[0].mxu0
    %v3303 = vadd.f32 0.0, %v3302
    %v3304 = vpop.f32.mrb[0].mxu0
    %v3305 = vadd.f32 0.0, %v3304
    %v3306 = vpop.f32.mrb[0].mxu0
    %v3307 = vpop.f32.mrb[0].mxu0
    %3308 = vdwg.mxu0
    %3310 = vrot.lane.b32.xlu0 %v3097, 64
    %v3311 = vpop.permute.xlu0 %3310
    %v3313 = vadd.f32 %v3305, %v3311
    %v3314 = vadd.f32 %v3313, %v1136
    %v3315 = vmax.f32 %v3314, 0.0
    %v3316 = vadd.f32 %v311, %v3303
    %v3317 = vadd.f32 %v313, %v3305
    %v3318 = vadd.f32 %v3316, %v371
    %v3319 = vadd.f32 %v3317, %v375
    %v3320 = vadd.f32 %v3318, %v3099
    %v3321 = vxor.u32 %v3320, 2147483648
    %v3322 = vmul.f32 %v3321, 1.442695
    %v3323 = vpow.pop %v3322
    %v3324 = vadd.f32 %v3323, 1.0
    %v3325 = vrcp.pop %v3324
    %v3326 = vmul.f32 1.0, %v3325
    %v3327 = vadd.f32 %v3138, %v383
    %v3328 = vmul.f32 %v3326, %v3327
    %v3329 = vadd.f32 %v3319, %v3328
    %v3330 = vtanh.pop %v3329
    %v3331 = vsub.f32 1.0, %v3326
    %3333 = vrot.lane.b32.xlu0 %v3330, 64
    %v3334 = vpop.permute.xlu0 %3333
    %v3336 = vmul.f32 %v3331, %v3334
    %v3337 = vmul.f32 %v3326, %v2913
    %v3338 = vadd.f32 %v3336, %v3337
    %v3339 = vpack.c.bf16 %v3338, %v3338
    %3341 = vrot.lane.b32.xlu0 %v3339, 64
    %v3342 = vpop.permute.xlu0 %3341
    %v3344 = vsel %vm239, %v3342, 0
    %3346 = vmatprep.subr.bf16.mxu0 %v1200
    %3347 = vmatpush1.bf16.msra.mxu0 %v1199
    %3348 = vmatprep.subr.bf16.mxu0 %v1202
    %3349 = vmatpush1.bf16.msra.mxu0 %v1201
    %3350 = vmatprep.subr.bf16.mxu0 %v1204
    %3351 = vmatpush1.bf16.msra.mxu0 %v1203
    %3352 = vmatprep.subr.bf16.mxu0 %v1206
    %3353 = vmatpush1.bf16.msra.mxu0 %v1205
    %3354 = vmatprep.subr.bf16.mxu0 0
    %3355 = vmatpush1.bf16.msra.mxu0 0
    %3356 = vmatprep.subr.bf16.mxu0 0
    %3357 = vmatpush1.bf16.msra.mxu0 0
    %3358 = vmatprep.subr.bf16.mxu0 0
    %3359 = vmatpush1.bf16.msra.mxu0 0
    %3360 = vmatprep.subr.bf16.mxu0 0
    %3361 = vmatpush1.bf16.msra.mxu0 0
    %3362 = vmatprep.subr.bf16.mxu0 0
    %3363 = vmatpush1.bf16.msra.mxu0 0
    %3364 = vmatprep.subr.bf16.mxu0 0
    %3365 = vmatpush1.bf16.msra.mxu0 0
    %3366 = vmatprep.subr.bf16.mxu0 0
    %3367 = vmatpush1.bf16.msra.mxu0 0
    %3368 = vmatprep.subr.bf16.mxu0 0
    %3369 = vmatpush1.bf16.msra.mxu0 0
    %3370 = vmatprep.subr.bf16.mxu0 0
    %3371 = vmatpush1.bf16.msra.mxu0 0
    %3372 = vmatprep.subr.bf16.mxu0 0
    %3373 = vmatpush1.bf16.msra.mxu0 0
    %3374 = vmatprep.subr.bf16.mxu0 0
    %3375 = vmatpush1.bf16.msra.mxu0 0
    %3376 = vmatprep.subr.bf16.mxu0 0
    %3377 = vmatpush1.bf16.msra.mxu0 0
    %3378 = vmatprep.mubr.bf16.mxu0 0
    %3379 = vmatmul.mubr.bf16.gmra.mrb[0].mxu0 %v3344
    %v3380 = vpop.f32.mrb[0].mxu0
    %v3381 = vadd.f32 %v390, %v3380
    %v3382 = vpop.f32.mrb[0].mxu0
    %v3383 = vadd.f32 %v394, %v3382
    %v3384 = vpop.f32.mrb[0].mxu0
    %v3385 = vpop.f32.mrb[0].mxu0
    %3386 = vdwg.mxu0
    %v3387 = vadd.f32 %v3381, %v3058
    %v3388 = vxor.u32 %v3387, 2147483648
    %v3389 = vmul.f32 %v3388, 1.442695
    %v3390 = vpow.pop %v3389
    %v3391 = vadd.f32 %v3390, 1.0
    %v3392 = vrcp.pop %v3391
    %v3393 = vmul.f32 1.0, %v3392
    %v3394 = vadd.f32 %v3097, %v1267
    %3396 = vrot.lane.b32.xlu0 %v3394, 64
    %v3397 = vpop.permute.xlu0 %3396
    %v3399 = vmul.f32 %v3393, %v3397
    %v3400 = vadd.f32 %v3383, %v3399
    %v3401 = vtanh.pop %v3400
    %v3402 = vsub.f32 1.0, %v3393
    %3404 = vrot.lane.b32.xlu0 %v3401, 64
    %v3405 = vpop.permute.xlu0 %3404
    %v3407 = vmul.f32 %v3402, %v3405
    %v3408 = vmul.f32 %v3393, %v2984
    %v3409 = vadd.f32 %v3407, %v3408
    %v3410 = vmul.f32 %v3216, %v3216
    %v3411 = vrcp.pop %v3410
    %v3412 = vlog2.pop %v3216
    %v3413 = vmul.f32 %v3412, 0.6931472
    %3415 = vrot.lane.b32.xlu0 %v3413, 64
    %v3416 = vpop.permute.xlu0 %3415
    %v3418 = vsub.f32 %v3413, %v3416
    %v3419 = vmul.f32 %v3418, 2.0
    %3421 = vrot.lane.b32.xlu0 %v3193, 64
    %v3422 = vpop.permute.xlu0 %3421
    %v3424 = vsub.f32 %v3193, %v3422
    %v3425 = vmul.f32 %v3424, %v3424
    %v3426 = vadd.f32 %v3410, %v3425
    %3428 = vrot.lane.b32.xlu0 %v3411, 64
    %v3429 = vpop.permute.xlu0 %3428
    %v3431 = vmul.f32 %v3426, %v3429
    %3433 = vrot.lane.b32.xlu0 %v3431, 64
    %v3434 = vpop.permute.xlu0 %3433
    %v3436 = vadd.f32 %v3419, %v3434
    %v3437 = vsub.f32 %v3436, 1.0
    %v3438 = vmul.f32 %v3437, 0.5
    %v3439 = vadd.f32 %v3014, %v3438
    %3441 = vrot.lane.b32.xlu0 %v3409, 64
    %v3442 = vpop.permute.xlu0 %3441
    %v3444 = vsel %vm239, %v3442, %v3338
    %v3445 = vpack.c.bf16 %v3444, %v3444
    %3446 = vmatprep.subr.bf16.mxu0 %v581
    %3447 = vmatpush1.bf16.msra.mxu0 %v580
    %3448 = vmatprep.subr.bf16.mxu0 %v586
    %3449 = vmatpush1.bf16.msra.mxu0 %v585
    %3450 = vmatprep.subr.bf16.mxu0 %v591
    %3451 = vmatpush1.bf16.msra.mxu0 %v590
    %3452 = vmatprep.subr.bf16.mxu0 %v596
    %3453 = vmatpush1.bf16.msra.mxu0 %v595
    %3454 = vmatprep.subr.bf16.mxu0 %v601
    %3455 = vmatpush1.bf16.msra.mxu0 %v600
    %3456 = vmatprep.subr.bf16.mxu0 %v606
    %3457 = vmatpush1.bf16.msra.mxu0 %v605
    %3458 = vmatprep.subr.bf16.mxu0 %v611
    %3459 = vmatpush1.bf16.msra.mxu0 %v610
    %3460 = vmatprep.subr.bf16.mxu0 %v616
    %3461 = vmatpush1.bf16.msra.mxu0 %v615
    %3462 = vmatprep.subr.bf16.mxu0 0
    %3463 = vmatpush1.bf16.msra.mxu0 0
    %3464 = vmatprep.subr.bf16.mxu0 0
    %3465 = vmatpush1.bf16.msra.mxu0 0
    %3466 = vmatprep.subr.bf16.mxu0 0
    %3467 = vmatpush1.bf16.msra.mxu0 0
    %3468 = vmatprep.subr.bf16.mxu0 0
    %3469 = vmatpush1.bf16.msra.mxu0 0
    %3470 = vmatprep.subr.bf16.mxu0 0
    %3471 = vmatpush1.bf16.msra.mxu0 0
    %3472 = vmatprep.subr.bf16.mxu0 0
    %3473 = vmatpush1.bf16.msra.mxu0 0
    %3474 = vmatprep.subr.bf16.mxu0 0
    %3475 = vmatpush1.bf16.msra.mxu0 0
    %3476 = vmatprep.subr.bf16.mxu0 0
    %3477 = vmatpush1.bf16.msra.mxu0 0
    %3478 = vmatprep.mubr.bf16.mxu0 0
    %3479 = vmatmul.mubr.bf16.gmra.mrb[0].mxu0 %v3445
    %v3480 = vpop.f32.mrb[0].mxu0
    %v3481 = vadd.f32 0.0, %v3480
    %v3482 = vpop.f32.mrb[0].mxu0
    %v3483 = vpop.f32.mrb[0].mxu0
    %v3484 = vpop.f32.mrb[0].mxu0
    %3485 = vdwg.mxu0
    %3486 = vmatprep.subr.bf16.mxu0 %v583
    %3487 = vmatpush1.bf16.msra.mxu0 %v582
    %3488 = vmatprep.subr.bf16.mxu0 %v588
    %3489 = vmatpush1.bf16.msra.mxu0 %v587
    %3490 = vmatprep.subr.bf16.mxu0 %v593
    %3491 = vmatpush1.bf16.msra.mxu0 %v592
    %3492 = vmatprep.subr.bf16.mxu0 %v598
    %3493 = vmatpush1.bf16.msra.mxu0 %v597
    %3494 = vmatprep.subr.bf16.mxu0 %v603
    %3495 = vmatpush1.bf16.msra.mxu0 %v602
    %3496 = vmatprep.subr.bf16.mxu0 %v608
    %3497 = vmatpush1.bf16.msra.mxu0 %v607
    %3498 = vmatprep.subr.bf16.mxu0 %v613
    %3499 = vmatpush1.bf16.msra.mxu0 %v612
    %3500 = vmatprep.subr.bf16.mxu0 %v618
    %3501 = vmatpush1.bf16.msra.mxu0 %v617
    %3502 = vmatprep.subr.bf16.mxu0 0
    %3503 = vmatpush1.bf16.msra.mxu0 0
    %3504 = vmatprep.subr.bf16.mxu0 0
    %3505 = vmatpush1.bf16.msra.mxu0 0
    %3506 = vmatprep.subr.bf16.mxu0 0
    %3507 = vmatpush1.bf16.msra.mxu0 0
    %3508 = vmatprep.subr.bf16.mxu0 0
    %3509 = vmatpush1.bf16.msra.mxu0 0
    %3510 = vmatprep.subr.bf16.mxu0 0
    %3511 = vmatpush1.bf16.msra.mxu0 0
    %3512 = vmatprep.subr.bf16.mxu0 0
    %3513 = vmatpush1.bf16.msra.mxu0 0
    %3514 = vmatprep.subr.bf16.mxu0 0
    %3515 = vmatpush1.bf16.msra.mxu0 0
    %3516 = vmatprep.subr.bf16.mxu0 0
    %3517 = vmatpush1.bf16.msra.mxu0 0
    %3518 = vmatprep.mubr.bf16.mxu0 0
    %3519 = vmatmul.mubr.bf16.gmra.mrb[0].mxu0 %v3445
    %v3520 = vpop.f32.mrb[0].mxu0
    %v3521 = vadd.f32 0.0, %v3520
    %v3522 = vpop.f32.mrb[0].mxu0
    %v3523 = vpop.f32.mrb[0].mxu0
    %v3524 = vpop.f32.mrb[0].mxu0
    %3525 = vdwg.mxu0
    %3527 = vrot.lane.b32.xlu0 %v3481, 64
    %v3528 = vpop.permute.xlu0 %3527
    %v3530 = vadd.f32 %v318, %v3528
    %v3531 = vadd.f32 %v3530, %v788
    %v3532 = vmax.f32 %v3531, 0.0
    %v3533 = vadd.f32 %v3481, %v793
    %v3534 = vmax.f32 %v3533, 0.0
    %3536 = vrot.lane.b32.xlu0 %v3532, 64
    %v3537 = vpop.permute.xlu0 %3536
    %v3539 = vsel %vm239, %v3537, %v3534
    %v3540 = vpack.c.bf16 %v3539, %v3539
    %3541 = vmatprep.subr.bf16.mxu0 %v868
    %3542 = vmatpush1.bf16.msra.mxu0 %v867
    %3543 = vmatprep.subr.bf16.mxu0 %v870
    %3544 = vmatpush1.bf16.msra.mxu0 %v869
    %3545 = vmatprep.subr.bf16.mxu0 %v872
    %3546 = vmatpush1.bf16.msra.mxu0 %v871
    %3547 = vmatprep.subr.bf16.mxu0 %v874
    %3548 = vmatpush1.bf16.msra.mxu0 %v873
    %3549 = vmatprep.subr.bf16.mxu0 %v876
    %3550 = vmatpush1.bf16.msra.mxu0 %v875
    %3551 = vmatprep.subr.bf16.mxu0 %v878
    %3552 = vmatpush1.bf16.msra.mxu0 %v877
    %3553 = vmatprep.subr.bf16.mxu0 %v880
    %3554 = vmatpush1.bf16.msra.mxu0 %v879
    %3555 = vmatprep.subr.bf16.mxu0 %v882
    %3556 = vmatpush1.bf16.msra.mxu0 %v881
    %3557 = vmatprep.subr.bf16.mxu0 0
    %3558 = vmatpush1.bf16.msra.mxu0 0
    %3559 = vmatprep.subr.bf16.mxu0 0
    %3560 = vmatpush1.bf16.msra.mxu0 0
    %3561 = vmatprep.subr.bf16.mxu0 0
    %3562 = vmatpush1.bf16.msra.mxu0 0
    %3563 = vmatprep.subr.bf16.mxu0 0
    %3564 = vmatpush1.bf16.msra.mxu0 0
    %3565 = vmatprep.subr.bf16.mxu0 0
    %3566 = vmatpush1.bf16.msra.mxu0 0
    %3567 = vmatprep.subr.bf16.mxu0 0
    %3568 = vmatpush1.bf16.msra.mxu0 0
    %3569 = vmatprep.subr.bf16.mxu0 0
    %3570 = vmatpush1.bf16.msra.mxu0 0
    %3571 = vmatprep.subr.bf16.mxu0 0
    %3572 = vmatpush1.bf16.msra.mxu0 0
    %3573 = vmatprep.mubr.bf16.mxu0 0
    %3574 = vmatmul.mubr.bf16.gmra.mrb[0].mxu0 %v3540
    %v3575 = vpop.f32.mrb[0].mxu0
    %v3576 = vadd.f32 %v359, %v3575
    %v3577 = vpop.f32.mrb[0].mxu0
    %v3578 = vadd.f32 %v363, %v3577
    %v3579 = vpop.f32.mrb[0].mxu0
    %v3580 = vpop.f32.mrb[0].mxu0
    %3581 = vdwg.mxu0
    %v3582 = vmax.f32 %v3578, 0.0
    %vm3583 = vcmp.ne.f32.partialorder %v3578, %v3578
    %v3584 = vadd.f32 %v3578, 0.0
    %v3585 = vand.u32 2147483647, %v3578
    %v3586 = vsub.f32 0.0, %v3585
    %v3587 = vmul.f32 %v3586, 1.442695
    %v3588 = vpow.pop %v3587
    %v3589 = vadd.f32 %v3588, 1.0
    %v3590 = vlog2.pop %v3589
    %v3591 = vmul.f32 %v3590, 0.6931472
    %v3592 = vmul.f32 -0.5, %v3588
    %v3593 = vadd.f32 %v3592, 1.0
    %v3594 = vmul.f32 %v3593, %v3588
    %v3595 = vand.u32 2147483647, %v3588
    %vm3596 = vcmp.lt.f32.partialorder %v3595, 0.0004427343
    %v3597 = vsel %vm3596, %v3594, %v3591
    %v3598 = vadd.f32 %v3582, %v3597
    %v3599 = vsel %vm3583, %v3584, %v3598
    %v3600 = vmul.f32 %v328, %v3599
    %v3601 = vadd.f32 %v3576, %v3600
    %v3602 = vpack.c.bf16 %v3601, %v3601
    %v3604 = vsel %vm239, %v3602, 0
    %3606 = vmatprep.subr.bf16.mxu0 0
    %3607 = vmatpush1.bf16.msra.mxu0 %v985
    %3608 = vmatprep.subr.bf16.mxu0 0
    %3609 = vmatpush1.bf16.msra.mxu0 %v986
    %3610 = vmatprep.subr.bf16.mxu0 0
    %3611 = vmatpush1.bf16.msra.mxu0 %v987
    %3612 = vmatprep.subr.bf16.mxu0 0
    %3613 = vmatpush1.bf16.msra.mxu0 %v988
    %3614 = vmatprep.subr.bf16.mxu0 0
    %3615 = vmatpush1.bf16.msra.mxu0 0
    %3616 = vmatprep.subr.bf16.mxu0 0
    %3617 = vmatpush1.bf16.msra.mxu0 0
    %3618 = vmatprep.subr.bf16.mxu0 0
    %3619 = vmatpush1.bf16.msra.mxu0 0
    %3620 = vmatprep.subr.bf16.mxu0 0
    %3621 = vmatpush1.bf16.msra.mxu0 0
    %3622 = vmatprep.subr.bf16.mxu0 0
    %3623 = vmatpush1.bf16.msra.mxu0 0
    %3624 = vmatprep.subr.bf16.mxu0 0
    %3625 = vmatpush1.bf16.msra.mxu0 0
    %3626 = vmatprep.subr.bf16.mxu0 0
    %3627 = vmatpush1.bf16.msra.mxu0 0
    %3628 = vmatprep.subr.bf16.mxu0 0
    %3629 = vmatpush1.bf16.msra.mxu0 0
    %3630 = vmatprep.subr.bf16.mxu0 0
    %3631 = vmatpush1.bf16.msra.mxu0 0
    %3632 = vmatprep.subr.bf16.mxu0 0
    %3633 = vmatpush1.bf16.msra.mxu0 0
    %3634 = vmatprep.subr.bf16.mxu0 0
    %3635 = vmatpush1.bf16.msra.mxu0 0
    %3636 = vmatprep.subr.bf16.mxu0 0
    %3637 = vmatpush1.bf16.msra.mxu0 0
    %3638 = vmatprep.mubr.bf16.mxu0 0
    %3639 = vmatmul.mubr.bf16.gmra.mrb[0].mxu0 %v3604
    %v3640 = vpop.f32.mrb[0].mxu0
    %v3641 = vadd.f32 %v352, %v3640
    %v3642 = vpop.f32.mrb[0].mxu0
    %v3643 = vpop.f32.mrb[0].mxu0
    %v3644 = vpop.f32.mrb[0].mxu0
    %3645 = vdwg.mxu0
    %v3646 = vmax.f32 %v3641, 0.0
    %v3647 = vpack.c.bf16 %v3646, %v3646
    %v3649 = vsel %vm239, %v3647, 0
    %3651 = vmatprep.subr.bf16.mxu0 %v1071
    %3652 = vmatpush1.bf16.msra.mxu0 %v1070
    %3653 = vmatprep.subr.bf16.mxu0 %v1073
    %3654 = vmatpush1.bf16.msra.mxu0 %v1072
    %3655 = vmatprep.subr.bf16.mxu0 %v1075
    %3656 = vmatpush1.bf16.msra.mxu0 %v1074
    %3657 = vmatprep.subr.bf16.mxu0 %v1077
    %3658 = vmatpush1.bf16.msra.mxu0 %v1076
    %3659 = vmatprep.subr.bf16.mxu0 0
    %3660 = vmatpush1.bf16.msra.mxu0 0
    %3661 = vmatprep.subr.bf16.mxu0 0
    %3662 = vmatpush1.bf16.msra.mxu0 0
    %3663 = vmatprep.subr.bf16.mxu0 0
    %3664 = vmatpush1.bf16.msra.mxu0 0
    %3665 = vmatprep.subr.bf16.mxu0 0
    %3666 = vmatpush1.bf16.msra.mxu0 0
    %3667 = vmatprep.subr.bf16.mxu0 0
    %3668 = vmatpush1.bf16.msra.mxu0 0
    %3669 = vmatprep.subr.bf16.mxu0 0
    %3670 = vmatpush1.bf16.msra.mxu0 0
    %3671 = vmatprep.subr.bf16.mxu0 0
    %3672 = vmatpush1.bf16.msra.mxu0 0
    %3673 = vmatprep.subr.bf16.mxu0 0
    %3674 = vmatpush1.bf16.msra.mxu0 0
    %3675 = vmatprep.subr.bf16.mxu0 0
    %3676 = vmatpush1.bf16.msra.mxu0 0
    %3677 = vmatprep.subr.bf16.mxu0 0
    %3678 = vmatpush1.bf16.msra.mxu0 0
    %3679 = vmatprep.subr.bf16.mxu0 0
    %3680 = vmatpush1.bf16.msra.mxu0 0
    %3681 = vmatprep.subr.bf16.mxu0 0
    %3682 = vmatpush1.bf16.msra.mxu0 0
    %3683 = vmatprep.mubr.bf16.mxu0 0
    %3684 = vmatmul.mubr.bf16.gmra.mrb[0].mxu0 %v3649
    %v3685 = vpop.f32.mrb[0].mxu0
    %v3686 = vpop.f32.mrb[0].mxu0
    %v3687 = vadd.f32 0.0, %v3686
    %v3688 = vpop.f32.mrb[0].mxu0
    %v3689 = vpop.f32.mrb[0].mxu0
    %3690 = vdwg.mxu0
    %3692 = vrot.lane.b32.xlu0 %v3521, 64
    %v3693 = vpop.permute.xlu0 %3692
    %v3695 = vadd.f32 %v3687, %v3693
    %v3696 = vadd.f32 %v3695, %v1136
    %v3697 = vmax.f32 %v3696, 0.0
    %v3698 = vmul.f32 %v3599, %v3599
    %v3699 = vrcp.pop %v3698
    %v3700 = vlog2.pop %v3599
    %v3701 = vmul.f32 %v3700, 0.6931472
    %3703 = vrot.lane.b32.xlu0 %v3701, 64
    %v3704 = vpop.permute.xlu0 %3703
    %v3706 = vsub.f32 %v3701, %v3704
    %v3707 = vmul.f32 %v3706, 2.0
    %3709 = vrot.lane.b32.xlu0 %v3576, 64
    %v3710 = vpop.permute.xlu0 %3709
    %v3712 = vsub.f32 %v3576, %v3710
    %v3713 = vmul.f32 %v3712, %v3712
    %v3714 = vadd.f32 %v3698, %v3713
    %3716 = vrot.lane.b32.xlu0 %v3699, 64
    %v3717 = vpop.permute.xlu0 %3716
    %v3719 = vmul.f32 %v3714, %v3717
    %3721 = vrot.lane.b32.xlu0 %v3719, 64
    %v3722 = vpop.permute.xlu0 %3721
    %v3724 = vadd.f32 %v3707, %v3722
    %v3725 = vsub.f32 %v3724, 1.0
    %v3726 = vmul.f32 %v3725, 0.5
    %v3727 = vadd.f32 %v3439, %v3726
    %v3728 = vld [vmem:[%s3] sm:$0xff]
    %3730 = vset.pattern.permute.xlu0 0
    %3731 = vperm.xlu0 %3730, %v3728
    %v3732 = vpop.permute.xlu0 %3731
    %v3734 = vmul.f32 %v3727, %v3732
    %3736 = vrot.lane.b32.xlu0 %v3734, 64
    %v3737 = vpop.permute.xlu0 %3736
    %v3739 = vsel %vm239, %v3737, 0.0
    %3740 = vadd.xlane.f32.xlu0 %v3739
    %v3741 = vpop.xlane.xlu0 %3740
    %v3742 = vrot.slane %v3741, 4
    %v3743 = vadd.f32 %v3741, %v3742
    %v3744 = vrot.slane %v3743, 2
    %v3745 = vadd.f32 %v3743, %v3744
    %v3746 = vrot.slane %v3745, 1
    %v3747 = vadd.f32 %v3745, %v3746
    %s3748 = vtos %v3747
    %v3749 = vstv %s3748
    %vm3750 = vcmask 0
    %3751 = vst.msk [vmem:[#allocation2] sm:$0x1] %vm3750, %v3749
    %v3752 = vld [vmem:[%s17] sm:$0x1]
    %v3754 = vlaneseq
    %v3755 = vshrl.u32 %v3754, 7
    %v3756 = vsub.s32 0, %v3755
    %v3757 = vrot.slane %v3752, %v3756
    %v3759 = vpack.c.bf16 %v1615, %v1139
    %v3760 = vpack.c.bf16 %v2465, %v2040
    %v3761 = vpack.c.bf16 %v3315, %v2890
    %v3762 = vpack.c.bf16 %v3697, %v3697
    %v3763 = vld [vmem:[%s16] sm:$0xf]
    %v3764 = vld [vmem:[%s16 + $0x4] sm:$0xf]
    %v3765 = vld [vmem:[%s16 + $0x8] sm:$0xf]
    %v3766 = vld [vmem:[%s16 + $0xc] sm:$0xf]
    %v3767 = vld [vmem:[%s16 + $0x10] sm:$0xf]
    %v3768 = vld [vmem:[%s16 + $0x14] sm:$0xf]
    %v3769 = vld [vmem:[%s16 + $0x18] sm:$0xf]
    %v3770 = vld [vmem:[%s16 + $0x1c] sm:$0xf]
    %3775 = vrot.lane.b32.xlu0 %v3759, 64
    %v3776 = vpop.permute.xlu0 %3775
    %3777 = vrot.lane.b32.xlu0 %v3760, 64
    %v3778 = vpop.permute.xlu0 %3777
    %3779 = vrot.lane.b32.xlu0 %v3761, 64
    %v3780 = vpop.permute.xlu0 %3779
    %3781 = vrot.lane.b32.xlu0 %v3762, 64
    %v3782 = vpop.permute.xlu0 %3781
    %v3791 = vunpack.c.l.b16 %v3763
    %v3792 = vunpack.c.l.b16 %v3764
    %v3793 = vunpack.c.l.b16 %v3765
    %v3794 = vunpack.c.l.b16 %v3766
    %v3795 = vunpack.c.l.b16 %v3767
    %v3796 = vunpack.c.l.b16 %v3768
    %v3797 = vunpack.c.l.b16 %v3769
    %v3798 = vunpack.c.l.b16 %v3770
    %v3799 = vpack.c.b16 %v3792, %v3791
    %v3800 = vpack.c.b16 %v3794, %v3793
    %v3801 = vpack.c.b16 %v3796, %v3795
    %v3802 = vpack.c.b16 %v3798, %v3797
    %v3808 = vsel %vm239, %v3776, 0
    %v3811 = vsel %vm239, %v3778, 0
    %v3814 = vsel %vm239, %v3780, 0
    %v3817 = vsel %vm239, %v3782, 0
    %3819 = vmatprep.subr.bf16.mxu0 0
    %3820 = vmatpush1.bf16.msra.mxu0 %v3799
    %3821 = vmatprep.subr.bf16.mxu0 0
    %3822 = vmatpush1.bf16.msra.mxu0 %v3800
    %3823 = vmatprep.subr.bf16.mxu0 0
    %3824 = vmatpush1.bf16.msra.mxu0 %v3801
    %3825 = vmatprep.subr.bf16.mxu0 0
    %3826 = vmatpush1.bf16.msra.mxu0 %v3802
    %3827 = vmatprep.subr.bf16.mxu0 0
    %3828 = vmatpush1.bf16.msra.mxu0 0
    %3829 = vmatprep.subr.bf16.mxu0 0
    %3830 = vmatpush1.bf16.msra.mxu0 0
    %3831 = vmatprep.subr.bf16.mxu0 0
    %3832 = vmatpush1.bf16.msra.mxu0 0
    %3833 = vmatprep.subr.bf16.mxu0 0
    %3834 = vmatpush1.bf16.msra.mxu0 0
    %3835 = vmatprep.subr.bf16.mxu0 0
    %3836 = vmatpush1.bf16.msra.mxu0 0
    %3837 = vmatprep.subr.bf16.mxu0 0
    %3838 = vmatpush1.bf16.msra.mxu0 0
    %3839 = vmatprep.subr.bf16.mxu0 0
    %3840 = vmatpush1.bf16.msra.mxu0 0
    %3841 = vmatprep.subr.bf16.mxu0 0
    %3842 = vmatpush1.bf16.msra.mxu0 0
    %3843 = vmatprep.subr.bf16.mxu0 0
    %3844 = vmatpush1.bf16.msra.mxu0 0
    %3845 = vmatprep.subr.bf16.mxu0 0
    %3846 = vmatpush1.bf16.msra.mxu0 0
    %3847 = vmatprep.subr.bf16.mxu0 0
    %3848 = vmatpush1.bf16.msra.mxu0 0
    %3849 = vmatprep.subr.bf16.mxu0 0
    %3850 = vmatpush1.bf16.msra.mxu0 0
    %3851 = vmatprep.mubr.bf16.mxu0 0
    %3852 = vmatmul.mubr.bf16.gmra.mrb[0].mxu0 %v3808
    %v3853 = vpop.f32.mrb[0].mxu0
    %v3854 = vadd.f32 %v3757, %v3853
    %v3855 = vpop.f32.mrb[0].mxu0
    %v3856 = vpop.f32.mrb[0].mxu0
    %v3857 = vadd.f32 %v3757, %v3856
    %v3858 = vpop.f32.mrb[0].mxu0
    %3859 = vmatprep.mubr.bf16.mxu0 0
    %3860 = vmatmul.mubr.bf16.gmra.mrb[0].mxu0 %v3811
    %v3861 = vpop.f32.mrb[0].mxu0
    %v3862 = vadd.f32 %v3757, %v3861
    %v3863 = vpop.f32.mrb[0].mxu0
    %v3864 = vpop.f32.mrb[0].mxu0
    %v3865 = vadd.f32 %v3757, %v3864
    %v3866 = vpop.f32.mrb[0].mxu0
    %3867 = vmatprep.mubr.bf16.mxu0 0
    %3868 = vmatmul.mubr.bf16.gmra.mrb[0].mxu0 %v3814
    %v3869 = vpop.f32.mrb[0].mxu0
    %v3870 = vadd.f32 %v3757, %v3869
    %v3871 = vpop.f32.mrb[0].mxu0
    %v3872 = vpop.f32.mrb[0].mxu0
    %v3873 = vadd.f32 %v3757, %v3872
    %v3874 = vpop.f32.mrb[0].mxu0
    %3875 = vmatprep.mubr.bf16.mxu0 0
    %3876 = vmatmul.mubr.bf16.gmra.mrb[0].mxu0 %v3817
    %v3877 = vpop.f32.mrb[0].mxu0
    %v3878 = vadd.f32 %v3757, %v3877
    %v3879 = vpop.f32.mrb[0].mxu0
    %v3880 = vpop.f32.mrb[0].mxu0
    %v3881 = vpop.f32.mrb[0].mxu0
    %3882 = vdwg.mxu0
    %3883 = vst [vmem:[#allocation6] sm:$0xff] %v3854
    %3884 = vst [vmem:[#allocation6 + $0x8] sm:$0xff] %v3857
    %3885 = vst [vmem:[#allocation6 + $0x10] sm:$0xff] %v3862
    %3886 = vst [vmem:[#allocation6 + $0x18] sm:$0xff] %v3865
    %3887 = vst [vmem:[#allocation6 + $0x20] sm:$0xff] %v3870
    %3888 = vst [vmem:[#allocation6 + $0x28] sm:$0xff] %v3873
    %3889 = vst [vmem:[#allocation6 + $0x30] sm:$0xff] %v3878
    %v3890 = vld [vmem:[%s1] sm:$0xff]
    %v3891 = vld [vmem:[%s1 + $0x8] sm:$0xff]
    %v3892 = vld [vmem:[%s1 + $0x10] sm:$0xff]
    %v3893 = vld [vmem:[%s1 + $0x18] sm:$0xff]
    %v3894 = vld [vmem:[%s1 + $0x20] sm:$0xff]
    %v3895 = vld [vmem:[%s1 + $0x28] sm:$0xff]
    %v3896 = vld [vmem:[%s1 + $0x30] sm:$0xff]
    %v3897 = vsub.f32 %v3890, %v3854
    %v3898 = vsub.f32 %v3891, %v3857
    %v3899 = vsub.f32 %v3892, %v3862
    %v3900 = vsub.f32 %v3893, %v3865
    %v3901 = vsub.f32 %v3894, %v3870
    %v3902 = vsub.f32 %v3895, %v3873
    %v3903 = vsub.f32 %v3896, %v3878
    %v3904 = vmul.f32 %v3897, %v3897
    %v3905 = vmul.f32 %v3898, %v3898
    %v3906 = vmul.f32 %v3899, %v3899
    %v3907 = vmul.f32 %v3900, %v3900
    %v3908 = vmul.f32 %v3901, %v3901
    %v3909 = vmul.f32 %v3902, %v3902
    %v3910 = vmul.f32 %v3903, %v3903
    %v3911 = vld [vmem:[%s3] sm:$0xff]
    %v3912 = vld [vmem:[%s3 + $0x8] sm:$0xff]
    %v3913 = vld [vmem:[%s3 + $0x10] sm:$0xff]
    %v3914 = vld [vmem:[%s3 + $0x18] sm:$0xff]
    %v3915 = vld [vmem:[%s3 + $0x20] sm:$0xff]
    %v3916 = vld [vmem:[%s3 + $0x28] sm:$0xff]
    %v3917 = vld [vmem:[%s3 + $0x30] sm:$0xff]
    %3919 = vset.pattern.permute.xlu0 0
    %3920 = vperm.xlu0 %3919, %v3911
    %v3921 = vpop.permute.xlu0 %3920
    %3924 = vset.pattern.permute.xlu0 0
    %3925 = vperm.xlu0 %3924, %v3912
    %v3926 = vpop.permute.xlu0 %3925
    %3929 = vset.pattern.permute.xlu0 0
    %3930 = vperm.xlu0 %3929, %v3913
    %v3931 = vpop.permute.xlu0 %3930
    %3934 = vset.pattern.permute.xlu0 0
    %3935 = vperm.xlu0 %3934, %v3914
    %v3936 = vpop.permute.xlu0 %3935
    %3939 = vset.pattern.permute.xlu0 0
    %3940 = vperm.xlu0 %3939, %v3915
    %v3941 = vpop.permute.xlu0 %3940
    %3944 = vset.pattern.permute.xlu0 0
    %3945 = vperm.xlu0 %3944, %v3916
    %v3946 = vpop.permute.xlu0 %3945
    %3949 = vset.pattern.permute.xlu0 0
    %3950 = vperm.xlu0 %3949, %v3917
    %v3951 = vpop.permute.xlu0 %3950
    %v3953 = vmul.f32 %v3904, %v3921
    %v3954 = vmul.f32 %v3905, %v3926
    %v3955 = vmul.f32 %v3906, %v3931
    %v3956 = vmul.f32 %v3907, %v3936
    %v3957 = vmul.f32 %v3908, %v3941
    %v3958 = vmul.f32 %v3909, %v3946
    %v3959 = vmul.f32 %v3910, %v3951
    %v3960 = vadd.f32 %v3953, %v3954
    %v3961 = vadd.f32 %v3960, %v3955
    %v3962 = vadd.f32 %v3961, %v3956
    %v3963 = vadd.f32 %v3962, %v3957
    %v3964 = vadd.f32 %v3963, %v3958
    %v3965 = vadd.f32 %v3964, %v3959
    %3966 = vadd.xlane.f32.xlu0 %v3965
    %v3967 = vpop.xlane.xlu0 %3966
    %v3968 = vrot.slane %v3967, 4
    %v3969 = vadd.f32 %v3967, %v3968
    %v3970 = vrot.slane %v3969, 2
    %v3971 = vadd.f32 %v3969, %v3970
    %v3972 = vrot.slane %v3971, 1
    %v3973 = vadd.f32 %v3971, %v3972
    %s3974 = vtos %v3973
    %v3975 = vstv %s3974
    %3976 = vst.msk [vmem:[#allocation4] sm:$0x1] %vm3750, %v3975
    // Predicated region
    $region94: #{tpu_custom_call.1} parent=1 // pred_check
      _
    $region95: #{tpu_custom_call.1} parent=1 // pred_check_branch
      %3978 = sbr.rel (0) target = $region97
    $region96: #{tpu_custom_call.1} parent=1 // pred_region
      %s3980 = ssub.s32 16, 16
      %3981 = vsyncadd [#allocation3], %s3980
      %s3983 = sshll.u32 [#allocation2], 4
      %s3984 = int_to_ptr.vmem [resolvable:$true] %s3983
      %3986 = dma.vmem_to_hbm [thread:$0]  %s3984, 16, %s23, [#allocation3]
    $region97: #{tpu_custom_call.1} parent=1 // pred_fallthru
      _
    // Predicated region
    $region98: #{tpu_custom_call.1} parent=1 // pred_check
      _
    $region99: #{tpu_custom_call.1} parent=1 // pred_check_branch
      %3988 = sbr.rel (0) target = $region101
    $region100: #{tpu_custom_call.1} parent=1 // pred_region
      %s3990 = ssub.s32 16, 16
      %3991 = vsyncadd [#allocation5], %s3990
      %s3993 = sshll.u32 [#allocation4], 4
      %s3994 = int_to_ptr.vmem [resolvable:$true] %s3993
      %3996 = dma.vmem_to_hbm [thread:$0]  %s3994, 16, %s24, [#allocation5]
    $region101: #{tpu_custom_call.1} parent=1 // pred_fallthru
      _
    // Predicated region
    $region102: #{tpu_custom_call.1} parent=1 // pred_check
      _
    $region103: #{tpu_custom_call.1} parent=1 // pred_check_branch
      %3998 = sbr.rel (0) target = $region105
    $region104: #{tpu_custom_call.1} parent=1 // pred_region
      %s4000 = ssub.s32 896, 896
      %4001 = vsyncadd [#allocation5], %s4000
      %s4002 = sshll.u32 [#allocation6], 4
      %s4003 = int_to_ptr.vmem [resolvable:$true] %s4002
      %4008 = dma.vmem_to_hbm [thread:$0]  %s4003, 896, %s25, [#allocation5], 128, 128, 8
    $region105: #{tpu_custom_call.1} parent=1 // pred_fallthru
      _
    // Predicated region
    $region106: #{tpu_custom_call.1} parent=1 // pred_check
      _
    $region107: #{tpu_custom_call.1} parent=1 // pred_check_branch
      %4010 = sbr.rel (0) target = $region109
    $region108: #{tpu_custom_call.1} parent=1 // pred_region
      %4011 = dma.done [#allocation3], 16
    $region109: #{tpu_custom_call.1} parent=1 // pred_fallthru
      _
    // Predicated region
    $region110: #{tpu_custom_call.1} parent=1 // pred_check
      _
    $region111: #{tpu_custom_call.1} parent=1 // pred_check_branch
      %4013 = sbr.rel (0) target = $region113
    $region112: #{tpu_custom_call.1} parent=1 // pred_region
      %4014 = dma.done [#allocation5], 16
    $region113: #{tpu_custom_call.1} parent=1 // pred_fallthru
      _
    // Predicated region
    $region114: #{tpu_custom_call.1} parent=1 // pred_check
      _
    $region115: #{tpu_custom_call.1} parent=1 // pred_check_branch
      %4016 = sbr.rel (0) target = $region117
    $region116: #{tpu_custom_call.1} parent=1 // pred_region
      %4017 = dma.done [#allocation5], 896
    $region117: #{tpu_custom_call.1} parent=1 // pred_fallthru
      _
    %4018 = vsyncpa [#allocation3], 1
    %4019 = vsyncpa [#allocation5], 1

</llo_original>
